<compile_context>
chip_gen: v7x
topology: tpu7x:2x2x1
jax: 0.10.0
libtpu: 0.0.40
codegen_flags: <defaults>
</compile_context>

<pallas_src>
import functools
import math

import jax
import jax.numpy as jnp
from jax.experimental import pallas as pl
from jax.experimental.pallas import tpu as pltpu

_VMEM_LIMIT = 48 * 1024 * 1024     # safe on v5e/v6e (128 MiB) and v7x (64 MiB) alike


# ----------------------------------------------------------------------------- helpers
def _gelu(x):
    # exact (erf-based) GELU, matching torch.nn.GELU() default
    return 0.5 * x * (1.0 + jax.lax.erf(x * 0.7071067811865476))


def _roll_lanes(x, shift, size):
    """Circular shift along the last (lane) axis of a 2-D value.

    Production sizes (lane extent % 128 == 0) ride the XLU via pltpu.roll; tiny or
    unaligned extents fall back to jnp.roll (concat of lane slices) so the small test
    shapes still lower cleanly.
    """
    if shift == 0:
        return x
    if size % 128 == 0:
        return pltpu.roll(x, shift, 1)
    return jnp.roll(x, shift, axis=1)


# ----------------------------------------------------------------------------- kernel 1
# fused MLP (linear + GELU) + rotary position embedding, emitted directly in bf16.
#   g  = gelu(x @ W        + b)          (= qw in the reference)
#   gp = gelu(x @ W[:, s]  + b[:, s])    (= qw[sigma], sigma = [1,3,..,D-1, 0,2,..,D-2])
#   out = g * cos_pos + gp * sin_signed  (sign of qw2 folded into sin_signed)
def mlp_rope_kernel(x_ref, w_ref, wp_ref, b_ref, bp_ref, cos_ref, sin_ref, o_ref):
    x = x_ref[0]                                                       # (TL, H) bf16
    g = _gelu(jnp.dot(x, w_ref[...], preferred_element_type=jnp.float32) + b_ref[...])
    gp = _gelu(jnp.dot(x, wp_ref[...], preferred_element_type=jnp.float32) + bp_ref[...])
    o_ref[0] = (g * cos_ref[...] + gp * sin_ref[...]).astype(jnp.bfloat16)


def mlp_rope(x, w, wp, b, bp, cos_t, sin_t):
    B, L, H = x.shape
    D = w.shape[1]
    TL = min(L, 512)                       # 512-row tiles; boundary tile clipped by Pallas
    return pl.pallas_call(
        mlp_rope_kernel,
        out_shape=jax.ShapeDtypeStruct((B, L, D), jnp.bfloat16),
        grid=(B, pl.cdiv(L, TL)),
        in_specs=[
            pl.BlockSpec((1, TL, H), lambda b, l: (b, l, 0)),
            pl.BlockSpec((H, D), lambda b, l: (0, 0)),       # weights stay resident
            pl.BlockSpec((H, D), lambda b, l: (0, 0)),
            pl.BlockSpec((1, D), lambda b, l: (0, 0)),
            pl.BlockSpec((1, D), lambda b, l: (0, 0)),
            pl.BlockSpec((TL, D), lambda b, l: (l, 0)),      # (L, D) tables, no B-tiling
            pl.BlockSpec((TL, D), lambda b, l: (l, 0)),
        ],
        out_specs=pl.BlockSpec((1, TL, D), lambda b, l: (b, l, 0)),
        compiler_params=pltpu.CompilerParams(
            dimension_semantics=("parallel", "parallel")),
    )(x, w, wp, b, bp, cos_t, sin_t)


# ----------------------------------------------------------------------------- kernel 2
# Biaffine:  s[b, o, x, y] = sum_{p,q} xa[b, x, p] * W[o, p, q] * ya[b, y, q]
# grid = (B,); the full (O, I, I) weight stays resident.  The ones (bias) column is
# built in VMEM, y is augmented + transposed once per batch (plain NN matmuls after
# that), and each (L, L) class plane is stored directly (channels-first output).
def biaffine_kernel(x_ref, y_ref, w_ref, o_ref, *, n_out, L):
    x32 = x_ref[0].astype(jnp.float32)                                 # (L, D)
    y32 = y_ref[0].astype(jnp.float32)
    xa = jnp.concatenate([x32, jnp.ones((L, 1), jnp.float32)],
                         axis=-1).astype(jnp.bfloat16)                 # (L, I)
    yaT = jnp.concatenate([y32.T, jnp.ones((1, L), jnp.float32)],
                          axis=0).astype(jnp.bfloat16)                 # (I, L), one transpose
    for o in range(n_out):
        t = jnp.dot(xa, w_ref[o], preferred_element_type=jnp.float32)  # (L, I) f32
        s = jnp.dot(t.astype(jnp.bfloat16), yaT,
                    preferred_element_type=jnp.float32)                # (L, L) f32
        o_ref[0, o] = s                                                # per-plane store


def biaffine(x, y, W, *, L):
    B, _, D = x.shape
    O, I, _ = W.shape
    out = pl.pallas_call(
        functools.partial(biaffine_kernel, n_out=O, L=L),
        out_shape=jax.ShapeDtypeStruct((B, O, L, L), jnp.float32),
        grid=(B,),
        in_specs=[
            pl.BlockSpec((1, L, D), lambda b: (b, 0, 0)),
            pl.BlockSpec((1, L, D), lambda b: (b, 0, 0)),
            pl.BlockSpec((O, I, I), lambda b: (0, 0, 0)),    # resident across the grid
        ],
        out_specs=pl.BlockSpec((1, O, L, L), lambda b: (b, 0, 0, 0)),
        compiler_params=pltpu.CompilerParams(
            dimension_semantics=("parallel",),
            vmem_limit_bytes=_VMEM_LIMIT),
    )(x, y, W)
    # channels-first, spatially-flattened residual stream: free bitcast in XLA (row-major)
    return out.reshape(B, O, L * L)


# ----------------------------------------------------------------------------- kernel 3
# One fused residual block per batch element (all channels-first / lane-dense):
#   masked cat([dis, reg, o1]) -> 1x1 conv -> GELU -> 3x3 conv (pad=1) -> GELU
#   -> mlp_rel (linear + GELU) -> residual add
def res_block_kernel(o1_ref, dr_ref, m_ref, border_ref,
                     w1dr_ref, w1o_ref, b1_ref, w3_ref, b3_ref, wm_ref, bm_ref,
                     out_ref, *, L):
    LL = L * L
    o1 = o1_ref[0]                                                     # (O, LL) f32

    # masked(cat([dis, reg, o1])) @ W1  ==  mask * (W1dr @ dr + W1o @ o1); bias after mask.
    z = (jnp.dot(w1dr_ref[...], dr_ref[0], preferred_element_type=jnp.float32)
         + jnp.dot(w1o_ref[...], o1.astype(jnp.bfloat16),
                   preferred_element_type=jnp.float32))                # (Ch, LL)
    z = z * m_ref[0]                                                   # grid mask, (1, LL)
    h = _gelu(z + b1_ref[...])                                         # 1x1 conv + GELU

    # 3x3 conv (padding=1): 9 rolled & border-masked channel matmuls, register accum.
    bord = border_ref[...]                                             # (4, LL) 0/1 f32
    row_keep = {-1: bord[0:1], 0: None, 1: bord[1:2]}                  # not-top / not-bottom
    col_keep = {-1: bord[2:3], 0: None, 1: bord[3:4]}                  # not-left / not-right
    acc = None
    for da in (-1, 0, 1):
        for db in (-1, 0, 1):
            s = _roll_lanes(h, (-(da * L + db)) % LL, LL)              # h[:, p + da*L + db]
            keep = row_keep[da]
            if col_keep[db] is not None:
                keep = col_keep[db] if keep is None else keep * col_keep[db]
            if keep is not None:
                s = s * keep                                           # zero-padding taps
            tap = jnp.dot(w3_ref[da + 1, db + 1], s.astype(jnp.bfloat16),
                          preferred_element_type=jnp.float32)          # (Ch, LL)
            acc = tap if acc is None else acc + tap
    conv = _gelu(acc + b3_ref[...])                                    # (Ch, LL)

    # mlp_rel + residual add (channels-first)
    r = _gelu(jnp.dot(wm_ref[...], conv.astype(jnp.bfloat16),
                      preferred_element_type=jnp.float32) + bm_ref[...])   # (O, LL)
    out_ref[0] = o1 + r


def residual_block(o1, dr_cf, mask_f, border, blk, *, L):
    B, O, LL = o1.shape
    Ch, Ddr = blk["w1dr"].shape
    # TODO(synk): tile LL into row blocks with a 1-row halo (lane-aligned when
    # L % 128 == 0) so production-size activations never exceed v7x's 64 MiB VMEM.
    return pl.pallas_call(
        functools.partial(res_block_kernel, L=L),
        out_shape=jax.ShapeDtypeStruct((B, O, LL), jnp.float32),
        grid=(B,),
        in_specs=[
            pl.BlockSpec((1, O, LL), lambda b: (b, 0, 0)),       # o1 (residual stream)
            pl.BlockSpec((1, Ddr, LL), lambda b: (b, 0, 0)),     # dis||reg, channels-first
            pl.BlockSpec((1, 1, LL), lambda b: (b, 0, 0)),       # grid mask (0/1 f32)
            pl.BlockSpec((4, LL), lambda b: (0, 0)),             # 3x3-conv border masks
            pl.BlockSpec((Ch, Ddr), lambda b: (0, 0)),           # resident weights
            pl.BlockSpec((Ch, O), lambda b: (0, 0)),
            pl.BlockSpec((Ch, 1), lambda b: (0, 0)),
            pl.BlockSpec((3, 3, Ch, Ch), lambda b: (0, 0, 0, 0)),
            pl.BlockSpec((Ch, 1), lambda b: (0, 0)),
            pl.BlockSpec((O, Ch), lambda b: (0, 0)),
            pl.BlockSpec((O, 1), lambda b: (0, 0)),
        ],
        out_specs=pl.BlockSpec((1, O, LL), lambda b: (b, 0, 0)),
        input_output_aliases={0: 0},                             # update o1 in place
        compiler_params=pltpu.CompilerParams(
            dimension_semantics=("parallel",),
            vmem_limit_bytes=_VMEM_LIMIT),
    )(o1, dr_cf, mask_f, border, blk["w1dr"], blk["w1o"], blk["b1"],
      blk["w3"], blk["b3"], blk["wm"], blk["bm"])


# ----------------------------------------------------------------------------- forward
def res_biaffine_forward(params, x, y, dis_emb, reg_emb, grid_mask2d):
    B, L, H = x.shape
    D = params["mlp1_w"].shape[1]
    O = params["biaffine_w"].shape[0]
    LL = L * L

    # rotary tables — exactly reproducing the module's Rotary_position_embedding,
    # including its non-interleaved qw2 = cat([-q[...,1::2], q[...,::2]], -1) convention.
    pos = jnp.arange(L, dtype=jnp.float32)[:, None]
    idx = jnp.arange(D // 2, dtype=jnp.float32)
    inv = jnp.power(10000.0, -2.0 * idx / D)
    ang = pos * inv                                                    # (L, D/2)
    cos_pos = jnp.repeat(jnp.cos(ang), 2, axis=-1)                     # repeat_interleave(2)
    sin_pos = jnp.repeat(jnp.sin(ang), 2, axis=-1)
    sign = jnp.concatenate([-jnp.ones(D // 2, jnp.float32),
                            jnp.ones(D // 2, jnp.float32)])
    sin_signed = sin_pos * sign[None, :]                               # sign of qw2 folded in

    # column permutation sigma: gelu(x@W+b)[sigma] == gelu(x@W[:,sigma]+b[:,sigma]),
    # so qw2 = sign * gelu(x @ W[:, sigma] + b[:, sigma])  (no (D, D) matmul needed).
    k = jnp.arange(D // 2)
    sigma = jnp.concatenate([2 * k + 1, 2 * k])

    def prep_mlp(w, bvec):
        wb = w.astype(jnp.bfloat16)
        b2 = bvec.reshape(1, -1).astype(jnp.float32)
        return wb, wb[:, sigma], b2, b2[:, sigma]

    w1, w1p, b1, b1p = prep_mlp(params["mlp1_w"], params["mlp1_b"])
    w2, w2p, b2, b2p = prep_mlp(params["mlp2_w"], params["mlp2_b"])

    ent_sub = mlp_rope(x.astype(jnp.bfloat16), w1, w1p, b1, b1p, cos_pos, sin_signed)
    ent_obj = mlp_rope(y.astype(jnp.bfloat16), w2, w2p, b2, b2p, cos_pos, sin_signed)

    # o1 stays channels-first + spatially flattened (B, O, L*L) through every block.
    o1 = biaffine(ent_sub, ent_obj, params["biaffine_w"].astype(jnp.bfloat16), L=L)

    # inputs shared by every residual block — laid out channels-first / lane-dense once.
    Dd = dis_emb.shape[-1]
    Dr = reg_emb.shape[-1]
    Ddr = Dd + Dr
    dr = jnp.concatenate([dis_emb, reg_emb], axis=-1)                  # (B, L, L, Dd+Dr)
    dr_cf = jnp.transpose(dr, (0, 3, 1, 2)).reshape(B, Ddr, LL).astype(jnp.bfloat16)
    mask_f = (grid_mask2d != 0).astype(jnp.float32).reshape(B, 1, LL)

    ar = jnp.arange(L)
    row_idx = jnp.repeat(ar, L)
    col_idx = jnp.tile(ar, L)
    border = jnp.stack([row_idx != 0, row_idx != L - 1,
                        col_idx != 0, col_idx != L - 1]).astype(jnp.float32)   # (4, LL)

    for blk in params["res_blocks"]:
        w1full = blk["conv1_w"].astype(jnp.bfloat16)     # (Ch, Cin), Cin order = [dis, reg, o1]
        blk_k = {
            "w1dr": w1full[:, :Ddr],
            "w1o": w1full[:, Ddr:],
            "b1": blk["conv1_b"].reshape(-1, 1),
            "w3": jnp.transpose(blk["conv3_w"], (2, 3, 0, 1)).astype(jnp.bfloat16),  # (3,3,Cout,Cin)
            "b3": blk["conv3_b"].reshape(-1, 1),
            "wm": blk["mlp_rel_w"].astype(jnp.bfloat16),                              # (O, Ch)
            "bm": blk["mlp_rel_b"].reshape(-1, 1),
        }
        o1 = residual_block(o1, dr_cf, mask_f, border, blk_k, L=L)

    # single channels-last conversion at the very end (matches the torch output layout)
    return jnp.transpose(o1.reshape(B, O, L, L), (0, 2, 3, 1))         # (B, L, L, O)


# ----------------------------------------------------------------------------- params
def init_params(key, *, hid_size, biaffine_size, cls_num, dist_emb, type_emb,
                conv_hid, num_res_blocks):
    conv_input_size = cls_num + dist_emb + type_emb
    ks = iter(jax.random.split(key, 5 + 6 * num_res_blocks))

    def nrm(shape, scale=0.1):
        return scale * jax.random.normal(next(ks), shape, jnp.float32)

    n_in = biaffine_size + 1
    xav = math.sqrt(2.0 / (n_in * n_in + cls_num * n_in))              # xavier_normal_ std
    params = {
        "mlp1_w": nrm((hid_size, biaffine_size)),        # (in, out): used as x @ W
        "mlp1_b": nrm((biaffine_size,)),
        "mlp2_w": nrm((hid_size, biaffine_size)),
        "mlp2_b": nrm((biaffine_size,)),
        "biaffine_w": xav * jax.random.normal(next(ks), (cls_num, n_in, n_in), jnp.float32),
        "res_blocks": [],
    }
    for _ in range(num_res_blocks):
        params["res_blocks"].append({
            "conv1_w": nrm((conv_hid, conv_input_size)),  # 1x1 conv, torch (out, in) layout
            "conv1_b": nrm((conv_hid,)),
            "conv3_w": nrm((conv_hid, conv_hid, 3, 3)),   # 3x3 conv, torch (out, in, kh, kw)
            "conv3_b": nrm((conv_hid,)),
            "mlp_rel_w": nrm((cls_num, conv_hid)),        # Linear, torch (out, in)
            "mlp_rel_b": nrm((cls_num,)),
        })
    return params


# ----------------------------------------------------------------------------- main
if __name__ == "__main__":
    B, L = 2, 8
    hid_size = 32
    biaffine_size = 32
    cls_num = 4
    dist_emb_size = 8
    type_emb_size = 8
    conv_hid_size = 16          # == `channels` (mlp_rel n_in)
    num_res_blocks = 2

    key = jax.random.PRNGKey(0)
    kp, kx, ky, kd, kr = jax.random.split(key, 5)
    params = init_params(kp, hid_size=hid_size, biaffine_size=biaffine_size,
                         cls_num=cls_num, dist_emb=dist_emb_size,
                         type_emb=type_emb_size, conv_hid=conv_hid_size,
                         num_res_blocks=num_res_blocks)

    x = jax.random.normal(kx, (B, L, hid_size), jnp.float32)
    y = jax.random.normal(ky, (B, L, hid_size), jnp.float32)
    dis_emb = jax.random.normal(kd, (B, L, L, dist_emb_size), jnp.float32)
    reg_emb = jax.random.normal(kr, (B, L, L, type_emb_size), jnp.float32)
    # lengths-style grid mask (batch 0 full length, batch 1 length 6)
    lengths = jnp.array([8, 6])
    ar = jnp.arange(L)
    valid = ar[None, :] < lengths[:, None]                              # (B, L)
    grid_mask2d = (valid[:, :, None] & valid[:, None, :]).astype(jnp.int32)  # (B, L, L)

    fwd = jax.jit(res_biaffine_forward)
    out = jax.block_until_ready(fwd(params, x, y, dis_emb, reg_emb, grid_mask2d))
    assert out.shape == (B, L, L, cls_num), out.shape
    assert bool(jnp.all(jnp.isfinite(out)))
    print("KERNEL_OK")
</pallas_src>

<mosaic_0001>
module attributes {stable_mosaic.version = 11 : i64} {
  func.func @mlp_rope_kernel(%arg0: i32, %arg1: i32, %arg2: memref<1x8x32xbf16, #tpu.memory_space<vmem>>, %arg3: memref<32x32xbf16, #tpu.memory_space<vmem>>, %arg4: memref<32x32xbf16, #tpu.memory_space<vmem>>, %arg5: memref<1x32xf32, #tpu.memory_space<vmem>>, %arg6: memref<1x32xf32, #tpu.memory_space<vmem>>, %arg7: memref<8x32xf32, #tpu.memory_space<vmem>>, %arg8: memref<8x32xf32, #tpu.memory_space<vmem>>, %arg9: memref<1x8x32xbf16, #tpu.memory_space<vmem>>) attributes {dimension_semantics = [#tpu.dimension_semantics<parallel>, #tpu.dimension_semantics<parallel>], iteration_bounds = array<i64: 2, 1>, scalar_prefetch = 0 : i64, scratch_operands = 0 : i64, tpu.core_type = #tpu.core_type<tc>, window_params = [{transform_indices = @transform_0, window_bounds = array<i64: 1, 8, 32>}, {pipeline_mode = #tpu.pipeline_mode<synchronous>, transform_indices = @transform_1, window_bounds = array<i64: 32, 32>}, {pipeline_mode = #tpu.pipeline_mode<synchronous>, transform_indices = @transform_2, window_bounds = array<i64: 32, 32>}, {pipeline_mode = #tpu.pipeline_mode<synchronous>, transform_indices = @transform_3, window_bounds = array<i64: 1, 32>}, {pipeline_mode = #tpu.pipeline_mode<synchronous>, transform_indices = @transform_4, window_bounds = array<i64: 1, 32>}, {transform_indices = @transform_5, window_bounds = array<i64: 8, 32>}, {transform_indices = @transform_6, window_bounds = array<i64: 8, 32>}, {transform_indices = @transform_7, window_bounds = array<i64: 1, 8, 32>}]} {
    %c0 = arith.constant 0 : index
    %c0_0 = arith.constant 0 : index
    %c0_1 = arith.constant 0 : index
    %0 = vector.load %arg2[%c0, %c0_0, %c0_1] : memref<1x8x32xbf16, #tpu.memory_space<vmem>>, vector<1x8x32xbf16>
    %1 = vector.shape_cast %0 : vector<1x8x32xbf16> to vector<8x32xbf16>
    %c0_2 = arith.constant 0 : index
    %c0_3 = arith.constant 0 : index
    %2 = vector.load %arg3[%c0_2, %c0_3] : memref<32x32xbf16, #tpu.memory_space<vmem>>, vector<32x32xbf16>
    %cst = arith.constant dense<0.000000e+00> : vector<8x32xf32>
    %3 = tpu.matmul %1, %2, %cst {dimension_numbers = #tpu.dot_dimension_numbers<[1], [0], [0], [1], [0, 0, 1, 1], [], []>} : vector<8x32xbf16>, vector<32x32xbf16>, vector<8x32xf32> -> vector<8x32xf32>
    %c0_4 = arith.constant 0 : index
    %c0_5 = arith.constant 0 : index
    %4 = vector.load %arg5[%c0_4, %c0_5] : memref<1x32xf32, #tpu.memory_space<vmem>>, vector<1x32xf32>
    %5 = vector.broadcast %4 : vector<1x32xf32> to vector<8x32xf32>
    %6 = arith.addf %3, %5 : vector<8x32xf32>
    %cst_6 = arith.constant 5.000000e-01 : f32
    %7 = vector.broadcast %cst_6 : f32 to vector<8x32xf32>
    %8 = arith.mulf %7, %6 : vector<8x32xf32>
    %cst_7 = arith.constant 0.707106769 : f32
    %9 = vector.broadcast %cst_7 : f32 to vector<8x32xf32>
    %10 = arith.mulf %6, %9 : vector<8x32xf32>
    %11 = math.erf %10 : vector<8x32xf32>
    %cst_8 = arith.constant 1.000000e+00 : f32
    %12 = vector.broadcast %cst_8 : f32 to vector<8x32xf32>
    %13 = arith.addf %12, %11 : vector<8x32xf32>
    %14 = arith.mulf %8, %13 : vector<8x32xf32>
    %c0_9 = arith.constant 0 : index
    %c0_10 = arith.constant 0 : index
    %15 = vector.load %arg4[%c0_9, %c0_10] : memref<32x32xbf16, #tpu.memory_space<vmem>>, vector<32x32xbf16>
    %cst_11 = arith.constant dense<0.000000e+00> : vector<8x32xf32>
    %16 = tpu.matmul %1, %15, %cst_11 {dimension_numbers = #tpu.dot_dimension_numbers<[1], [0], [0], [1], [0, 0, 1, 1], [], []>} : vector<8x32xbf16>, vector<32x32xbf16>, vector<8x32xf32> -> vector<8x32xf32>
    %c0_12 = arith.constant 0 : index
    %c0_13 = arith.constant 0 : index
    %17 = vector.load %arg6[%c0_12, %c0_13] : memref<1x32xf32, #tpu.memory_space<vmem>>, vector<1x32xf32>
    %18 = vector.broadcast %17 : vector<1x32xf32> to vector<8x32xf32>
    %19 = arith.addf %16, %18 : vector<8x32xf32>
    %cst_14 = arith.constant 5.000000e-01 : f32
    %20 = vector.broadcast %cst_14 : f32 to vector<8x32xf32>
    %21 = arith.mulf %20, %19 : vector<8x32xf32>
    %cst_15 = arith.constant 0.707106769 : f32
    %22 = vector.broadcast %cst_15 : f32 to vector<8x32xf32>
    %23 = arith.mulf %19, %22 : vector<8x32xf32>
    %24 = math.erf %23 : vector<8x32xf32>
    %cst_16 = arith.constant 1.000000e+00 : f32
    %25 = vector.broadcast %cst_16 : f32 to vector<8x32xf32>
    %26 = arith.addf %25, %24 : vector<8x32xf32>
    %27 = arith.mulf %21, %26 : vector<8x32xf32>
    %c0_17 = arith.constant 0 : index
    %c0_18 = arith.constant 0 : index
    %28 = vector.load %arg7[%c0_17, %c0_18] : memref<8x32xf32, #tpu.memory_space<vmem>>, vector<8x32xf32>
    %29 = arith.mulf %14, %28 : vector<8x32xf32>
    %c0_19 = arith.constant 0 : index
    %c0_20 = arith.constant 0 : index
    %30 = vector.load %arg8[%c0_19, %c0_20] : memref<8x32xf32, #tpu.memory_space<vmem>>, vector<8x32xf32>
    %31 = arith.mulf %27, %30 : vector<8x32xf32>
    %32 = arith.addf %29, %31 : vector<8x32xf32>
    %33 = arith.truncf %32 : vector<8x32xf32> to vector<8x32xbf16>
    %c0_21 = arith.constant 0 : index
    %c0_22 = arith.constant 0 : index
    %c0_23 = arith.constant 0 : index
    %34 = vector.load %arg9[%c0_21, %c0_22, %c0_23] : memref<1x8x32xbf16, #tpu.memory_space<vmem>>, vector<1x8x32xbf16>
    %35 = vector.shape_cast %34 : vector<1x8x32xbf16> to vector<8x32xbf16>
    %36 = vector.shape_cast %33 : vector<8x32xbf16> to vector<1x8x32xbf16>
    tpu.vector_store %arg9[%c0_21, %c0_22, %c0_23], %36 {strides = array<i32>} : memref<1x8x32xbf16, #tpu.memory_space<vmem>>, vector<1x8x32xbf16>,
    return
  }
  func.func @transform_0(%arg0: i32, %arg1: i32) -> (i32, i32, i32) {
    %c0_i32 = arith.constant 0 : i32
    %c0_i32_0 = arith.constant 0 : i32
    return %arg0, %arg1, %c0_i32 : i32, i32, i32
  }
  func.func @transform_1(%arg0: i32, %arg1: i32) -> (i32, i32) {
    %c0_i32 = arith.constant 0 : i32
    %c0_i32_0 = arith.constant 0 : i32
    %c0_i32_1 = arith.constant 0 : i32
    return %c0_i32, %c0_i32_0 : i32, i32
  }
  func.func @transform_2(%arg0: i32, %arg1: i32) -> (i32, i32) {
    %c0_i32 = arith.constant 0 : i32
    %c0_i32_0 = arith.constant 0 : i32
    %c0_i32_1 = arith.constant 0 : i32
    return %c0_i32, %c0_i32_0 : i32, i32
  }
  func.func @transform_3(%arg0: i32, %arg1: i32) -> (i32, i32) {
    %c0_i32 = arith.constant 0 : i32
    %c0_i32_0 = arith.constant 0 : i32
    %c0_i32_1 = arith.constant 0 : i32
    return %c0_i32, %c0_i32_0 : i32, i32
  }
  func.func @transform_4(%arg0: i32, %arg1: i32) -> (i32, i32) {
    %c0_i32 = arith.constant 0 : i32
    %c0_i32_0 = arith.constant 0 : i32
    %c0_i32_1 = arith.constant 0 : i32
    return %c0_i32, %c0_i32_0 : i32, i32
  }
  func.func @transform_5(%arg0: i32, %arg1: i32) -> (i32, i32) {
    %c0_i32 = arith.constant 0 : i32
    %c0_i32_0 = arith.constant 0 : i32
    return %arg1, %c0_i32 : i32, i32
  }
  func.func @transform_6(%arg0: i32, %arg1: i32) -> (i32, i32) {
    %c0_i32 = arith.constant 0 : i32
    %c0_i32_0 = arith.constant 0 : i32
    return %arg1, %c0_i32 : i32, i32
  }
  func.func @transform_7(%arg0: i32, %arg1: i32) -> (i32, i32, i32) {
    %c0_i32 = arith.constant 0 : i32
    %c0_i32_0 = arith.constant 0 : i32
    return %arg0, %arg1, %c0_i32 : i32, i32, i32
  }
}

module attributes {stable_mosaic.version = 11 : i64} {
  func.func @biaffine_kernel(%arg0: i32, %arg1: memref<1x8x32xbf16, #tpu.memory_space<vmem>>, %arg2: memref<1x8x32xbf16, #tpu.memory_space<vmem>>, %arg3: memref<4x33x33xbf16, #tpu.memory_space<vmem>>, %arg4: memref<1x4x8x8xf32, #tpu.memory_space<vmem>>) attributes {dimension_semantics = [#tpu.dimension_semantics<parallel>], iteration_bounds = array<i64: 2>, scalar_prefetch = 0 : i64, scratch_operands = 0 : i64, tpu.core_type = #tpu.core_type<tc>, window_params = [{transform_indices = @transform_0, window_bounds = array<i64: 1, 8, 32>}, {transform_indices = @transform_1, window_bounds = array<i64: 1, 8, 32>}, {pipeline_mode = #tpu.pipeline_mode<synchronous>, transform_indices = @transform_2, window_bounds = array<i64: 4, 33, 33>}, {transform_indices = @transform_3, window_bounds = array<i64: 1, 4, 8, 8>}]} {
    %c0 = arith.constant 0 : index
    %c0_0 = arith.constant 0 : index
    %c0_1 = arith.constant 0 : index
    %0 = vector.load %arg1[%c0, %c0_0, %c0_1] : memref<1x8x32xbf16, #tpu.memory_space<vmem>>, vector<1x8x32xbf16>
    %1 = vector.shape_cast %0 : vector<1x8x32xbf16> to vector<8x32xbf16>
    %2 = arith.extf %1 : vector<8x32xbf16> to vector<8x32xf32>
    %c0_2 = arith.constant 0 : index
    %c0_3 = arith.constant 0 : index
    %c0_4 = arith.constant 0 : index
    %3 = vector.load %arg2[%c0_2, %c0_3, %c0_4] : memref<1x8x32xbf16, #tpu.memory_space<vmem>>, vector<1x8x32xbf16>
    %4 = vector.shape_cast %3 : vector<1x8x32xbf16> to vector<8x32xbf16>
    %5 = arith.extf %4 : vector<8x32xbf16> to vector<8x32xf32>
    %cst = arith.constant 1.000000e+00 : f32
    %6 = vector.broadcast %cst : f32 to vector<8x1xf32>
    %7 = tpu.concatenate %2, %6 in 1 : vector<8x32xf32>, vector<8x1xf32> -> vector<8x33xf32>
    %8 = arith.truncf %7 : vector<8x33xf32> to vector<8x33xbf16>
    %9 = tpu.transpose %5, [1, 0] : vector<8x32xf32> -> vector<32x8xf32>
    %cst_5 = arith.constant 1.000000e+00 : f32
    %10 = vector.broadcast %cst_5 : f32 to vector<1x8xf32>
    %11 = tpu.concatenate %9, %10 in 0 : vector<32x8xf32>, vector<1x8xf32> -> vector<33x8xf32>
    %12 = arith.truncf %11 : vector<33x8xf32> to vector<33x8xbf16>
    %c0_6 = arith.constant 0 : index
    %c0_7 = arith.constant 0 : index
    %c0_8 = arith.constant 0 : index
    %13 = vector.load %arg3[%c0_6, %c0_7, %c0_8] : memref<4x33x33xbf16, #tpu.memory_space<vmem>>, vector<1x33x33xbf16>
    %14 = vector.shape_cast %13 : vector<1x33x33xbf16> to vector<33x33xbf16>
    %cst_9 = arith.constant dense<0.000000e+00> : vector<8x33xf32>
    %15 = tpu.matmul %8, %14, %cst_9 {dimension_numbers = #tpu.dot_dimension_numbers<[1], [0], [0], [1], [0, 0, 1, 1], [], []>} : vector<8x33xbf16>, vector<33x33xbf16>, vector<8x33xf32> -> vector<8x33xf32>
    %16 = arith.truncf %15 : vector<8x33xf32> to vector<8x33xbf16>
    %cst_10 = arith.constant dense<0.000000e+00> : vector<8x8xf32>
    %17 = tpu.matmul %16, %12, %cst_10 {dimension_numbers = #tpu.dot_dimension_numbers<[1], [0], [0], [1], [0, 0, 1, 1], [], []>} : vector<8x33xbf16>, vector<33x8xbf16>, vector<8x8xf32> -> vector<8x8xf32>
    %c0_11 = arith.constant 0 : index
    %c0_12 = arith.constant 0 : index
    %c0_13 = arith.constant 0 : index
    %c0_14 = arith.constant 0 : index
    %18 = vector.load %arg4[%c0_11, %c0_12, %c0_13, %c0_14] : memref<1x4x8x8xf32, #tpu.memory_space<vmem>>, vector<1x1x8x8xf32>
    %19 = vector.shape_cast %18 : vector<1x1x8x8xf32> to vector<8x8xf32>
    %20 = vector.shape_cast %17 : vector<8x8xf32> to vector<1x1x8x8xf32>
    tpu.vector_store %arg4[%c0_11, %c0_12, %c0_13, %c0_14], %20 {strides = array<i32>} : memref<1x4x8x8xf32, #tpu.memory_space<vmem>>, vector<1x1x8x8xf32>,
    %c1 = arith.constant 1 : index
    %c0_15 = arith.constant 0 : index
    %c0_16 = arith.constant 0 : index
    %21 = vector.load %arg3[%c1, %c0_15, %c0_16] : memref<4x33x33xbf16, #tpu.memory_space<vmem>>, vector<1x33x33xbf16>
    %22 = vector.shape_cast %21 : vector<1x33x33xbf16> to vector<33x33xbf16>
    %cst_17 = arith.constant dense<0.000000e+00> : vector<8x33xf32>
    %23 = tpu.matmul %8, %22, %cst_17 {dimension_numbers = #tpu.dot_dimension_numbers<[1], [0], [0], [1], [0, 0, 1, 1], [], []>} : vector<8x33xbf16>, vector<33x33xbf16>, vector<8x33xf32> -> vector<8x33xf32>
    %24 = arith.truncf %23 : vector<8x33xf32> to vector<8x33xbf16>
    %cst_18 = arith.constant dense<0.000000e+00> : vector<8x8xf32>
    %25 = tpu.matmul %24, %12, %cst_18 {dimension_numbers = #tpu.dot_dimension_numbers<[1], [0], [0], [1], [0, 0, 1, 1], [], []>} : vector<8x33xbf16>, vector<33x8xbf16>, vector<8x8xf32> -> vector<8x8xf32>
    %c0_19 = arith.constant 0 : index
    %c1_20 = arith.constant 1 : index
    %c0_21 = arith.constant 0 : index
    %c0_22 = arith.constant 0 : index
    %26 = vector.load %arg4[%c0_19, %c1_20, %c0_21, %c0_22] : memref<1x4x8x8xf32, #tpu.memory_space<vmem>>, vector<1x1x8x8xf32>
    %27 = vector.shape_cast %26 : vector<1x1x8x8xf32> to vector<8x8xf32>
    %28 = vector.shape_cast %25 : vector<8x8xf32> to vector<1x1x8x8xf32>
    tpu.vector_store %arg4[%c0_19, %c1_20, %c0_21, %c0_22], %28 {strides = array<i32>} : memref<1x4x8x8xf32, #tpu.memory_space<vmem>>, vector<1x1x8x8xf32>,
    %c2 = arith.constant 2 : index
    %c0_23 = arith.constant 0 : index
    %c0_24 = arith.constant 0 : index
    %29 = vector.load %arg3[%c2, %c0_23, %c0_24] : memref<4x33x33xbf16, #tpu.memory_space<vmem>>, vector<1x33x33xbf16>
    %30 = vector.shape_cast %29 : vector<1x33x33xbf16> to vector<33x33xbf16>
    %cst_25 = arith.constant dense<0.000000e+00> : vector<8x33xf32>
    %31 = tpu.matmul %8, %30, %cst_25 {dimension_numbers = #tpu.dot_dimension_numbers<[1], [0], [0], [1], [0, 0, 1, 1], [], []>} : vector<8x33xbf16>, vector<33x33xbf16>, vector<8x33xf32> -> vector<8x33xf32>
    %32 = arith.truncf %31 : vector<8x33xf32> to vector<8x33xbf16>
    %cst_26 = arith.constant dense<0.000000e+00> : vector<8x8xf32>
    %33 = tpu.matmul %32, %12, %cst_26 {dimension_numbers = #tpu.dot_dimension_numbers<[1], [0], [0], [1], [0, 0, 1, 1], [], []>} : vector<8x33xbf16>, vector<33x8xbf16>, vector<8x8xf32> -> vector<8x8xf32>
    %c0_27 = arith.constant 0 : index
    %c2_28 = arith.constant 2 : index
    %c0_29 = arith.constant 0 : index
    %c0_30 = arith.constant 0 : index
    %34 = vector.load %arg4[%c0_27, %c2_28, %c0_29, %c0_30] : memref<1x4x8x8xf32, #tpu.memory_space<vmem>>, vector<1x1x8x8xf32>
    %35 = vector.shape_cast %34 : vector<1x1x8x8xf32> to vector<8x8xf32>
    %36 = vector.shape_cast %33 : vector<8x8xf32> to vector<1x1x8x8xf32>
    tpu.vector_store %arg4[%c0_27, %c2_28, %c0_29, %c0_30], %36 {strides = array<i32>} : memref<1x4x8x8xf32, #tpu.memory_space<vmem>>, vector<1x1x8x8xf32>,
    %c3 = arith.constant 3 : index
    %c0_31 = arith.constant 0 : index
    %c0_32 = arith.constant 0 : index
    %37 = vector.load %arg3[%c3, %c0_31, %c0_32] : memref<4x33x33xbf16, #tpu.memory_space<vmem>>, vector<1x33x33xbf16>
    %38 = vector.shape_cast %37 : vector<1x33x33xbf16> to vector<33x33xbf16>
    %cst_33 = arith.constant dense<0.000000e+00> : vector<8x33xf32>
    %39 = tpu.matmul %8, %38, %cst_33 {dimension_numbers = #tpu.dot_dimension_numbers<[1], [0], [0], [1], [0, 0, 1, 1], [], []>} : vector<8x33xbf16>, vector<33x33xbf16>, vector<8x33xf32> -> vector<8x33xf32>
    %40 = arith.truncf %39 : vector<8x33xf32> to vector<8x33xbf16>
    %cst_34 = arith.constant dense<0.000000e+00> : vector<8x8xf32>
    %41 = tpu.matmul %40, %12, %cst_34 {dimension_numbers = #tpu.dot_dimension_numbers<[1], [0], [0], [1], [0, 0, 1, 1], [], []>} : vector<8x33xbf16>, vector<33x8xbf16>, vector<8x8xf32> -> vector<8x8xf32>
    %c0_35 = arith.constant 0 : index
    %c3_36 = arith.constant 3 : index
    %c0_37 = arith.constant 0 : index
    %c0_38 = arith.constant 0 : index
    %42 = vector.load %arg4[%c0_35, %c3_36, %c0_37, %c0_38] : memref<1x4x8x8xf32, #tpu.memory_space<vmem>>, vector<1x1x8x8xf32>
    %43 = vector.shape_cast %42 : vector<1x1x8x8xf32> to vector<8x8xf32>
    %44 = vector.shape_cast %41 : vector<8x8xf32> to vector<1x1x8x8xf32>
    tpu.vector_store %arg4[%c0_35, %c3_36, %c0_37, %c0_38], %44 {strides = array<i32>} : memref<1x4x8x8xf32, #tpu.memory_space<vmem>>, vector<1x1x8x8xf32>,
    return
  }
  func.func @transform_0(%arg0: i32) -> (i32, i32, i32) {
    %c0_i32 = arith.constant 0 : i32
    %c0_i32_0 = arith.constant 0 : i32
    %c0_i32_1 = arith.constant 0 : i32
    return %arg0, %c0_i32, %c0_i32_0 : i32, i32, i32
  }
  func.func @transform_1(%arg0: i32) -> (i32, i32, i32) {
    %c0_i32 = arith.constant 0 : i32
    %c0_i32_0 = arith.constant 0 : i32
    %c0_i32_1 = arith.constant 0 : i32
    return %arg0, %c0_i32, %c0_i32_0 : i32, i32, i32
  }
  func.func @transform_2(%arg0: i32) -> (i32, i32, i32) {
    %c0_i32 = arith.constant 0 : i32
    %c0_i32_0 = arith.constant 0 : i32
    %c0_i32_1 = arith.constant 0 : i32
    %c0_i32_2 = arith.constant 0 : i32
    return %c0_i32, %c0_i32_0, %c0_i32_1 : i32, i32, i32
  }
  func.func @transform_3(%arg0: i32) -> (i32, i32, i32, i32) {
    %c0_i32 = arith.constant 0 : i32
    %c0_i32_0 = arith.constant 0 : i32
    %c0_i32_1 = arith.constant 0 : i32
    %c0_i32_2 = arith.constant 0 : i32
    return %arg0, %c0_i32, %c0_i32_0, %c0_i32_1 : i32, i32, i32, i32
  }
}

module attributes {stable_mosaic.version = 11 : i64} {
  func.func @res_block_kernel(%arg0: i32, %arg1: memref<1x4x64xf32, #tpu.memory_space<vmem>>, %arg2: memref<1x16x64xbf16, #tpu.memory_space<vmem>>, %arg3: memref<1x1x64xf32, #tpu.memory_space<vmem>>, %arg4: memref<4x64xf32, #tpu.memory_space<vmem>>, %arg5: memref<16x16xbf16, #tpu.memory_space<vmem>>, %arg6: memref<16x4xbf16, #tpu.memory_space<vmem>>, %arg7: memref<16x1xf32, #tpu.memory_space<vmem>>, %arg8: memref<3x3x16x16xbf16, #tpu.memory_space<vmem>>, %arg9: memref<16x1xf32, #tpu.memory_space<vmem>>, %arg10: memref<4x16xbf16, #tpu.memory_space<vmem>>, %arg11: memref<4x1xf32, #tpu.memory_space<vmem>>, %arg12: memref<1x4x64xf32, #tpu.memory_space<vmem>>) attributes {dimension_semantics = [#tpu.dimension_semantics<parallel>], iteration_bounds = array<i64: 2>, scalar_prefetch = 0 : i64, scratch_operands = 0 : i64, tpu.core_type = #tpu.core_type<tc>, window_params = [{transform_indices = @transform_0, window_bounds = array<i64: 1, 4, 64>}, {transform_indices = @transform_1, window_bounds = array<i64: 1, 16, 64>}, {transform_indices = @transform_2, window_bounds = array<i64: 1, 1, 64>}, {pipeline_mode = #tpu.pipeline_mode<synchronous>, transform_indices = @transform_3, window_bounds = array<i64: 4, 64>}, {pipeline_mode = #tpu.pipeline_mode<synchronous>, transform_indices = @transform_4, window_bounds = array<i64: 16, 16>}, {pipeline_mode = #tpu.pipeline_mode<synchronous>, transform_indices = @transform_5, window_bounds = array<i64: 16, 4>}, {pipeline_mode = #tpu.pipeline_mode<synchronous>, transform_indices = @transform_6, window_bounds = array<i64: 16, 1>}, {pipeline_mode = #tpu.pipeline_mode<synchronous>, transform_indices = @transform_7, window_bounds = array<i64: 3, 3, 16, 16>}, {pipeline_mode = #tpu.pipeline_mode<synchronous>, transform_indices = @transform_8, window_bounds = array<i64: 16, 1>}, {pipeline_mode = #tpu.pipeline_mode<synchronous>, transform_indices = @transform_9, window_bounds = array<i64: 4, 16>}, {pipeline_mode = #tpu.pipeline_mode<synchronous>, transform_indices = @transform_10, window_bounds = array<i64: 4, 1>}, {transform_indices = @transform_11, window_bounds = array<i64: 1, 4, 64>}]} {
    %c0 = arith.constant 0 : index
    %c0_0 = arith.constant 0 : index
    %c0_1 = arith.constant 0 : index
    %0 = vector.load %arg1[%c0, %c0_0, %c0_1] : memref<1x4x64xf32, #tpu.memory_space<vmem>>, vector<1x4x64xf32>
    %1 = vector.shape_cast %0 : vector<1x4x64xf32> to vector<4x64xf32>
    %c0_2 = arith.constant 0 : index
    %c0_3 = arith.constant 0 : index
    %2 = vector.load %arg5[%c0_2, %c0_3] : memref<16x16xbf16, #tpu.memory_space<vmem>>, vector<16x16xbf16>
    %c0_4 = arith.constant 0 : index
    %c0_5 = arith.constant 0 : index
    %c0_6 = arith.constant 0 : index
    %3 = vector.load %arg2[%c0_4, %c0_5, %c0_6] : memref<1x16x64xbf16, #tpu.memory_space<vmem>>, vector<1x16x64xbf16>
    %4 = vector.shape_cast %3 : vector<1x16x64xbf16> to vector<16x64xbf16>
    %cst = arith.constant dense<0.000000e+00> : vector<16x64xf32>
    %5 = tpu.matmul %2, %4, %cst {dimension_numbers = #tpu.dot_dimension_numbers<[1], [0], [0], [1], [0, 0, 1, 1], [], []>} : vector<16x16xbf16>, vector<16x64xbf16>, vector<16x64xf32> -> vector<16x64xf32>
    %c0_7 = arith.constant 0 : index
    %c0_8 = arith.constant 0 : index
    %6 = vector.load %arg6[%c0_7, %c0_8] : memref<16x4xbf16, #tpu.memory_space<vmem>>, vector<16x4xbf16>
    %7 = arith.truncf %1 : vector<4x64xf32> to vector<4x64xbf16>
    %cst_9 = arith.constant dense<0.000000e+00> : vector<16x64xf32>
    %8 = tpu.matmul %6, %7, %cst_9 {dimension_numbers = #tpu.dot_dimension_numbers<[1], [0], [0], [1], [0, 0, 1, 1], [], []>} : vector<16x4xbf16>, vector<4x64xbf16>, vector<16x64xf32> -> vector<16x64xf32>
    %9 = arith.addf %5, %8 : vector<16x64xf32>
    %c0_10 = arith.constant 0 : index
    %c0_11 = arith.constant 0 : index
    %c0_12 = arith.constant 0 : index
    %10 = vector.load %arg3[%c0_10, %c0_11, %c0_12] : memref<1x1x64xf32, #tpu.memory_space<vmem>>, vector<1x1x64xf32>
    %11 = vector.shape_cast %10 : vector<1x1x64xf32> to vector<1x64xf32>
    %12 = vector.broadcast %11 : vector<1x64xf32> to vector<16x64xf32>
    %13 = arith.mulf %9, %12 : vector<16x64xf32>
    %c0_13 = arith.constant 0 : index
    %c0_14 = arith.constant 0 : index
    %14 = vector.load %arg7[%c0_13, %c0_14] : memref<16x1xf32, #tpu.memory_space<vmem>>, vector<16x1xf32>
    %15 = vector.broadcast %14 : vector<16x1xf32> to vector<16x64xf32>
    %16 = arith.addf %13, %15 : vector<16x64xf32>
    %cst_15 = arith.constant 5.000000e-01 : f32
    %17 = vector.broadcast %cst_15 : f32 to vector<16x64xf32>
    %18 = arith.mulf %17, %16 : vector<16x64xf32>
    %cst_16 = arith.constant 0.707106769 : f32
    %19 = vector.broadcast %cst_16 : f32 to vector<16x64xf32>
    %20 = arith.mulf %16, %19 : vector<16x64xf32>
    %21 = math.erf %20 : vector<16x64xf32>
    %cst_17 = arith.constant 1.000000e+00 : f32
    %22 = vector.broadcast %cst_17 : f32 to vector<16x64xf32>
    %23 = arith.addf %22, %21 : vector<16x64xf32>
    %24 = arith.mulf %18, %23 : vector<16x64xf32>
    %c0_18 = arith.constant 0 : index
    %c0_19 = arith.constant 0 : index
    %25 = vector.load %arg4[%c0_18, %c0_19] : memref<4x64xf32, #tpu.memory_space<vmem>>, vector<4x64xf32>
    %26 = vector.extract_strided_slice %25 {offsets = [0, 0], sizes = [1, 64], strides = [1, 1]} : vector<4x64xf32> to vector<1x64xf32>
    %27 = vector.extract_strided_slice %25 {offsets = [1, 0], sizes = [1, 64], strides = [1, 1]} : vector<4x64xf32> to vector<1x64xf32>
    %28 = vector.extract_strided_slice %25 {offsets = [2, 0], sizes = [1, 64], strides = [1, 1]} : vector<4x64xf32> to vector<1x64xf32>
    %29 = vector.extract_strided_slice %25 {offsets = [3, 0], sizes = [1, 64], strides = [1, 1]} : vector<4x64xf32> to vector<1x64xf32>
    %30 = vector.extract_strided_slice %24 {offsets = [0, 55], sizes = [16, 9], strides = [1, 1]} : vector<16x64xf32> to vector<16x9xf32>
    %31 = vector.extract_strided_slice %24 {offsets = [0, 0], sizes = [16, 55], strides = [1, 1]} : vector<16x64xf32> to vector<16x55xf32>
    %32 = tpu.concatenate %30, %31 in 1 : vector<16x9xf32>, vector<16x55xf32> -> vector<16x64xf32>
    %33 = arith.mulf %26, %28 : vector<1x64xf32>
    %34 = vector.broadcast %33 : vector<1x64xf32> to vector<16x64xf32>
    %35 = arith.mulf %32, %34 : vector<16x64xf32>
    %c0_20 = arith.constant 0 : index
    %c0_21 = arith.constant 0 : index
    %c0_22 = arith.constant 0 : index
    %c0_23 = arith.constant 0 : index
    %36 = vector.load %arg8[%c0_20, %c0_21, %c0_22, %c0_23] : memref<3x3x16x16xbf16, #tpu.memory_space<vmem>>, vector<1x1x16x16xbf16>
    %37 = vector.shape_cast %36 : vector<1x1x16x16xbf16> to vector<16x16xbf16>
    %38 = arith.truncf %35 : vector<16x64xf32> to vector<16x64xbf16>
    %cst_24 = arith.constant dense<0.000000e+00> : vector<16x64xf32>
    %39 = tpu.matmul %37, %38, %cst_24 {dimension_numbers = #tpu.dot_dimension_numbers<[1], [0], [0], [1], [0, 0, 1, 1], [], []>} : vector<16x16xbf16>, vector<16x64xbf16>, vector<16x64xf32> -> vector<16x64xf32>
    %40 = vector.extract_strided_slice %24 {offsets = [0, 56], sizes = [16, 8], strides = [1, 1]} : vector<16x64xf32> to vector<16x8xf32>
    %41 = vector.extract_strided_slice %24 {offsets = [0, 0], sizes = [16, 56], strides = [1, 1]} : vector<16x64xf32> to vector<16x56xf32>
    %42 = tpu.concatenate %40, %41 in 1 : vector<16x8xf32>, vector<16x56xf32> -> vector<16x64xf32>
    %43 = vector.broadcast %26 : vector<1x64xf32> to vector<16x64xf32>
    %44 = arith.mulf %42, %43 : vector<16x64xf32>
    %c0_25 = arith.constant 0 : index
    %c1 = arith.constant 1 : index
    %c0_26 = arith.constant 0 : index
    %c0_27 = arith.constant 0 : index
    %45 = vector.load %arg8[%c0_25, %c1, %c0_26, %c0_27] : memref<3x3x16x16xbf16, #tpu.memory_space<vmem>>, vector<1x1x16x16xbf16>
    %46 = vector.shape_cast %45 : vector<1x1x16x16xbf16> to vector<16x16xbf16>
    %47 = arith.truncf %44 : vector<16x64xf32> to vector<16x64xbf16>
    %cst_28 = arith.constant dense<0.000000e+00> : vector<16x64xf32>
    %48 = tpu.matmul %46, %47, %cst_28 {dimension_numbers = #tpu.dot_dimension_numbers<[1], [0], [0], [1], [0, 0, 1, 1], [], []>} : vector<16x16xbf16>, vector<16x64xbf16>, vector<16x64xf32> -> vector<16x64xf32>
    %49 = arith.addf %39, %48 : vector<16x64xf32>
    %50 = vector.extract_strided_slice %24 {offsets = [0, 57], sizes = [16, 7], strides = [1, 1]} : vector<16x64xf32> to vector<16x7xf32>
    %51 = vector.extract_strided_slice %24 {offsets = [0, 0], sizes = [16, 57], strides = [1, 1]} : vector<16x64xf32> to vector<16x57xf32>
    %52 = tpu.concatenate %50, %51 in 1 : vector<16x7xf32>, vector<16x57xf32> -> vector<16x64xf32>
    %53 = arith.mulf %26, %29 : vector<1x64xf32>
    %54 = vector.broadcast %53 : vector<1x64xf32> to vector<16x64xf32>
    %55 = arith.mulf %52, %54 : vector<16x64xf32>
    %c0_29 = arith.constant 0 : index
    %c2 = arith.constant 2 : index
    %c0_30 = arith.constant 0 : index
    %c0_31 = arith.constant 0 : index
    %56 = vector.load %arg8[%c0_29, %c2, %c0_30, %c0_31] : memref<3x3x16x16xbf16, #tpu.memory_space<vmem>>, vector<1x1x16x16xbf16>
    %57 = vector.shape_cast %56 : vector<1x1x16x16xbf16> to vector<16x16xbf16>
    %58 = arith.truncf %55 : vector<16x64xf32> to vector<16x64xbf16>
    %cst_32 = arith.constant dense<0.000000e+00> : vector<16x64xf32>
    %59 = tpu.matmul %57, %58, %cst_32 {dimension_numbers = #tpu.dot_dimension_numbers<[1], [0], [0], [1], [0, 0, 1, 1], [], []>} : vector<16x16xbf16>, vector<16x64xbf16>, vector<16x64xf32> -> vector<16x64xf32>
    %60 = arith.addf %49, %59 : vector<16x64xf32>
    %61 = vector.extract_strided_slice %24 {offsets = [0, 63], sizes = [16, 1], strides = [1, 1]} : vector<16x64xf32> to vector<16x1xf32>
    %62 = vector.extract_strided_slice %24 {offsets = [0, 0], sizes = [16, 63], strides = [1, 1]} : vector<16x64xf32> to vector<16x63xf32>
    %63 = tpu.concatenate %61, %62 in 1 : vector<16x1xf32>, vector<16x63xf32> -> vector<16x64xf32>
    %64 = vector.broadcast %28 : vector<1x64xf32> to vector<16x64xf32>
    %65 = arith.mulf %63, %64 : vector<16x64xf32>
    %c1_33 = arith.constant 1 : index
    %c0_34 = arith.constant 0 : index
    %c0_35 = arith.constant 0 : index
    %c0_36 = arith.constant 0 : index
    %66 = vector.load %arg8[%c1_33, %c0_34, %c0_35, %c0_36] : memref<3x3x16x16xbf16, #tpu.memory_space<vmem>>, vector<1x1x16x16xbf16>
    %67 = vector.shape_cast %66 : vector<1x1x16x16xbf16> to vector<16x16xbf16>
    %68 = arith.truncf %65 : vector<16x64xf32> to vector<16x64xbf16>
    %cst_37 = arith.constant dense<0.000000e+00> : vector<16x64xf32>
    %69 = tpu.matmul %67, %68, %cst_37 {dimension_numbers = #tpu.dot_dimension_numbers<[1], [0], [0], [1], [0, 0, 1, 1], [], []>} : vector<16x16xbf16>, vector<16x64xbf16>, vector<16x64xf32> -> vector<16x64xf32>
    %70 = arith.addf %60, %69 : vector<16x64xf32>
    %c1_38 = arith.constant 1 : index
    %c1_39 = arith.constant 1 : index
    %c0_40 = arith.constant 0 : index
    %c0_41 = arith.constant 0 : index
    %71 = vector.load %arg8[%c1_38, %c1_39, %c0_40, %c0_41] : memref<3x3x16x16xbf16, #tpu.memory_space<vmem>>, vector<1x1x16x16xbf16>
    %72 = vector.shape_cast %71 : vector<1x1x16x16xbf16> to vector<16x16xbf16>
    %73 = arith.truncf %24 : vector<16x64xf32> to vector<16x64xbf16>
    %cst_42 = arith.constant dense<0.000000e+00> : vector<16x64xf32>
    %74 = tpu.matmul %72, %73, %cst_42 {dimension_numbers = #tpu.dot_dimension_numbers<[1], [0], [0], [1], [0, 0, 1, 1], [], []>} : vector<16x16xbf16>, vector<16x64xbf16>, vector<16x64xf32> -> vector<16x64xf32>
    %75 = arith.addf %70, %74 : vector<16x64xf32>
    %76 = vector.extract_strided_slice %24 {offsets = [0, 1], sizes = [16, 63], strides = [1, 1]} : vector<16x64xf32> to vector<16x63xf32>
    %77 = vector.extract_strided_slice %24 {offsets = [0, 0], sizes = [16, 1], strides = [1, 1]} : vector<16x64xf32> to vector<16x1xf32>
    %78 = tpu.concatenate %76, %77 in 1 : vector<16x63xf32>, vector<16x1xf32> -> vector<16x64xf32>
    %79 = vector.broadcast %29 : vector<1x64xf32> to vector<16x64xf32>
    %80 = arith.mulf %78, %79 : vector<16x64xf32>
    %c1_43 = arith.constant 1 : index
    %c2_44 = arith.constant 2 : index
    %c0_45 = arith.constant 0 : index
    %c0_46 = arith.constant 0 : index
    %81 = vector.load %arg8[%c1_43, %c2_44, %c0_45, %c0_46] : memref<3x3x16x16xbf16, #tpu.memory_space<vmem>>, vector<1x1x16x16xbf16>
    %82 = vector.shape_cast %81 : vector<1x1x16x16xbf16> to vector<16x16xbf16>
    %83 = arith.truncf %80 : vector<16x64xf32> to vector<16x64xbf16>
    %cst_47 = arith.constant dense<0.000000e+00> : vector<16x64xf32>
    %84 = tpu.matmul %82, %83, %cst_47 {dimension_numbers = #tpu.dot_dimension_numbers<[1], [0], [0], [1], [0, 0, 1, 1], [], []>} : vector<16x16xbf16>, vector<16x64xbf16>, vector<16x64xf32> -> vector<16x64xf32>
    %85 = arith.addf %75, %84 : vector<16x64xf32>
    %86 = vector.extract_strided_slice %24 {offsets = [0, 7], sizes = [16, 57], strides = [1, 1]} : vector<16x64xf32> to vector<16x57xf32>
    %87 = vector.extract_strided_slice %24 {offsets = [0, 0], sizes = [16, 7], strides = [1, 1]} : vector<16x64xf32> to vector<16x7xf32>
    %88 = tpu.concatenate %86, %87 in 1 : vector<16x57xf32>, vector<16x7xf32> -> vector<16x64xf32>
    %89 = arith.mulf %27, %28 : vector<1x64xf32>
    %90 = vector.broadcast %89 : vector<1x64xf32> to vector<16x64xf32>
    %91 = arith.mulf %88, %90 : vector<16x64xf32>
    %c2_48 = arith.constant 2 : index
    %c0_49 = arith.constant 0 : index
    %c0_50 = arith.constant 0 : index
    %c0_51 = arith.constant 0 : index
    %92 = vector.load %arg8[%c2_48, %c0_49, %c0_50, %c0_51] : memref<3x3x16x16xbf16, #tpu.memory_space<vmem>>, vector<1x1x16x16xbf16>
    %93 = vector.shape_cast %92 : vector<1x1x16x16xbf16> to vector<16x16xbf16>
    %94 = arith.truncf %91 : vector<16x64xf32> to vector<16x64xbf16>
    %cst_52 = arith.constant dense<0.000000e+00> : vector<16x64xf32>
    %95 = tpu.matmul %93, %94, %cst_52 {dimension_numbers = #tpu.dot_dimension_numbers<[1], [0], [0], [1], [0, 0, 1, 1], [], []>} : vector<16x16xbf16>, vector<16x64xbf16>, vector<16x64xf32> -> vector<16x64xf32>
    %96 = arith.addf %85, %95 : vector<16x64xf32>
    %97 = vector.extract_strided_slice %24 {offsets = [0, 8], sizes = [16, 56], strides = [1, 1]} : vector<16x64xf32> to vector<16x56xf32>
    %98 = vector.extract_strided_slice %24 {offsets = [0, 0], sizes = [16, 8], strides = [1, 1]} : vector<16x64xf32> to vector<16x8xf32>
    %99 = tpu.concatenate %97, %98 in 1 : vector<16x56xf32>, vector<16x8xf32> -> vector<16x64xf32>
    %100 = vector.broadcast %27 : vector<1x64xf32> to vector<16x64xf32>
    %101 = arith.mulf %99, %100 : vector<16x64xf32>
    %c2_53 = arith.constant 2 : index
    %c1_54 = arith.constant 1 : index
    %c0_55 = arith.constant 0 : index
    %c0_56 = arith.constant 0 : index
    %102 = vector.load %arg8[%c2_53, %c1_54, %c0_55, %c0_56] : memref<3x3x16x16xbf16, #tpu.memory_space<vmem>>, vector<1x1x16x16xbf16>
    %103 = vector.shape_cast %102 : vector<1x1x16x16xbf16> to vector<16x16xbf16>
    %104 = arith.truncf %101 : vector<16x64xf32> to vector<16x64xbf16>
    %cst_57 = arith.constant dense<0.000000e+00> : vector<16x64xf32>
    %105 = tpu.matmul %103, %104, %cst_57 {dimension_numbers = #tpu.dot_dimension_numbers<[1], [0], [0], [1], [0, 0, 1, 1], [], []>} : vector<16x16xbf16>, vector<16x64xbf16>, vector<16x64xf32> -> vector<16x64xf32>
    %106 = arith.addf %96, %105 : vector<16x64xf32>
    %107 = vector.extract_strided_slice %24 {offsets = [0, 9], sizes = [16, 55], strides = [1, 1]} : vector<16x64xf32> to vector<16x55xf32>
    %108 = vector.extract_strided_slice %24 {offsets = [0, 0], sizes = [16, 9], strides = [1, 1]} : vector<16x64xf32> to vector<16x9xf32>
    %109 = tpu.concatenate %107, %108 in 1 : vector<16x55xf32>, vector<16x9xf32> -> vector<16x64xf32>
    %110 = arith.mulf %27, %29 : vector<1x64xf32>
    %111 = vector.broadcast %110 : vector<1x64xf32> to vector<16x64xf32>
    %112 = arith.mulf %109, %111 : vector<16x64xf32>
    %c2_58 = arith.constant 2 : index
    %c2_59 = arith.constant 2 : index
    %c0_60 = arith.constant 0 : index
    %c0_61 = arith.constant 0 : index
    %113 = vector.load %arg8[%c2_58, %c2_59, %c0_60, %c0_61] : memref<3x3x16x16xbf16, #tpu.memory_space<vmem>>, vector<1x1x16x16xbf16>
    %114 = vector.shape_cast %113 : vector<1x1x16x16xbf16> to vector<16x16xbf16>
    %115 = arith.truncf %112 : vector<16x64xf32> to vector<16x64xbf16>
    %cst_62 = arith.constant dense<0.000000e+00> : vector<16x64xf32>
    %116 = tpu.matmul %114, %115, %cst_62 {dimension_numbers = #tpu.dot_dimension_numbers<[1], [0], [0], [1], [0, 0, 1, 1], [], []>} : vector<16x16xbf16>, vector<16x64xbf16>, vector<16x64xf32> -> vector<16x64xf32>
    %117 = arith.addf %106, %116 : vector<16x64xf32>
    %c0_63 = arith.constant 0 : index
    %c0_64 = arith.constant 0 : index
    %118 = vector.load %arg9[%c0_63, %c0_64] : memref<16x1xf32, #tpu.memory_space<vmem>>, vector<16x1xf32>
    %119 = vector.broadcast %118 : vector<16x1xf32> to vector<16x64xf32>
    %120 = arith.addf %117, %119 : vector<16x64xf32>
    %cst_65 = arith.constant 5.000000e-01 : f32
    %121 = vector.broadcast %cst_65 : f32 to vector<16x64xf32>
    %122 = arith.mulf %121, %120 : vector<16x64xf32>
    %cst_66 = arith.constant 0.707106769 : f32
    %123 = vector.broadcast %cst_66 : f32 to vector<16x64xf32>
    %124 = arith.mulf %120, %123 : vector<16x64xf32>
    %125 = math.erf %124 : vector<16x64xf32>
    %cst_67 = arith.constant 1.000000e+00 : f32
    %126 = vector.broadcast %cst_67 : f32 to vector<16x64xf32>
    %127 = arith.addf %126, %125 : vector<16x64xf32>
    %128 = arith.mulf %122, %127 : vector<16x64xf32>
    %c0_68 = arith.constant 0 : index
    %c0_69 = arith.constant 0 : index
    %129 = vector.load %arg10[%c0_68, %c0_69] : memref<4x16xbf16, #tpu.memory_space<vmem>>, vector<4x16xbf16>
    %130 = arith.truncf %128 : vector<16x64xf32> to vector<16x64xbf16>
    %cst_70 = arith.constant dense<0.000000e+00> : vector<4x64xf32>
    %131 = tpu.matmul %129, %130, %cst_70 {dimension_numbers = #tpu.dot_dimension_numbers<[1], [0], [0], [1], [0, 0, 1, 1], [], []>} : vector<4x16xbf16>, vector<16x64xbf16>, vector<4x64xf32> -> vector<4x64xf32>
    %c0_71 = arith.constant 0 : index
    %c0_72 = arith.constant 0 : index
    %132 = vector.load %arg11[%c0_71, %c0_72] : memref<4x1xf32, #tpu.memory_space<vmem>>, vector<4x1xf32>
    %133 = vector.broadcast %132 : vector<4x1xf32> to vector<4x64xf32>
    %134 = arith.addf %131, %133 : vector<4x64xf32>
    %cst_73 = arith.constant 5.000000e-01 : f32
    %135 = vector.broadcast %cst_73 : f32 to vector<4x64xf32>
    %136 = arith.mulf %135, %134 : vector<4x64xf32>
    %cst_74 = arith.constant 0.707106769 : f32
    %137 = vector.broadcast %cst_74 : f32 to vector<4x64xf32>
    %138 = arith.mulf %134, %137 : vector<4x64xf32>
    %139 = math.erf %138 : vector<4x64xf32>
    %cst_75 = arith.constant 1.000000e+00 : f32
    %140 = vector.broadcast %cst_75 : f32 to vector<4x64xf32>
    %141 = arith.addf %140, %139 : vector<4x64xf32>
    %142 = arith.mulf %136, %141 : vector<4x64xf32>
    %143 = arith.addf %1, %142 : vector<4x64xf32>
    %c0_76 = arith.constant 0 : index
    %c0_77 = arith.constant 0 : index
    %c0_78 = arith.constant 0 : index
    %144 = vector.load %arg12[%c0_76, %c0_77, %c0_78] : memref<1x4x64xf32, #tpu.memory_space<vmem>>, vector<1x4x64xf32>
    %145 = vector.shape_cast %144 : vector<1x4x64xf32> to vector<4x64xf32>
    %146 = vector.shape_cast %143 : vector<4x64xf32> to vector<1x4x64xf32>
    tpu.vector_store %arg12[%c0_76, %c0_77, %c0_78], %146 {strides = array<i32>} : memref<1x4x64xf32, #tpu.memory_space<vmem>>, vector<1x4x64xf32>,
    return
  }
  func.func @transform_0(%arg0: i32) -> (i32, i32, i32) {
    %c0_i32 = arith.constant 0 : i32
    %c0_i32_0 = arith.constant 0 : i32
    %c0_i32_1 = arith.constant 0 : i32
    return %arg0, %c0_i32, %c0_i32_0 : i32, i32, i32
  }
  func.func @transform_1(%arg0: i32) -> (i32, i32, i32) {
    %c0_i32 = arith.constant 0 : i32
    %c0_i32_0 = arith.constant 0 : i32
    %c0_i32_1 = arith.constant 0 : i32
    return %arg0, %c0_i32, %c0_i32_0 : i32, i32, i32
  }
  func.func @transform_2(%arg0: i32) -> (i32, i32, i32) {
    %c0_i32 = arith.constant 0 : i32
    %c0_i32_0 = arith.constant 0 : i32
    %c0_i32_1 = arith.constant 0 : i32
    return %arg0, %c0_i32, %c0_i32_0 : i32, i32, i32
  }
  func.func @transform_3(%arg0: i32) -> (i32, i32) {
    %c0_i32 = arith.constant 0 : i32
    %c0_i32_0 = arith.constant 0 : i32
    %c0_i32_1 = arith.constant 0 : i32
    return %c0_i32, %c0_i32_0 : i32, i32
  }
  func.func @transform_4(%arg0: i32) -> (i32, i32) {
    %c0_i32 = arith.constant 0 : i32
    %c0_i32_0 = arith.constant 0 : i32
    %c0_i32_1 = arith.constant 0 : i32
    return %c0_i32, %c0_i32_0 : i32, i32
  }
  func.func @transform_5(%arg0: i32) -> (i32, i32) {
    %c0_i32 = arith.constant 0 : i32
    %c0_i32_0 = arith.constant 0 : i32
    %c0_i32_1 = arith.constant 0 : i32
    return %c0_i32, %c0_i32_0 : i32, i32
  }
  func.func @transform_6(%arg0: i32) -> (i32, i32) {
    %c0_i32 = arith.constant 0 : i32
    %c0_i32_0 = arith.constant 0 : i32
    %c0_i32_1 = arith.constant 0 : i32
    return %c0_i32, %c0_i32_0 : i32, i32
  }
  func.func @transform_7(%arg0: i32) -> (i32, i32, i32, i32) {
    %c0_i32 = arith.constant 0 : i32
    %c0_i32_0 = arith.constant 0 : i32
    %c0_i32_1 = arith.constant 0 : i32
    %c0_i32_2 = arith.constant 0 : i32
    %c0_i32_3 = arith.constant 0 : i32
    return %c0_i32, %c0_i32_0, %c0_i32_1, %c0_i32_2 : i32, i32, i32, i32
  }
  func.func @transform_8(%arg0: i32) -> (i32, i32) {
    %c0_i32 = arith.constant 0 : i32
    %c0_i32_0 = arith.constant 0 : i32
    %c0_i32_1 = arith.constant 0 : i32
    return %c0_i32, %c0_i32_0 : i32, i32
  }
  func.func @transform_9(%arg0: i32) -> (i32, i32) {
    %c0_i32 = arith.constant 0 : i32
    %c0_i32_0 = arith.constant 0 : i32
    %c0_i32_1 = arith.constant 0 : i32
    return %c0_i32, %c0_i32_0 : i32, i32
  }
  func.func @transform_10(%arg0: i32) -> (i32, i32) {
    %c0_i32 = arith.constant 0 : i32
    %c0_i32_0 = arith.constant 0 : i32
    %c0_i32_1 = arith.constant 0 : i32
    return %c0_i32, %c0_i32_0 : i32, i32
  }
  func.func @transform_11(%arg0: i32) -> (i32, i32, i32) {
    %c0_i32 = arith.constant 0 : i32
    %c0_i32_0 = arith.constant 0 : i32
    %c0_i32_1 = arith.constant 0 : i32
    return %arg0, %c0_i32, %c0_i32_0 : i32, i32, i32
  }
}

</mosaic_0001>

<llo_original>
// kernel: res_biaffine_forward.6
$region0: #{res_biaffine_forward.6}
  #allocation0 [shape = 'u32[]', space=smem, size = 0x4, offset = 0x4, fixed_abs, tag = 'smem constant byte address 0x4 - core index']
  #allocation1 [shape = 'u32[144,128]{1,0:T(1,128)}', space=vmem, size = 0x12000, scoped, tag = 'internal scratch']
  %s0 = inlined_call_operand.vmem [shape: bf16[2,8,32], index: 0, kind: input, shape index: {}]
  %s1 = inlined_call_operand.vmem [shape: bf16[32,32], index: 1, kind: input, shape index: {}]
  %s2 = inlined_call_operand.vmem [shape: bf16[32,32], index: 2, kind: input, shape index: {}]
  %s3 = inlined_call_operand.vmem [shape: f32[1,32], index: 3, kind: input, shape index: {}]
  %s4 = inlined_call_operand.vmem [shape: f32[1,32], index: 4, kind: input, shape index: {}]
  %s5 = inlined_call_operand.vmem [shape: f32[8,32], index: 5, kind: input, shape index: {}]
  %s6 = inlined_call_operand.vmem [shape: f32[8,32], index: 6, kind: input, shape index: {}]
  %s7 = inlined_call_operand.vmem [shape: bf16[2,8,32], index: 7, kind: output, shape index: {}]
  %s8 = sld [smem:[#allocation0]]
  $region61: #{res_biaffine_forward.6} parent=0
    _
  %s10 = ssub.s32 1, %s8
  %s11 = scalar_select 0, %s10, %s8
  loop: start=0, step=1, limit=4
  $region2: #{res_biaffine_forward.6} parent=0 // loop_pre_header
    _
  $region3: #{res_biaffine_forward.6} parent=0 // loop_header
    %s13 = sphi 0, %s17
    %p14 = scmp.ge.s32.totalorder %s13, 4
    %s20 = sphi 0, %s32
    %s21 = sphi 0, %s28
    %s22 = sphi 0, %s20
    %s23 = sphi 0, %s21
    %s24 = sphi 0, %s22
    %s25 = sphi 0, %s23
    %s37 = sphi 0, %s39
    %s40 = sphi 0, %s37
    %s41 = sphi 0, %s40
    %s57 = sphi 0, %s41
    %s61 = sphi 0, %s61
    %s63 = sphi 0, %s61
    %s64 = sphi 0, %s63
    %s78 = sphi 0, %s64
    %s82 = sphi 0, %s82
    %s84 = sphi 0, %s82
    %s85 = sphi 0, %s84
    %s99 = sphi 0, %s85
    %s103 = sphi 0, %s103
    %s105 = sphi 0, %s103
    %s106 = sphi 0, %s105
    %s120 = sphi 0, %s106
    %s124 = sphi 0, %s124
    %s126 = sphi 0, %s124
    %s127 = sphi 0, %s126
    %s141 = sphi 0, %s127
    %s147 = sphi 0, %s149
    %s150 = sphi 0, %s147
    %s151 = sphi 0, %s150
    %s167 = sphi 0, %s151
    %s173 = sphi 0, %s175
    %s176 = sphi 0, %s173
    %s177 = sphi 0, %s176
    %s193 = sphi 0, %s177
    %s201 = sphi 0, %s203
    %s204 = sphi 0, %s201
    %s205 = sphi 0, %s204
    %s221 = sphi 0, %s205
  $region4: #{res_biaffine_forward.6} parent=0 // loop_header_branch
    %16 = sbr.rel (%p14) target = $region8
  $region5: #{res_biaffine_forward.6} parent=0 // loop_body
    %s18 = ssub.s32 %s13, 1
    %s19 = ssub.s32 %s13, 2
    %s26 = sadd.s32 1, %s21
    %p27 = scmp.ge.s32.totalorder %s26, 1
    %s28 = scalar_select %p27, 0, %s26
    %s29 = sadd.s32 1, %s20
    %s30 = scalar_select %p27, %s29, %s20
    %p31 = scmp.ge.s32.totalorder %s30, 2
    %s32 = scalar_select %p31, 0, %s30
    %s33 = ssub.s32 %s20, %s32
    %s34 = ssub.s32 %s21, %s28
    %s35 = sor.u32 %s33, %s34
    %p36 = scmp.eq.s32.totalorder %s35, 0
    %s38 = sadd.s32 %s37, 1
    %s39 = scalar_select %p36, %s37, %s38
    %p42 = pneg %p36
    %p43 = scmp.eq.s32.totalorder %s13, 1
    %p44 = por %p42, %p43
    %p45 = scmp.ne.s32.totalorder %s37, %s40
    %p46 = scmp.eq.s32.totalorder %s13, 0
    %p47 = por %p45, %p46
    %p48 = scmp.ne.s32.totalorder %s37, %s40
    %p49 = scmp.eq.s32.totalorder %s18, 1
    %p50 = por %p48, %p49
    %p51 = scmp.ne.s32.totalorder %s40, %s41
    %p52 = scmp.eq.s32.totalorder %s18, 0
    %p53 = por %p51, %p52
    %p54 = scmp.ne.s32.totalorder %s40, %s41
    %p55 = scmp.eq.s32.totalorder %s19, 1
    %p56 = por %p54, %p55
    %p58 = scmp.ne.s32.totalorder %s41, %s57
    %p59 = scmp.eq.s32.totalorder %s19, 0
    %p60 = por %p58, %p59
    %s62 = sadd.s32 %s61, 1
    %p65 = scmp.eq.s32.totalorder %s13, 1
    %p66 = scmp.ne.s32.totalorder %s61, %s63
    %p67 = scmp.eq.s32.totalorder %s13, 0
    %p68 = por %p66, %p67
    %p69 = scmp.ne.s32.totalorder %s61, %s63
    %p70 = scmp.eq.s32.totalorder %s18, 1
    %p71 = por %p69, %p70
    %p72 = scmp.ne.s32.totalorder %s63, %s64
    %p73 = scmp.eq.s32.totalorder %s18, 0
    %p74 = por %p72, %p73
    %p75 = scmp.ne.s32.totalorder %s63, %s64
    %p76 = scmp.eq.s32.totalorder %s19, 1
    %p77 = por %p75, %p76
    %p79 = scmp.ne.s32.totalorder %s64, %s78
    %p80 = scmp.eq.s32.totalorder %s19, 0
    %p81 = por %p79, %p80
    %s83 = sadd.s32 %s82, 1
    %p86 = scmp.eq.s32.totalorder %s13, 1
    %p87 = scmp.ne.s32.totalorder %s82, %s84
    %p88 = scmp.eq.s32.totalorder %s13, 0
    %p89 = por %p87, %p88
    %p90 = scmp.ne.s32.totalorder %s82, %s84
    %p91 = scmp.eq.s32.totalorder %s18, 1
    %p92 = por %p90, %p91
    %p93 = scmp.ne.s32.totalorder %s84, %s85
    %p94 = scmp.eq.s32.totalorder %s18, 0
    %p95 = por %p93, %p94
    %p96 = scmp.ne.s32.totalorder %s84, %s85
    %p97 = scmp.eq.s32.totalorder %s19, 1
    %p98 = por %p96, %p97
    %p100 = scmp.ne.s32.totalorder %s85, %s99
    %p101 = scmp.eq.s32.totalorder %s19, 0
    %p102 = por %p100, %p101
    %s104 = sadd.s32 %s103, 1
    %p107 = scmp.eq.s32.totalorder %s13, 1
    %p108 = scmp.ne.s32.totalorder %s103, %s105
    %p109 = scmp.eq.s32.totalorder %s13, 0
    %p110 = por %p108, %p109
    %p111 = scmp.ne.s32.totalorder %s103, %s105
    %p112 = scmp.eq.s32.totalorder %s18, 1
    %p113 = por %p111, %p112
    %p114 = scmp.ne.s32.totalorder %s105, %s106
    %p115 = scmp.eq.s32.totalorder %s18, 0
    %p116 = por %p114, %p115
    %p117 = scmp.ne.s32.totalorder %s105, %s106
    %p118 = scmp.eq.s32.totalorder %s19, 1
    %p119 = por %p117, %p118
    %p121 = scmp.ne.s32.totalorder %s106, %s120
    %p122 = scmp.eq.s32.totalorder %s19, 0
    %p123 = por %p121, %p122
    %s125 = sadd.s32 %s124, 1
    %p128 = scmp.eq.s32.totalorder %s13, 1
    %p129 = scmp.ne.s32.totalorder %s124, %s126
    %p130 = scmp.eq.s32.totalorder %s13, 0
    %p131 = por %p129, %p130
    %p132 = scmp.ne.s32.totalorder %s124, %s126
    %p133 = scmp.eq.s32.totalorder %s18, 1
    %p134 = por %p132, %p133
    %p135 = scmp.ne.s32.totalorder %s126, %s127
    %p136 = scmp.eq.s32.totalorder %s18, 0
    %p137 = por %p135, %p136
    %p138 = scmp.ne.s32.totalorder %s126, %s127
    %p139 = scmp.eq.s32.totalorder %s19, 1
    %p140 = por %p138, %p139
    %p142 = scmp.ne.s32.totalorder %s127, %s141
    %p143 = scmp.eq.s32.totalorder %s19, 0
    %p144 = por %p142, %p143
    %s145 = ssub.s32 %s21, %s28
    %p146 = scmp.eq.s32.totalorder %s145, 0
    %s148 = sadd.s32 %s147, 1
    %s149 = scalar_select %p146, %s147, %s148
    %p152 = pneg %p146
    %p153 = scmp.eq.s32.totalorder %s13, 1
    %p154 = por %p152, %p153
    %p155 = scmp.ne.s32.totalorder %s147, %s150
    %p156 = scmp.eq.s32.totalorder %s13, 0
    %p157 = por %p155, %p156
    %p158 = scmp.ne.s32.totalorder %s147, %s150
    %p159 = scmp.eq.s32.totalorder %s18, 1
    %p160 = por %p158, %p159
    %p161 = scmp.ne.s32.totalorder %s150, %s151
    %p162 = scmp.eq.s32.totalorder %s18, 0
    %p163 = por %p161, %p162
    %p164 = scmp.ne.s32.totalorder %s150, %s151
    %p165 = scmp.eq.s32.totalorder %s19, 1
    %p166 = por %p164, %p165
    %p168 = scmp.ne.s32.totalorder %s151, %s167
    %p169 = scmp.eq.s32.totalorder %s19, 0
    %p170 = por %p168, %p169
    %s171 = ssub.s32 %s21, %s28
    %p172 = scmp.eq.s32.totalorder %s171, 0
    %s174 = sadd.s32 %s173, 1
    %s175 = scalar_select %p172, %s173, %s174
    %p178 = pneg %p172
    %p179 = scmp.eq.s32.totalorder %s13, 1
    %p180 = por %p178, %p179
    %p181 = scmp.ne.s32.totalorder %s173, %s176
    %p182 = scmp.eq.s32.totalorder %s13, 0
    %p183 = por %p181, %p182
    %p184 = scmp.ne.s32.totalorder %s173, %s176
    %p185 = scmp.eq.s32.totalorder %s18, 1
    %p186 = por %p184, %p185
    %p187 = scmp.ne.s32.totalorder %s176, %s177
    %p188 = scmp.eq.s32.totalorder %s18, 0
    %p189 = por %p187, %p188
    %p190 = scmp.ne.s32.totalorder %s176, %s177
    %p191 = scmp.eq.s32.totalorder %s19, 1
    %p192 = por %p190, %p191
    %p194 = scmp.ne.s32.totalorder %s177, %s193
    %p195 = scmp.eq.s32.totalorder %s19, 0
    %p196 = por %p194, %p195
    %s197 = ssub.s32 %s20, %s32
    %s198 = ssub.s32 %s21, %s28
    %s199 = sor.u32 %s197, %s198
    %p200 = scmp.eq.s32.totalorder %s199, 0
    %s202 = sadd.s32 %s201, 1
    %s203 = scalar_select %p200, %s201, %s202
    %p206 = pneg %p200
    %p207 = scmp.eq.s32.totalorder %s13, 1
    %p208 = por %p206, %p207
    %p209 = scmp.ne.s32.totalorder %s201, %s204
    %p210 = scmp.eq.s32.totalorder %s13, 0
    %p211 = por %p209, %p210
    %p212 = scmp.ne.s32.totalorder %s201, %s204
    %p213 = scmp.eq.s32.totalorder %s18, 1
    %p214 = por %p212, %p213
    %p215 = scmp.ne.s32.totalorder %s204, %s205
    %p216 = scmp.eq.s32.totalorder %s18, 0
    %p217 = por %p215, %p216
    %p218 = scmp.ne.s32.totalorder %s204, %s205
    %p219 = scmp.eq.s32.totalorder %s19, 1
    %p220 = por %p218, %p219
    %p222 = scmp.ne.s32.totalorder %s205, %s221
    %p223 = scmp.eq.s32.totalorder %s19, 0
    %p224 = por %p222, %p223
    %p225 = scmp.le.s32.totalorder 1, %s13
    %p226 = scmp.lt.s32.totalorder %s13, 3
    %p227 = pnand %p225, %p226
    %p228 = pneg %p227
    // Predicated region
    $region9: #{res_biaffine_forward.6} parent=5 // pred_check
      _
    $region10: #{res_biaffine_forward.6} parent=5 // pred_check_branch
      %230 = sbr.rel (%p227) target = $region12
    $region11: #{res_biaffine_forward.6} parent=5 // pred_region
      %s231 = ssub.s32 %s13, 1
      // Predicated region
      $region13: #{res_biaffine_forward.6} parent=11 // pred_check
        %p232 = pneg %p74
      $region14: #{res_biaffine_forward.6} parent=11 // pred_check_branch
        %234 = sbr.rel (%p232) target = $region16
      $region15: #{res_biaffine_forward.6} parent=11 // pred_region
        _
      $region16: #{res_biaffine_forward.6} parent=11 // pred_fallthru
        _
      // Predicated region
      $region17: #{res_biaffine_forward.6} parent=11 // pred_check
        %p235 = pneg %p95
      $region18: #{res_biaffine_forward.6} parent=11 // pred_check_branch
        %237 = sbr.rel (%p235) target = $region20
      $region19: #{res_biaffine_forward.6} parent=11 // pred_region
        _
      $region20: #{res_biaffine_forward.6} parent=11 // pred_fallthru
        _
      // Predicated region
      $region21: #{res_biaffine_forward.6} parent=11 // pred_check
        %p238 = pneg %p116
      $region22: #{res_biaffine_forward.6} parent=11 // pred_check_branch
        %240 = sbr.rel (%p238) target = $region24
      $region23: #{res_biaffine_forward.6} parent=11 // pred_region
        _
      $region24: #{res_biaffine_forward.6} parent=11 // pred_fallthru
        _
      // Predicated region
      $region25: #{res_biaffine_forward.6} parent=11 // pred_check
        %p241 = pneg %p137
      $region26: #{res_biaffine_forward.6} parent=11 // pred_check_branch
        %243 = sbr.rel (%p241) target = $region28
      $region27: #{res_biaffine_forward.6} parent=11 // pred_region
        _
      $region28: #{res_biaffine_forward.6} parent=11 // pred_fallthru
        _
      // Predicated region
      $region29: #{res_biaffine_forward.6} parent=11 // pred_check
        %p244 = pneg %p163
      $region30: #{res_biaffine_forward.6} parent=11 // pred_check_branch
        %246 = sbr.rel (%p244) target = $region32
      $region31: #{res_biaffine_forward.6} parent=11 // pred_region
        %p247 = scmp.lt.s32.totalorder %s23, 0
        %s248 = scalar_select %p247, %s23, 0
        %s249 = smul.addr %s248, 8
        %s250 = scalar_lea.vmem %s5, %s249
      $region32: #{res_biaffine_forward.6} parent=11 // pred_fallthru
        _
      // Predicated region
      $region33: #{res_biaffine_forward.6} parent=11 // pred_check
        %p251 = pneg %p189
      $region34: #{res_biaffine_forward.6} parent=11 // pred_check_branch
        %253 = sbr.rel (%p251) target = $region36
      $region35: #{res_biaffine_forward.6} parent=11 // pred_region
        %p254 = scmp.lt.s32.totalorder %s23, 0
        %s255 = scalar_select %p254, %s23, 0
        %s256 = smul.addr %s255, 8
        %s257 = scalar_lea.vmem %s6, %s256
      $region36: #{res_biaffine_forward.6} parent=11 // pred_fallthru
        _
    $region12: #{res_biaffine_forward.6} parent=5 // pred_fallthru
      _
    %p258 = scmp.lt.s32.totalorder %s13, 2
    // Predicated region
    $region37: #{res_biaffine_forward.6} parent=5 // pred_check
      %p259 = pneg %p258
    $region38: #{res_biaffine_forward.6} parent=5 // pred_check_branch
      %261 = sbr.rel (%p259) target = $region40
    $region39: #{res_biaffine_forward.6} parent=5 // pred_region
      // Predicated region
      $region41: #{res_biaffine_forward.6} parent=39 // pred_check
        %p262 = pneg %p47
      $region42: #{res_biaffine_forward.6} parent=39 // pred_check_branch
        %264 = sbr.rel (%p262) target = $region44
      $region43: #{res_biaffine_forward.6} parent=39 // pred_region
        %p265 = scmp.lt.s32.totalorder %s20, 1
        %s266 = scalar_select %p265, %s20, 1
        %p267 = scmp.lt.s32.totalorder %s21, 0
        %s268 = scalar_select %p267, %s21, 0
        %s269 = sadd.s32 %s268, %s266
        %s270 = smul.addr %s269, 4
        %s271 = scalar_lea.vmem %s0, %s270
      $region44: #{res_biaffine_forward.6} parent=39 // pred_fallthru
        _
    $region40: #{res_biaffine_forward.6} parent=5 // pred_fallthru
      _
    %p272 = scmp.le.s32.totalorder 1, %s13
    %p273 = scmp.lt.s32.totalorder %s13, 3
    %p274 = pnand %p272, %p273
    %p275 = pneg %p274
    // Predicated region
    $region45: #{res_biaffine_forward.6} parent=5 // pred_check
      _
    $region46: #{res_biaffine_forward.6} parent=5 // pred_check_branch
      %277 = sbr.rel (%p274) target = $region48
    $region47: #{res_biaffine_forward.6} parent=5 // pred_region
      %s278 = ssub.s32 %s13, 1
      %p279 = scmp.lt.s32.totalorder %s22, 1
      %s280 = scalar_select %p279, %s22, 1
      %p281 = scmp.lt.s32.totalorder %s23, 0
      %s282 = scalar_select %p281, %s23, 0
      %s283 = sadd.s32 %s282, %s280
      %s284 = smul.addr %s283, 4
      %s285 = scalar_lea.vmem %s0, %s284
      %p286 = pneg %p53
      %p287 = pneg %p50
      %p288 = pneg %p74
      %p289 = pneg %p71
      %p290 = pneg %p95
      %p291 = pneg %p92
      %p292 = pneg %p116
      %p293 = pneg %p113
      %p294 = pneg %p137
      %p295 = pneg %p134
      %p296 = scmp.lt.s32.totalorder %s23, 0
      %s297 = scalar_select %p296, %s23, 0
      %s298 = smul.addr %s297, 8
      %s299 = scalar_lea.vmem %s5, %s298
      %p300 = pneg %p163
      %p301 = pneg %p160
      %p302 = scmp.lt.s32.totalorder %s23, 0
      %s303 = scalar_select %p302, %s23, 0
      %s304 = smul.addr %s303, 8
      %s305 = scalar_lea.vmem %s6, %s304
      %p306 = pneg %p189
      %p307 = pneg %p186
      %p308 = pneg %p217
      %p309 = pneg %p214
      %p310 = scmp.lt.s32.totalorder %s22, 1
      %s311 = scalar_select %p310, %s22, 1
      %p312 = scmp.lt.s32.totalorder %s23, 0
      %s313 = scalar_select %p312, %s23, 0
      %s314 = sadd.s32 %s313, %s311
      %s315 = smul.addr %s314, 4
      %s316 = scalar_lea.vmem %s7, %s315
      %p317 = scmp.lt.s32.totalorder %s22, 1
      %s318 = scalar_select %p317, %s22, 1
      %p319 = scmp.lt.s32.totalorder %s23, 0
      %s320 = scalar_select %p319, %s23, 0
      %s321 = sadd.s32 %s320, %s318
      %s322 = smul.addr %s321, 4
      %s323 = scalar_lea.vmem %s0, %s322
      %p324 = scmp.lt.s32.totalorder %s23, 0
      %s325 = scalar_select %p324, %s23, 0
      %s326 = smul.addr %s325, 8
      %s327 = scalar_lea.vmem %s5, %s326
      %p328 = scmp.lt.s32.totalorder %s23, 0
      %s329 = scalar_select %p328, %s23, 0
      %s330 = smul.addr %s329, 8
      %s331 = scalar_lea.vmem %s6, %s330
      %p332 = scmp.lt.s32.totalorder %s22, 1
      %s333 = scalar_select %p332, %s22, 1
      %p334 = scmp.lt.s32.totalorder %s23, 0
      %s335 = scalar_select %p334, %s23, 0
      %s336 = sadd.s32 %s335, %s333
      %s337 = smul.addr %s336, 4
      %s338 = scalar_lea.vmem %s7, %s337
      %v340 = vld [vmem:[%s323] sm:$0xf]
      %v341 = vld [vmem:[%s1] sm:$0xf]
      %v342 = vld [vmem:[%s1 + $0x4] sm:$0xf]
      %v343 = vld [vmem:[%s1 + $0x8] sm:$0xf]
      %v344 = vld [vmem:[%s1 + $0xc] sm:$0xf]
      %v345 = vld [vmem:[%s3] sm:$0x1]
      %v347 = vlaneseq
      %v348 = vshrl.u32 %v347, 7
      %v349 = vsub.s32 0, %v348
      %v350 = vrot.slane %v345, %v349
      %v356 = vunpack.c.l.b16 %v341
      %v357 = vunpack.c.l.b16 %v342
      %v358 = vunpack.c.l.b16 %v343
      %v359 = vunpack.c.l.b16 %v344
      %v360 = vpack.c.b16 %v357, %v356
      %v361 = vpack.c.b16 %v359, %v358
      %vm364 = vcmask 261120
      %v366 = vsel %vm364, %v340, 0
      %368 = vmatprep.subr.bf16.mxu0 0
      %369 = vmatpush1.bf16.msra.mxu0 %v360
      %370 = vmatprep.subr.bf16.mxu0 0
      %371 = vmatpush1.bf16.msra.mxu0 %v361
      %372 = vmatprep.subr.bf16.mxu0 0
      %373 = vmatpush1.bf16.msra.mxu0 0
      %374 = vmatprep.subr.bf16.mxu0 0
      %375 = vmatpush1.bf16.msra.mxu0 0
      %376 = vmatprep.subr.bf16.mxu0 0
      %377 = vmatpush1.bf16.msra.mxu0 0
      %378 = vmatprep.subr.bf16.mxu0 0
      %379 = vmatpush1.bf16.msra.mxu0 0
      %380 = vmatprep.subr.bf16.mxu0 0
      %381 = vmatpush1.bf16.msra.mxu0 0
      %382 = vmatprep.subr.bf16.mxu0 0
      %383 = vmatpush1.bf16.msra.mxu0 0
      %384 = vmatprep.subr.bf16.mxu0 0
      %385 = vmatpush1.bf16.msra.mxu0 0
      %386 = vmatprep.subr.bf16.mxu0 0
      %387 = vmatpush1.bf16.msra.mxu0 0
      %388 = vmatprep.subr.bf16.mxu0 0
      %389 = vmatpush1.bf16.msra.mxu0 0
      %390 = vmatprep.subr.bf16.mxu0 0
      %391 = vmatpush1.bf16.msra.mxu0 0
      %392 = vmatprep.subr.bf16.mxu0 0
      %393 = vmatpush1.bf16.msra.mxu0 0
      %394 = vmatprep.subr.bf16.mxu0 0
      %395 = vmatpush1.bf16.msra.mxu0 0
      %396 = vmatprep.subr.bf16.mxu0 0
      %397 = vmatpush1.bf16.msra.mxu0 0
      %398 = vmatprep.subr.bf16.mxu0 0
      %399 = vmatpush1.bf16.msra.mxu0 0
      %400 = vmatprep.mubr.bf16.mxu0 0
      %401 = vmatmul.mubr.bf16.gmra.mrb[0].mxu0 %v366
      %v402 = vpop.f32.mrb[0].mxu0
      %v403 = vadd.f32 %v350, %v402
      %v404 = vpop.f32.mrb[0].mxu0
      %v405 = vpop.f32.mrb[0].mxu0
      %v406 = vpop.f32.mrb[0].mxu0
      %407 = vdwg.mxu0
      %v408 = vmul.f32 %v403, 0.5
      %v409 = vmul.f32 %v403, 0.70710677
      %v410 = verf.f32.pop %v409
      %v411 = vadd.f32 %v410, 1.0
      %v412 = vmul.f32 %v408, %v411
      %v413 = vld [vmem:[%s2] sm:$0xf]
      %v414 = vld [vmem:[%s2 + $0x4] sm:$0xf]
      %v415 = vld [vmem:[%s2 + $0x8] sm:$0xf]
      %v416 = vld [vmem:[%s2 + $0xc] sm:$0xf]
      %v417 = vld [vmem:[%s4] sm:$0x1]
      %v419 = vlaneseq
      %v420 = vshrl.u32 %v419, 7
      %v421 = vsub.s32 0, %v420
      %v422 = vrot.slane %v417, %v421
      %v428 = vunpack.c.l.b16 %v413
      %v429 = vunpack.c.l.b16 %v414
      %v430 = vunpack.c.l.b16 %v415
      %v431 = vunpack.c.l.b16 %v416
      %v432 = vpack.c.b16 %v429, %v428
      %v433 = vpack.c.b16 %v431, %v430
      %436 = vmatprep.subr.bf16.mxu0 0
      %437 = vmatpush1.bf16.msra.mxu0 %v432
      %438 = vmatprep.subr.bf16.mxu0 0
      %439 = vmatpush1.bf16.msra.mxu0 %v433
      %440 = vmatprep.subr.bf16.mxu0 0
      %441 = vmatpush1.bf16.msra.mxu0 0
      %442 = vmatprep.subr.bf16.mxu0 0
      %443 = vmatpush1.bf16.msra.mxu0 0
      %444 = vmatprep.subr.bf16.mxu0 0
      %445 = vmatpush1.bf16.msra.mxu0 0
      %446 = vmatprep.subr.bf16.mxu0 0
      %447 = vmatpush1.bf16.msra.mxu0 0
      %448 = vmatprep.subr.bf16.mxu0 0
      %449 = vmatpush1.bf16.msra.mxu0 0
      %450 = vmatprep.subr.bf16.mxu0 0
      %451 = vmatpush1.bf16.msra.mxu0 0
      %452 = vmatprep.subr.bf16.mxu0 0
      %453 = vmatpush1.bf16.msra.mxu0 0
      %454 = vmatprep.subr.bf16.mxu0 0
      %455 = vmatpush1.bf16.msra.mxu0 0
      %456 = vmatprep.subr.bf16.mxu0 0
      %457 = vmatpush1.bf16.msra.mxu0 0
      %458 = vmatprep.subr.bf16.mxu0 0
      %459 = vmatpush1.bf16.msra.mxu0 0
      %460 = vmatprep.subr.bf16.mxu0 0
      %461 = vmatpush1.bf16.msra.mxu0 0
      %462 = vmatprep.subr.bf16.mxu0 0
      %463 = vmatpush1.bf16.msra.mxu0 0
      %464 = vmatprep.subr.bf16.mxu0 0
      %465 = vmatpush1.bf16.msra.mxu0 0
      %466 = vmatprep.subr.bf16.mxu0 0
      %467 = vmatpush1.bf16.msra.mxu0 0
      %468 = vmatprep.mubr.bf16.mxu0 0
      %469 = vmatmul.mubr.bf16.gmra.mrb[0].mxu0 %v366
      %v470 = vpop.f32.mrb[0].mxu0
      %v471 = vadd.f32 %v422, %v470
      %v472 = vpop.f32.mrb[0].mxu0
      %v473 = vpop.f32.mrb[0].mxu0
      %v474 = vpop.f32.mrb[0].mxu0
      %475 = vdwg.mxu0
      %v476 = vmul.f32 %v471, 0.5
      %v477 = vmul.f32 %v471, 0.70710677
      %v478 = verf.f32.pop %v477
      %v479 = vadd.f32 %v478, 1.0
      %v480 = vmul.f32 %v476, %v479
      %v481 = vld [vmem:[%s327] sm:$0xff]
      %v482 = vmul.f32 %v412, %v481
      %v483 = vld [vmem:[%s331] sm:$0xff]
      %v484 = vmul.f32 %v480, %v483
      %v485 = vadd.f32 %v482, %v484
      %v486 = vpack.c.bf16 %v485, %v485
      %vm487 = vcmask 257024
      %488 = vst.msk [vmem:[%s338] sm:$0xf] %vm487, %v486
      %p489 = scmp.lt.s32.totalorder %s22, 1
      %s490 = scalar_select %p489, %s22, 1
      %p491 = scmp.lt.s32.totalorder %s23, 0
      %s492 = scalar_select %p491, %s23, 0
      %s493 = sadd.s32 %s492, %s490
      %s494 = smul.addr %s493, 4
      %s495 = scalar_lea.vmem %s7, %s494
      // Predicated region
      $region49: #{res_biaffine_forward.6} parent=47 // pred_check
        %p496 = pneg %p214
      $region50: #{res_biaffine_forward.6} parent=47 // pred_check_branch
        %498 = sbr.rel (%p496) target = $region52
      $region51: #{res_biaffine_forward.6} parent=47 // pred_region
        _
      $region52: #{res_biaffine_forward.6} parent=47 // pred_fallthru
        _
    $region48: #{res_biaffine_forward.6} parent=5 // pred_fallthru
      _
    %p499 = scmp.le.s32.totalorder 2, %s13
    // Predicated region
    $region53: #{res_biaffine_forward.6} parent=5 // pred_check
      %p500 = pneg %p499
    $region54: #{res_biaffine_forward.6} parent=5 // pred_check_branch
      %502 = sbr.rel (%p500) target = $region56
    $region55: #{res_biaffine_forward.6} parent=5 // pred_region
      %s503 = ssub.s32 %s13, 2
      // Predicated region
      $region57: #{res_biaffine_forward.6} parent=55 // pred_check
        %p504 = pneg %p220
      $region58: #{res_biaffine_forward.6} parent=55 // pred_check_branch
        %506 = sbr.rel (%p504) target = $region60
      $region59: #{res_biaffine_forward.6} parent=55 // pred_region
        %p507 = scmp.lt.s32.totalorder %s24, 1
        %s508 = scalar_select %p507, %s24, 1
        %p509 = scmp.lt.s32.totalorder %s25, 0
        %s510 = scalar_select %p509, %s25, 0
        %s511 = sadd.s32 %s510, %s508
        %s512 = smul.addr %s511, 4
        %s513 = scalar_lea.vmem %s7, %s512
      $region60: #{res_biaffine_forward.6} parent=55 // pred_fallthru
        _
    $region56: #{res_biaffine_forward.6} parent=5 // pred_fallthru
      _
  $region6: #{res_biaffine_forward.6} parent=0 // loop_footer
    %s17 = sadd.s32 1, %s13
  $region7: #{res_biaffine_forward.6} parent=0 // loop_footer_branch
    %12 = sbr.rel target = $region3
  $region8: #{res_biaffine_forward.6} parent=0 // loop_exit
    _

// kernel: res_biaffine_forward.7
$region0: #{res_biaffine_forward.7}
  #allocation0 [shape = 'u32[]', space=smem, size = 0x4, offset = 0x4, fixed_abs, tag = 'smem constant byte address 0x4 - core index']
  #allocation1 [shape = 'u32[144,128]{1,0:T(1,128)}', space=vmem, size = 0x12000, scoped, tag = 'internal scratch']
  %s0 = inlined_call_operand.vmem [shape: bf16[2,8,32], index: 0, kind: input, shape index: {}]
  %s1 = inlined_call_operand.vmem [shape: bf16[2,8,32], index: 1, kind: input, shape index: {}]
  %s2 = inlined_call_operand.vmem [shape: bf16[4,33,33], index: 2, kind: input, shape index: {}]
  %s3 = inlined_call_operand.vmem [shape: f32[2,4,8,8], index: 3, kind: output, shape index: {}]
  %s4 = sld [smem:[#allocation0]]
  $region45: #{res_biaffine_forward.7} parent=0
    _
  %s6 = ssub.s32 1, %s4
  %s7 = scalar_select 0, %s6, %s4
  loop: start=0, step=1, limit=4
  $region2: #{res_biaffine_forward.7} parent=0 // loop_pre_header
    _
  $region3: #{res_biaffine_forward.7} parent=0 // loop_header
    %s9 = sphi 0, %s13
    %p10 = scmp.ge.s32.totalorder %s9, 4
    %s19 = sphi 0, %s21
    %s22 = sphi 0, %s19
    %s23 = sphi 0, %s22
    %s39 = sphi 0, %s23
    %s45 = sphi 0, %s47
    %s48 = sphi 0, %s45
    %s49 = sphi 0, %s48
    %s65 = sphi 0, %s49
    %s69 = sphi 0, %s69
    %s71 = sphi 0, %s69
    %s72 = sphi 0, %s71
    %s86 = sphi 0, %s72
    %s92 = sphi 0, %s94
    %s95 = sphi 0, %s92
    %s96 = sphi 0, %s95
    %s112 = sphi 0, %s96
  $region4: #{res_biaffine_forward.7} parent=0 // loop_header_branch
    %12 = sbr.rel (%p10) target = $region8
  $region5: #{res_biaffine_forward.7} parent=0 // loop_body
    %s14 = ssub.s32 %s9, 1
    %s15 = ssub.s32 %s9, 2
    %s16 = sadd.s32 %s9, 1
    %s17 = ssub.s32 %s9, %s16
    %p18 = scmp.eq.s32.totalorder %s17, 0
    %s20 = sadd.s32 %s19, 1
    %s21 = scalar_select %p18, %s19, %s20
    %p24 = pneg %p18
    %p25 = scmp.eq.s32.totalorder %s9, 1
    %p26 = por %p24, %p25
    %p27 = scmp.ne.s32.totalorder %s19, %s22
    %p28 = scmp.eq.s32.totalorder %s9, 0
    %p29 = por %p27, %p28
    %p30 = scmp.ne.s32.totalorder %s19, %s22
    %p31 = scmp.eq.s32.totalorder %s14, 1
    %p32 = por %p30, %p31
    %p33 = scmp.ne.s32.totalorder %s22, %s23
    %p34 = scmp.eq.s32.totalorder %s14, 0
    %p35 = por %p33, %p34
    %p36 = scmp.ne.s32.totalorder %s22, %s23
    %p37 = scmp.eq.s32.totalorder %s15, 1
    %p38 = por %p36, %p37
    %p40 = scmp.ne.s32.totalorder %s23, %s39
    %p41 = scmp.eq.s32.totalorder %s15, 0
    %p42 = por %p40, %p41
    %s43 = ssub.s32 %s9, %s16
    %p44 = scmp.eq.s32.totalorder %s43, 0
    %s46 = sadd.s32 %s45, 1
    %s47 = scalar_select %p44, %s45, %s46
    %p50 = pneg %p44
    %p51 = scmp.eq.s32.totalorder %s9, 1
    %p52 = por %p50, %p51
    %p53 = scmp.ne.s32.totalorder %s45, %s48
    %p54 = scmp.eq.s32.totalorder %s9, 0
    %p55 = por %p53, %p54
    %p56 = scmp.ne.s32.totalorder %s45, %s48
    %p57 = scmp.eq.s32.totalorder %s14, 1
    %p58 = por %p56, %p57
    %p59 = scmp.ne.s32.totalorder %s48, %s49
    %p60 = scmp.eq.s32.totalorder %s14, 0
    %p61 = por %p59, %p60
    %p62 = scmp.ne.s32.totalorder %s48, %s49
    %p63 = scmp.eq.s32.totalorder %s15, 1
    %p64 = por %p62, %p63
    %p66 = scmp.ne.s32.totalorder %s49, %s65
    %p67 = scmp.eq.s32.totalorder %s15, 0
    %p68 = por %p66, %p67
    %s70 = sadd.s32 %s69, 1
    %p73 = scmp.eq.s32.totalorder %s9, 1
    %p74 = scmp.ne.s32.totalorder %s69, %s71
    %p75 = scmp.eq.s32.totalorder %s9, 0
    %p76 = por %p74, %p75
    %p77 = scmp.ne.s32.totalorder %s69, %s71
    %p78 = scmp.eq.s32.totalorder %s14, 1
    %p79 = por %p77, %p78
    %p80 = scmp.ne.s32.totalorder %s71, %s72
    %p81 = scmp.eq.s32.totalorder %s14, 0
    %p82 = por %p80, %p81
    %p83 = scmp.ne.s32.totalorder %s71, %s72
    %p84 = scmp.eq.s32.totalorder %s15, 1
    %p85 = por %p83, %p84
    %p87 = scmp.ne.s32.totalorder %s72, %s86
    %p88 = scmp.eq.s32.totalorder %s15, 0
    %p89 = por %p87, %p88
    %s90 = ssub.s32 %s9, %s16
    %p91 = scmp.eq.s32.totalorder %s90, 0
    %s93 = sadd.s32 %s92, 1
    %s94 = scalar_select %p91, %s92, %s93
    %p97 = pneg %p91
    %p98 = scmp.eq.s32.totalorder %s9, 1
    %p99 = por %p97, %p98
    %p100 = scmp.ne.s32.totalorder %s92, %s95
    %p101 = scmp.eq.s32.totalorder %s9, 0
    %p102 = por %p100, %p101
    %p103 = scmp.ne.s32.totalorder %s92, %s95
    %p104 = scmp.eq.s32.totalorder %s14, 1
    %p105 = por %p103, %p104
    %p106 = scmp.ne.s32.totalorder %s95, %s96
    %p107 = scmp.eq.s32.totalorder %s14, 0
    %p108 = por %p106, %p107
    %p109 = scmp.ne.s32.totalorder %s95, %s96
    %p110 = scmp.eq.s32.totalorder %s15, 1
    %p111 = por %p109, %p110
    %p113 = scmp.ne.s32.totalorder %s96, %s112
    %p114 = scmp.eq.s32.totalorder %s15, 0
    %p115 = por %p113, %p114
    %p116 = scmp.le.s32.totalorder 1, %s9
    %p117 = scmp.lt.s32.totalorder %s9, 3
    %p118 = pnand %p116, %p117
    %p119 = pneg %p118
    // Predicated region
    $region9: #{res_biaffine_forward.7} parent=5 // pred_check
      _
    $region10: #{res_biaffine_forward.7} parent=5 // pred_check_branch
      %121 = sbr.rel (%p118) target = $region12
    $region11: #{res_biaffine_forward.7} parent=5 // pred_region
      %s122 = ssub.s32 %s9, 1
      // Predicated region
      $region13: #{res_biaffine_forward.7} parent=11 // pred_check
        %p123 = pneg %p82
      $region14: #{res_biaffine_forward.7} parent=11 // pred_check_branch
        %125 = sbr.rel (%p123) target = $region16
      $region15: #{res_biaffine_forward.7} parent=11 // pred_region
        _
      $region16: #{res_biaffine_forward.7} parent=11 // pred_fallthru
        _
    $region12: #{res_biaffine_forward.7} parent=5 // pred_fallthru
      _
    %p126 = scmp.lt.s32.totalorder %s9, 2
    // Predicated region
    $region17: #{res_biaffine_forward.7} parent=5 // pred_check
      %p127 = pneg %p126
    $region18: #{res_biaffine_forward.7} parent=5 // pred_check_branch
      %129 = sbr.rel (%p127) target = $region20
    $region19: #{res_biaffine_forward.7} parent=5 // pred_region
      // Predicated region
      $region21: #{res_biaffine_forward.7} parent=19 // pred_check
        %p130 = pneg %p29
      $region22: #{res_biaffine_forward.7} parent=19 // pred_check_branch
        %132 = sbr.rel (%p130) target = $region24
      $region23: #{res_biaffine_forward.7} parent=19 // pred_region
        %p133 = scmp.lt.s32.totalorder %s9, 1
        %s134 = scalar_select %p133, %s9, 1
        %s135 = smul.addr %s134, 4
        %s136 = scalar_lea.vmem %s0, %s135
      $region24: #{res_biaffine_forward.7} parent=19 // pred_fallthru
        _
      // Predicated region
      $region25: #{res_biaffine_forward.7} parent=19 // pred_check
        %p137 = pneg %p55
      $region26: #{res_biaffine_forward.7} parent=19 // pred_check_branch
        %139 = sbr.rel (%p137) target = $region28
      $region27: #{res_biaffine_forward.7} parent=19 // pred_region
        %p140 = scmp.lt.s32.totalorder %s9, 1
        %s141 = scalar_select %p140, %s9, 1
        %s142 = smul.addr %s141, 4
        %s143 = scalar_lea.vmem %s1, %s142
      $region28: #{res_biaffine_forward.7} parent=19 // pred_fallthru
        _
    $region20: #{res_biaffine_forward.7} parent=5 // pred_fallthru
      _
    %p144 = scmp.le.s32.totalorder 1, %s9
    %p145 = scmp.lt.s32.totalorder %s9, 3
    %p146 = pnand %p144, %p145
    %p147 = pneg %p146
    // Predicated region
    $region29: #{res_biaffine_forward.7} parent=5 // pred_check
      _
    $region30: #{res_biaffine_forward.7} parent=5 // pred_check_branch
      %149 = sbr.rel (%p146) target = $region32
    $region31: #{res_biaffine_forward.7} parent=5 // pred_region
      %s150 = ssub.s32 %s9, 1
      %p151 = scmp.lt.s32.totalorder %s14, 1
      %s152 = scalar_select %p151, %s14, 1
      %s153 = smul.addr %s152, 4
      %s154 = scalar_lea.vmem %s0, %s153
      %p155 = pneg %p35
      %p156 = pneg %p32
      %p157 = scmp.lt.s32.totalorder %s14, 1
      %s158 = scalar_select %p157, %s14, 1
      %s159 = smul.addr %s158, 4
      %s160 = scalar_lea.vmem %s1, %s159
      %p161 = pneg %p61
      %p162 = pneg %p58
      %p163 = pneg %p82
      %p164 = pneg %p79
      %p165 = pneg %p108
      %p166 = pneg %p105
      %p167 = scmp.lt.s32.totalorder %s14, 1
      %s168 = scalar_select %p167, %s14, 1
      %s169 = smul.addr %s168, 4
      %s170 = smul.addr %s169, 8
      %s171 = scalar_lea.vmem %s3, %s170
      %p172 = scmp.lt.s32.totalorder %s14, 1
      %s173 = scalar_select %p172, %s14, 1
      %s174 = smul.addr %s173, 4
      %s175 = scalar_lea.vmem %s0, %s174
      %p176 = scmp.lt.s32.totalorder %s14, 1
      %s177 = scalar_select %p176, %s14, 1
      %s178 = smul.addr %s177, 4
      %s179 = scalar_lea.vmem %s1, %s178
      %p180 = scmp.lt.s32.totalorder %s14, 1
      %s181 = scalar_select %p180, %s14, 1
      %s182 = smul.addr %s181, 4
      %s183 = smul.addr %s182, 8
      %s184 = scalar_lea.vmem %s3, %s183
      %v186 = vld [vmem:[%s175] sm:$0xf]
      %v187 = vunpack.c.l.bf16 %v186
      %v188 = vld [vmem:[%s179] sm:$0xf]
      %v189 = vunpack.c.l.bf16 %v188
      %vm190 = vcmask 261120
      %v191 = vsel %vm190, %v187, 1.0
      %v192 = vpack.c.bf16 %v191, %v191
      %193 = vxpose.xlu0.b32.start [1/16] %v189, 128
      %194 = vxpose.xlu0.b32.cont [2/16] 0.0, 128
      %195 = vxpose.xlu0.b32.cont [3/16] 0.0, 128
      %196 = vxpose.xlu0.b32.cont [4/16] 0.0, 128
      %197 = vxpose.xlu0.b32.cont [5/16] 0.0, 128
      %198 = vxpose.xlu0.b32.cont [6/16] 0.0, 128
      %199 = vxpose.xlu0.b32.cont [7/16] 0.0, 128
      %200 = vxpose.xlu0.b32.cont [8/16] 0.0, 128
      %201 = vxpose.xlu0.b32.cont [9/16] 0.0, 128
      %202 = vxpose.xlu0.b32.cont [10/16] 0.0, 128
      %203 = vxpose.xlu0.b32.cont [11/16] 0.0, 128
      %204 = vxpose.xlu0.b32.cont [12/16] 0.0, 128
      %205 = vxpose.xlu0.b32.cont [13/16] 0.0, 128
      %206 = vxpose.xlu0.b32.cont [14/16] 0.0, 128
      %207 = vxpose.xlu0.b32.cont [15/16] 0.0, 128
      %208 = vxpose.xlu0.b32.end [16/16] 0.0, 128
      %v209 = vpop.trf.xlu0
      %v210 = vpop.trf.xlu0
      %v211 = vpop.trf.xlu0
      %v212 = vpop.trf.xlu0
      %v213 = vpop.trf.xlu0
      %v214 = vpop.trf.xlu0
      %v215 = vpop.trf.xlu0
      %v216 = vpop.trf.xlu0
      %v217 = vpop.trf.xlu0
      %v218 = vpop.trf.xlu0
      %v219 = vpop.trf.xlu0
      %v220 = vpop.trf.xlu0
      %v221 = vpop.trf.xlu0
      %v222 = vpop.trf.xlu0
      %v223 = vpop.trf.xlu0
      %v224 = vpop.trf.xlu0
      %v225 = vpack.c.bf16 %v210, %v209
      %v226 = vpack.c.bf16 %v212, %v211
      %v227 = vpack.c.bf16 1.0, 1.0
      %v228 = vld [vmem:[%s2] sm:$0xf]
      %v229 = vld [vmem:[%s2 + $0x4] sm:$0xf]
      %v230 = vld [vmem:[%s2 + $0x8] sm:$0xf]
      %v231 = vld [vmem:[%s2 + $0xc] sm:$0xf]
      %v232 = vld [vmem:[%s2 + $0x10] sm:$0x1]
      %v238 = vunpack.c.l.b16 %v228
      %v239 = vunpack.c.l.b16 %v229
      %v240 = vunpack.c.l.b16 %v230
      %v241 = vunpack.c.l.b16 %v231
      %v242 = vunpack.c.l.b16 %v232
      %v243 = vpack.c.b16 %v239, %v238
      %v244 = vpack.c.b16 %v241, %v240
      %v245 = vpack.c.b16 %v242, %v242
      %vm248 = vcmask 269312
      %v250 = vsel %vm248, %v192, 0
      %vm252 = vcmask 1040384
      %v253 = vsel 0, 4294967295, 65535
      %v254 = vsel %vm252, %v253, 0
      %v256 = vand.u32 %v245, %v254
      %258 = vmatprep.subr.bf16.mxu0 0
      %259 = vmatpush1.bf16.msra.mxu0 %v243
      %260 = vmatprep.subr.bf16.mxu0 0
      %261 = vmatpush1.bf16.msra.mxu0 %v244
      %262 = vmatprep.subr.bf16.mxu0 0
      %263 = vmatpush1.bf16.msra.mxu0 %v256
      %264 = vmatprep.subr.bf16.mxu0 0
      %265 = vmatpush1.bf16.msra.mxu0 0
      %266 = vmatprep.subr.bf16.mxu0 0
      %267 = vmatpush1.bf16.msra.mxu0 0
      %268 = vmatprep.subr.bf16.mxu0 0
      %269 = vmatpush1.bf16.msra.mxu0 0
      %270 = vmatprep.subr.bf16.mxu0 0
      %271 = vmatpush1.bf16.msra.mxu0 0
      %272 = vmatprep.subr.bf16.mxu0 0
      %273 = vmatpush1.bf16.msra.mxu0 0
      %274 = vmatprep.subr.bf16.mxu0 0
      %275 = vmatpush1.bf16.msra.mxu0 0
      %276 = vmatprep.subr.bf16.mxu0 0
      %277 = vmatpush1.bf16.msra.mxu0 0
      %278 = vmatprep.subr.bf16.mxu0 0
      %279 = vmatpush1.bf16.msra.mxu0 0
      %280 = vmatprep.subr.bf16.mxu0 0
      %281 = vmatpush1.bf16.msra.mxu0 0
      %282 = vmatprep.subr.bf16.mxu0 0
      %283 = vmatpush1.bf16.msra.mxu0 0
      %284 = vmatprep.subr.bf16.mxu0 0
      %285 = vmatpush1.bf16.msra.mxu0 0
      %286 = vmatprep.subr.bf16.mxu0 0
      %287 = vmatpush1.bf16.msra.mxu0 0
      %288 = vmatprep.subr.bf16.mxu0 0
      %289 = vmatpush1.bf16.msra.mxu0 0
      %290 = vmatprep.mubr.bf16.mxu0 0
      %291 = vmatmul.mubr.bf16.gmra.mrb[0].mxu0 %v250
      %v292 = vpop.f32.mrb[0].mxu0
      %v293 = vadd.f32 0.0, %v292
      %v294 = vpop.f32.mrb[0].mxu0
      %v295 = vpop.f32.mrb[0].mxu0
      %v296 = vpop.f32.mrb[0].mxu0
      %297 = vdwg.mxu0
      %v298 = vpack.c.bf16 %v293, %v293
      %v300 = vsel %vm248, %v298, 0
      %v303 = vand.u32 %v227, %v254
      %305 = vmatprep.subr.bf16.mxu0 0
      %306 = vmatpush1.bf16.msra.mxu0 %v225
      %307 = vmatprep.subr.bf16.mxu0 0
      %308 = vmatpush1.bf16.msra.mxu0 %v226
      %309 = vmatprep.subr.bf16.mxu0 0
      %310 = vmatpush1.bf16.msra.mxu0 %v303
      %311 = vmatprep.subr.bf16.mxu0 0
      %312 = vmatpush1.bf16.msra.mxu0 0
      %313 = vmatprep.subr.bf16.mxu0 0
      %314 = vmatpush1.bf16.msra.mxu0 0
      %315 = vmatprep.subr.bf16.mxu0 0
      %316 = vmatpush1.bf16.msra.mxu0 0
      %317 = vmatprep.subr.bf16.mxu0 0
      %318 = vmatpush1.bf16.msra.mxu0 0
      %319 = vmatprep.subr.bf16.mxu0 0
      %320 = vmatpush1.bf16.msra.mxu0 0
      %321 = vmatprep.subr.bf16.mxu0 0
      %322 = vmatpush1.bf16.msra.mxu0 0
      %323 = vmatprep.subr.bf16.mxu0 0
      %324 = vmatpush1.bf16.msra.mxu0 0
      %325 = vmatprep.subr.bf16.mxu0 0
      %326 = vmatpush1.bf16.msra.mxu0 0
      %327 = vmatprep.subr.bf16.mxu0 0
      %328 = vmatpush1.bf16.msra.mxu0 0
      %329 = vmatprep.subr.bf16.mxu0 0
      %330 = vmatpush1.bf16.msra.mxu0 0
      %331 = vmatprep.subr.bf16.mxu0 0
      %332 = vmatpush1.bf16.msra.mxu0 0
      %333 = vmatprep.subr.bf16.mxu0 0
      %334 = vmatpush1.bf16.msra.mxu0 0
      %335 = vmatprep.subr.bf16.mxu0 0
      %336 = vmatpush1.bf16.msra.mxu0 0
      %337 = vmatprep.mubr.bf16.mxu0 0
      %338 = vmatmul.mubr.bf16.gmra.mrb[0].mxu0 %v300
      %v339 = vpop.f32.mrb[0].mxu0
      %v340 = vadd.f32 0.0, %v339
      %v341 = vpop.f32.mrb[0].mxu0
      %v342 = vpop.f32.mrb[0].mxu0
      %v343 = vpop.f32.mrb[0].mxu0
      %344 = vdwg.mxu0
      %vm345 = vcmask 64512
      %346 = vst.msk [vmem:[%s184] sm:$0xff] %vm345, %v340
      %s347 = scalar_lea.vmem %s2, 20
      %v348 = vld [vmem:[%s347] sm:$0xf]
      %v349 = vld [vmem:[%s347 + $0x4] sm:$0xf]
      %v350 = vld [vmem:[%s347 + $0x8] sm:$0xf]
      %v351 = vld [vmem:[%s347 + $0xc] sm:$0xf]
      %v352 = vld [vmem:[%s347 + $0x10] sm:$0x1]
      %v358 = vunpack.c.l.b16 %v348
      %v359 = vunpack.c.l.b16 %v349
      %v360 = vunpack.c.l.b16 %v350
      %v361 = vunpack.c.l.b16 %v351
      %v362 = vunpack.c.l.b16 %v352
      %v363 = vpack.c.b16 %v359, %v358
      %v364 = vpack.c.b16 %v361, %v360
      %v365 = vpack.c.b16 %v362, %v362
      %v369 = vand.u32 %v365, %v254
      %371 = vmatprep.subr.bf16.mxu0 0
      %372 = vmatpush1.bf16.msra.mxu0 %v363
      %373 = vmatprep.subr.bf16.mxu0 0
      %374 = vmatpush1.bf16.msra.mxu0 %v364
      %375 = vmatprep.subr.bf16.mxu0 0
      %376 = vmatpush1.bf16.msra.mxu0 %v369
      %377 = vmatprep.subr.bf16.mxu0 0
      %378 = vmatpush1.bf16.msra.mxu0 0
      %379 = vmatprep.subr.bf16.mxu0 0
      %380 = vmatpush1.bf16.msra.mxu0 0
      %381 = vmatprep.subr.bf16.mxu0 0
      %382 = vmatpush1.bf16.msra.mxu0 0
      %383 = vmatprep.subr.bf16.mxu0 0
      %384 = vmatpush1.bf16.msra.mxu0 0
      %385 = vmatprep.subr.bf16.mxu0 0
      %386 = vmatpush1.bf16.msra.mxu0 0
      %387 = vmatprep.subr.bf16.mxu0 0
      %388 = vmatpush1.bf16.msra.mxu0 0
      %389 = vmatprep.subr.bf16.mxu0 0
      %390 = vmatpush1.bf16.msra.mxu0 0
      %391 = vmatprep.subr.bf16.mxu0 0
      %392 = vmatpush1.bf16.msra.mxu0 0
      %393 = vmatprep.subr.bf16.mxu0 0
      %394 = vmatpush1.bf16.msra.mxu0 0
      %395 = vmatprep.subr.bf16.mxu0 0
      %396 = vmatpush1.bf16.msra.mxu0 0
      %397 = vmatprep.subr.bf16.mxu0 0
      %398 = vmatpush1.bf16.msra.mxu0 0
      %399 = vmatprep.subr.bf16.mxu0 0
      %400 = vmatpush1.bf16.msra.mxu0 0
      %401 = vmatprep.subr.bf16.mxu0 0
      %402 = vmatpush1.bf16.msra.mxu0 0
      %403 = vmatprep.mubr.bf16.mxu0 0
      %404 = vmatmul.mubr.bf16.gmra.mrb[0].mxu0 %v250
      %v405 = vpop.f32.mrb[0].mxu0
      %v406 = vadd.f32 0.0, %v405
      %v407 = vpop.f32.mrb[0].mxu0
      %v408 = vpop.f32.mrb[0].mxu0
      %v409 = vpop.f32.mrb[0].mxu0
      %410 = vdwg.mxu0
      %v411 = vpack.c.bf16 %v406, %v406
      %v413 = vsel %vm248, %v411, 0
      %415 = vmatprep.subr.bf16.mxu0 0
      %416 = vmatpush1.bf16.msra.mxu0 %v225
      %417 = vmatprep.subr.bf16.mxu0 0
      %418 = vmatpush1.bf16.msra.mxu0 %v226
      %419 = vmatprep.subr.bf16.mxu0 0
      %420 = vmatpush1.bf16.msra.mxu0 %v303
      %421 = vmatprep.subr.bf16.mxu0 0
      %422 = vmatpush1.bf16.msra.mxu0 0
      %423 = vmatprep.subr.bf16.mxu0 0
      %424 = vmatpush1.bf16.msra.mxu0 0
      %425 = vmatprep.subr.bf16.mxu0 0
      %426 = vmatpush1.bf16.msra.mxu0 0
      %427 = vmatprep.subr.bf16.mxu0 0
      %428 = vmatpush1.bf16.msra.mxu0 0
      %429 = vmatprep.subr.bf16.mxu0 0
      %430 = vmatpush1.bf16.msra.mxu0 0
      %431 = vmatprep.subr.bf16.mxu0 0
      %432 = vmatpush1.bf16.msra.mxu0 0
      %433 = vmatprep.subr.bf16.mxu0 0
      %434 = vmatpush1.bf16.msra.mxu0 0
      %435 = vmatprep.subr.bf16.mxu0 0
      %436 = vmatpush1.bf16.msra.mxu0 0
      %437 = vmatprep.subr.bf16.mxu0 0
      %438 = vmatpush1.bf16.msra.mxu0 0
      %439 = vmatprep.subr.bf16.mxu0 0
      %440 = vmatpush1.bf16.msra.mxu0 0
      %441 = vmatprep.subr.bf16.mxu0 0
      %442 = vmatpush1.bf16.msra.mxu0 0
      %443 = vmatprep.subr.bf16.mxu0 0
      %444 = vmatpush1.bf16.msra.mxu0 0
      %445 = vmatprep.subr.bf16.mxu0 0
      %446 = vmatpush1.bf16.msra.mxu0 0
      %447 = vmatprep.mubr.bf16.mxu0 0
      %448 = vmatmul.mubr.bf16.gmra.mrb[0].mxu0 %v413
      %v449 = vpop.f32.mrb[0].mxu0
      %v450 = vadd.f32 0.0, %v449
      %v451 = vpop.f32.mrb[0].mxu0
      %v452 = vpop.f32.mrb[0].mxu0
      %v453 = vpop.f32.mrb[0].mxu0
      %454 = vdwg.mxu0
      %s455 = scalar_lea.vmem %s184, 8
      %456 = vst.msk [vmem:[%s455] sm:$0xff] %vm345, %v450
      %s457 = scalar_lea.vmem %s2, 40
      %v458 = vld [vmem:[%s457] sm:$0xf]
      %v459 = vld [vmem:[%s457 + $0x4] sm:$0xf]
      %v460 = vld [vmem:[%s457 + $0x8] sm:$0xf]
      %v461 = vld [vmem:[%s457 + $0xc] sm:$0xf]
      %v462 = vld [vmem:[%s457 + $0x10] sm:$0x1]
      %v468 = vunpack.c.l.b16 %v458
      %v469 = vunpack.c.l.b16 %v459
      %v470 = vunpack.c.l.b16 %v460
      %v471 = vunpack.c.l.b16 %v461
      %v472 = vunpack.c.l.b16 %v462
      %v473 = vpack.c.b16 %v469, %v468
      %v474 = vpack.c.b16 %v471, %v470
      %v475 = vpack.c.b16 %v472, %v472
      %v479 = vand.u32 %v475, %v254
      %481 = vmatprep.subr.bf16.mxu0 0
      %482 = vmatpush1.bf16.msra.mxu0 %v473
      %483 = vmatprep.subr.bf16.mxu0 0
      %484 = vmatpush1.bf16.msra.mxu0 %v474
      %485 = vmatprep.subr.bf16.mxu0 0
      %486 = vmatpush1.bf16.msra.mxu0 %v479
      %487 = vmatprep.subr.bf16.mxu0 0
      %488 = vmatpush1.bf16.msra.mxu0 0
      %489 = vmatprep.subr.bf16.mxu0 0
      %490 = vmatpush1.bf16.msra.mxu0 0
      %491 = vmatprep.subr.bf16.mxu0 0
      %492 = vmatpush1.bf16.msra.mxu0 0
      %493 = vmatprep.subr.bf16.mxu0 0
      %494 = vmatpush1.bf16.msra.mxu0 0
      %495 = vmatprep.subr.bf16.mxu0 0
      %496 = vmatpush1.bf16.msra.mxu0 0
      %497 = vmatprep.subr.bf16.mxu0 0
      %498 = vmatpush1.bf16.msra.mxu0 0
      %499 = vmatprep.subr.bf16.mxu0 0
      %500 = vmatpush1.bf16.msra.mxu0 0
      %501 = vmatprep.subr.bf16.mxu0 0
      %502 = vmatpush1.bf16.msra.mxu0 0
      %503 = vmatprep.subr.bf16.mxu0 0
      %504 = vmatpush1.bf16.msra.mxu0 0
      %505 = vmatprep.subr.bf16.mxu0 0
      %506 = vmatpush1.bf16.msra.mxu0 0
      %507 = vmatprep.subr.bf16.mxu0 0
      %508 = vmatpush1.bf16.msra.mxu0 0
      %509 = vmatprep.subr.bf16.mxu0 0
      %510 = vmatpush1.bf16.msra.mxu0 0
      %511 = vmatprep.subr.bf16.mxu0 0
      %512 = vmatpush1.bf16.msra.mxu0 0
      %513 = vmatprep.mubr.bf16.mxu0 0
      %514 = vmatmul.mubr.bf16.gmra.mrb[0].mxu0 %v250
      %v515 = vpop.f32.mrb[0].mxu0
      %v516 = vadd.f32 0.0, %v515
      %v517 = vpop.f32.mrb[0].mxu0
      %v518 = vpop.f32.mrb[0].mxu0
      %v519 = vpop.f32.mrb[0].mxu0
      %520 = vdwg.mxu0
      %v521 = vpack.c.bf16 %v516, %v516
      %v523 = vsel %vm248, %v521, 0
      %525 = vmatprep.subr.bf16.mxu0 0
      %526 = vmatpush1.bf16.msra.mxu0 %v225
      %527 = vmatprep.subr.bf16.mxu0 0
      %528 = vmatpush1.bf16.msra.mxu0 %v226
      %529 = vmatprep.subr.bf16.mxu0 0
      %530 = vmatpush1.bf16.msra.mxu0 %v303
      %531 = vmatprep.subr.bf16.mxu0 0
      %532 = vmatpush1.bf16.msra.mxu0 0
      %533 = vmatprep.subr.bf16.mxu0 0
      %534 = vmatpush1.bf16.msra.mxu0 0
      %535 = vmatprep.subr.bf16.mxu0 0
      %536 = vmatpush1.bf16.msra.mxu0 0
      %537 = vmatprep.subr.bf16.mxu0 0
      %538 = vmatpush1.bf16.msra.mxu0 0
      %539 = vmatprep.subr.bf16.mxu0 0
      %540 = vmatpush1.bf16.msra.mxu0 0
      %541 = vmatprep.subr.bf16.mxu0 0
      %542 = vmatpush1.bf16.msra.mxu0 0
      %543 = vmatprep.subr.bf16.mxu0 0
      %544 = vmatpush1.bf16.msra.mxu0 0
      %545 = vmatprep.subr.bf16.mxu0 0
      %546 = vmatpush1.bf16.msra.mxu0 0
      %547 = vmatprep.subr.bf16.mxu0 0
      %548 = vmatpush1.bf16.msra.mxu0 0
      %549 = vmatprep.subr.bf16.mxu0 0
      %550 = vmatpush1.bf16.msra.mxu0 0
      %551 = vmatprep.subr.bf16.mxu0 0
      %552 = vmatpush1.bf16.msra.mxu0 0
      %553 = vmatprep.subr.bf16.mxu0 0
      %554 = vmatpush1.bf16.msra.mxu0 0
      %555 = vmatprep.subr.bf16.mxu0 0
      %556 = vmatpush1.bf16.msra.mxu0 0
      %557 = vmatprep.mubr.bf16.mxu0 0
      %558 = vmatmul.mubr.bf16.gmra.mrb[0].mxu0 %v523
      %v559 = vpop.f32.mrb[0].mxu0
      %v560 = vadd.f32 0.0, %v559
      %v561 = vpop.f32.mrb[0].mxu0
      %v562 = vpop.f32.mrb[0].mxu0
      %v563 = vpop.f32.mrb[0].mxu0
      %564 = vdwg.mxu0
      %s565 = scalar_lea.vmem %s184, 16
      %566 = vst.msk [vmem:[%s565] sm:$0xff] %vm345, %v560
      %s567 = scalar_lea.vmem %s2, 60
      %v568 = vld [vmem:[%s567] sm:$0xf]
      %v569 = vld [vmem:[%s567 + $0x4] sm:$0xf]
      %v570 = vld [vmem:[%s567 + $0x8] sm:$0xf]
      %v571 = vld [vmem:[%s567 + $0xc] sm:$0xf]
      %v572 = vld [vmem:[%s567 + $0x10] sm:$0x1]
      %v578 = vunpack.c.l.b16 %v568
      %v579 = vunpack.c.l.b16 %v569
      %v580 = vunpack.c.l.b16 %v570
      %v581 = vunpack.c.l.b16 %v571
      %v582 = vunpack.c.l.b16 %v572
      %v583 = vpack.c.b16 %v579, %v578
      %v584 = vpack.c.b16 %v581, %v580
      %v585 = vpack.c.b16 %v582, %v582
      %v589 = vand.u32 %v585, %v254
      %591 = vmatprep.subr.bf16.mxu0 0
      %592 = vmatpush1.bf16.msra.mxu0 %v583
      %593 = vmatprep.subr.bf16.mxu0 0
      %594 = vmatpush1.bf16.msra.mxu0 %v584
      %595 = vmatprep.subr.bf16.mxu0 0
      %596 = vmatpush1.bf16.msra.mxu0 %v589
      %597 = vmatprep.subr.bf16.mxu0 0
      %598 = vmatpush1.bf16.msra.mxu0 0
      %599 = vmatprep.subr.bf16.mxu0 0
      %600 = vmatpush1.bf16.msra.mxu0 0
      %601 = vmatprep.subr.bf16.mxu0 0
      %602 = vmatpush1.bf16.msra.mxu0 0
      %603 = vmatprep.subr.bf16.mxu0 0
      %604 = vmatpush1.bf16.msra.mxu0 0
      %605 = vmatprep.subr.bf16.mxu0 0
      %606 = vmatpush1.bf16.msra.mxu0 0
      %607 = vmatprep.subr.bf16.mxu0 0
      %608 = vmatpush1.bf16.msra.mxu0 0
      %609 = vmatprep.subr.bf16.mxu0 0
      %610 = vmatpush1.bf16.msra.mxu0 0
      %611 = vmatprep.subr.bf16.mxu0 0
      %612 = vmatpush1.bf16.msra.mxu0 0
      %613 = vmatprep.subr.bf16.mxu0 0
      %614 = vmatpush1.bf16.msra.mxu0 0
      %615 = vmatprep.subr.bf16.mxu0 0
      %616 = vmatpush1.bf16.msra.mxu0 0
      %617 = vmatprep.subr.bf16.mxu0 0
      %618 = vmatpush1.bf16.msra.mxu0 0
      %619 = vmatprep.subr.bf16.mxu0 0
      %620 = vmatpush1.bf16.msra.mxu0 0
      %621 = vmatprep.subr.bf16.mxu0 0
      %622 = vmatpush1.bf16.msra.mxu0 0
      %623 = vmatprep.mubr.bf16.mxu0 0
      %624 = vmatmul.mubr.bf16.gmra.mrb[0].mxu0 %v250
      %v625 = vpop.f32.mrb[0].mxu0
      %v626 = vadd.f32 0.0, %v625
      %v627 = vpop.f32.mrb[0].mxu0
      %v628 = vpop.f32.mrb[0].mxu0
      %v629 = vpop.f32.mrb[0].mxu0
      %630 = vdwg.mxu0
      %v631 = vpack.c.bf16 %v626, %v626
      %v633 = vsel %vm248, %v631, 0
      %635 = vmatprep.subr.bf16.mxu0 0
      %636 = vmatpush1.bf16.msra.mxu0 %v225
      %637 = vmatprep.subr.bf16.mxu0 0
      %638 = vmatpush1.bf16.msra.mxu0 %v226
      %639 = vmatprep.subr.bf16.mxu0 0
      %640 = vmatpush1.bf16.msra.mxu0 %v303
      %641 = vmatprep.subr.bf16.mxu0 0
      %642 = vmatpush1.bf16.msra.mxu0 0
      %643 = vmatprep.subr.bf16.mxu0 0
      %644 = vmatpush1.bf16.msra.mxu0 0
      %645 = vmatprep.subr.bf16.mxu0 0
      %646 = vmatpush1.bf16.msra.mxu0 0
      %647 = vmatprep.subr.bf16.mxu0 0
      %648 = vmatpush1.bf16.msra.mxu0 0
      %649 = vmatprep.subr.bf16.mxu0 0
      %650 = vmatpush1.bf16.msra.mxu0 0
      %651 = vmatprep.subr.bf16.mxu0 0
      %652 = vmatpush1.bf16.msra.mxu0 0
      %653 = vmatprep.subr.bf16.mxu0 0
      %654 = vmatpush1.bf16.msra.mxu0 0
      %655 = vmatprep.subr.bf16.mxu0 0
      %656 = vmatpush1.bf16.msra.mxu0 0
      %657 = vmatprep.subr.bf16.mxu0 0
      %658 = vmatpush1.bf16.msra.mxu0 0
      %659 = vmatprep.subr.bf16.mxu0 0
      %660 = vmatpush1.bf16.msra.mxu0 0
      %661 = vmatprep.subr.bf16.mxu0 0
      %662 = vmatpush1.bf16.msra.mxu0 0
      %663 = vmatprep.subr.bf16.mxu0 0
      %664 = vmatpush1.bf16.msra.mxu0 0
      %665 = vmatprep.subr.bf16.mxu0 0
      %666 = vmatpush1.bf16.msra.mxu0 0
      %667 = vmatprep.mubr.bf16.mxu0 0
      %668 = vmatmul.mubr.bf16.gmra.mrb[0].mxu0 %v633
      %v669 = vpop.f32.mrb[0].mxu0
      %v670 = vadd.f32 0.0, %v669
      %v671 = vpop.f32.mrb[0].mxu0
      %v672 = vpop.f32.mrb[0].mxu0
      %v673 = vpop.f32.mrb[0].mxu0
      %674 = vdwg.mxu0
      %s675 = scalar_lea.vmem %s184, 24
      %676 = vst.msk [vmem:[%s675] sm:$0xff] %vm345, %v670
      %p677 = scmp.lt.s32.totalorder %s14, 1
      %s678 = scalar_select %p677, %s14, 1
      %s679 = smul.addr %s678, 4
      %s680 = smul.addr %s679, 8
      %s681 = scalar_lea.vmem %s3, %s680
      // Predicated region
      $region33: #{res_biaffine_forward.7} parent=31 // pred_check
        %p682 = pneg %p105
      $region34: #{res_biaffine_forward.7} parent=31 // pred_check_branch
        %684 = sbr.rel (%p682) target = $region36
      $region35: #{res_biaffine_forward.7} parent=31 // pred_region
        _
      $region36: #{res_biaffine_forward.7} parent=31 // pred_fallthru
        _
    $region32: #{res_biaffine_forward.7} parent=5 // pred_fallthru
      _
    %p685 = scmp.le.s32.totalorder 2, %s9
    // Predicated region
    $region37: #{res_biaffine_forward.7} parent=5 // pred_check
      %p686 = pneg %p685
    $region38: #{res_biaffine_forward.7} parent=5 // pred_check_branch
      %688 = sbr.rel (%p686) target = $region40
    $region39: #{res_biaffine_forward.7} parent=5 // pred_region
      %s689 = ssub.s32 %s9, 2
      // Predicated region
      $region41: #{res_biaffine_forward.7} parent=39 // pred_check
        %p690 = pneg %p111
      $region42: #{res_biaffine_forward.7} parent=39 // pred_check_branch
        %692 = sbr.rel (%p690) target = $region44
      $region43: #{res_biaffine_forward.7} parent=39 // pred_region
        %p693 = scmp.lt.s32.totalorder %s15, 1
        %s694 = scalar_select %p693, %s15, 1
        %s695 = smul.addr %s694, 4
        %s696 = smul.addr %s695, 8
        %s697 = scalar_lea.vmem %s3, %s696
      $region44: #{res_biaffine_forward.7} parent=39 // pred_fallthru
        _
    $region40: #{res_biaffine_forward.7} parent=5 // pred_fallthru
      _
  $region6: #{res_biaffine_forward.7} parent=0 // loop_footer
    %s13 = sadd.s32 1, %s9
  $region7: #{res_biaffine_forward.7} parent=0 // loop_footer_branch
    %8 = sbr.rel target = $region3
  $region8: #{res_biaffine_forward.7} parent=0 // loop_exit
    _

// kernel: res_biaffine_forward.8
$region0: #{res_biaffine_forward.8}
  #allocation0 [shape = 'u32[]', space=smem, size = 0x4, offset = 0x4, fixed_abs, tag = 'smem constant byte address 0x4 - core index']
  #allocation1 [shape = 'u32[144,128]{1,0:T(1,128)}', space=vmem, size = 0x12000, scoped, tag = 'internal scratch']
  %s0 = inlined_call_operand.vmem [shape: f32[2,4,64], index: 0, kind: input, shape index: {}, may-alias: {0,11}]
  %s1 = inlined_call_operand.vmem [shape: bf16[2,16,64], index: 1, kind: input, shape index: {}]
  %s2 = inlined_call_operand.vmem [shape: f32[2,1,64], index: 2, kind: input, shape index: {}]
  %s3 = inlined_call_operand.vmem [shape: f32[4,64], index: 3, kind: input, shape index: {}]
  %s4 = inlined_call_operand.vmem [shape: bf16[16,16], index: 4, kind: input, shape index: {}]
  %s5 = inlined_call_operand.vmem [shape: bf16[16,4], index: 5, kind: input, shape index: {}]
  %s6 = inlined_call_operand.vmem [shape: f32[16,1], index: 6, kind: input, shape index: {}]
  %s7 = inlined_call_operand.vmem [shape: bf16[3,3,16,16], index: 7, kind: input, shape index: {}]
  %s8 = inlined_call_operand.vmem [shape: f32[16,1], index: 8, kind: input, shape index: {}]
  %s9 = inlined_call_operand.vmem [shape: bf16[4,16], index: 9, kind: input, shape index: {}]
  %s10 = inlined_call_operand.vmem [shape: f32[4,1], index: 10, kind: input, shape index: {}]
  %s11 = inlined_call_operand.vmem [shape: f32[2,4,64], index: 11, kind: output, shape index: {}, may-alias: {0,11}]
  %s12 = sld [smem:[#allocation0]]
  $region77: #{res_biaffine_forward.8} parent=0
    _
  %s14 = ssub.s32 1, %s12
  %s15 = scalar_select 0, %s14, %s12
  loop: start=0, step=1, limit=4
  $region2: #{res_biaffine_forward.8} parent=0 // loop_pre_header
    _
  $region3: #{res_biaffine_forward.8} parent=0 // loop_header
    %s17 = sphi 0, %s21
    %p18 = scmp.ge.s32.totalorder %s17, 4
    %s27 = sphi 0, %s29
    %s30 = sphi 0, %s27
    %s31 = sphi 0, %s30
    %s47 = sphi 0, %s31
    %s53 = sphi 0, %s55
    %s56 = sphi 0, %s53
    %s57 = sphi 0, %s56
    %s73 = sphi 0, %s57
    %s79 = sphi 0, %s81
    %s82 = sphi 0, %s79
    %s83 = sphi 0, %s82
    %s99 = sphi 0, %s83
    %s103 = sphi 0, %s103
    %s105 = sphi 0, %s103
    %s106 = sphi 0, %s105
    %s120 = sphi 0, %s106
    %s124 = sphi 0, %s124
    %s126 = sphi 0, %s124
    %s127 = sphi 0, %s126
    %s141 = sphi 0, %s127
    %s145 = sphi 0, %s145
    %s147 = sphi 0, %s145
    %s148 = sphi 0, %s147
    %s162 = sphi 0, %s148
    %s166 = sphi 0, %s166
    %s168 = sphi 0, %s166
    %s169 = sphi 0, %s168
    %s183 = sphi 0, %s169
    %s187 = sphi 0, %s187
    %s189 = sphi 0, %s187
    %s190 = sphi 0, %s189
    %s204 = sphi 0, %s190
    %s208 = sphi 0, %s208
    %s210 = sphi 0, %s208
    %s211 = sphi 0, %s210
    %s225 = sphi 0, %s211
    %s229 = sphi 0, %s229
    %s231 = sphi 0, %s229
    %s232 = sphi 0, %s231
    %s246 = sphi 0, %s232
    %s250 = sphi 0, %s250
    %s252 = sphi 0, %s250
    %s253 = sphi 0, %s252
    %s267 = sphi 0, %s253
    %s273 = sphi 0, %s275
    %s276 = sphi 0, %s273
    %s277 = sphi 0, %s276
    %s293 = sphi 0, %s277
  $region4: #{res_biaffine_forward.8} parent=0 // loop_header_branch
    %20 = sbr.rel (%p18) target = $region8
  $region5: #{res_biaffine_forward.8} parent=0 // loop_body
    %s22 = ssub.s32 %s17, 1
    %s23 = ssub.s32 %s17, 2
    %s24 = sadd.s32 %s17, 1
    %s25 = ssub.s32 %s17, %s24
    %p26 = scmp.eq.s32.totalorder %s25, 0
    %s28 = sadd.s32 %s27, 1
    %s29 = scalar_select %p26, %s27, %s28
    %p32 = pneg %p26
    %p33 = scmp.eq.s32.totalorder %s17, 1
    %p34 = por %p32, %p33
    %p35 = scmp.ne.s32.totalorder %s27, %s30
    %p36 = scmp.eq.s32.totalorder %s17, 0
    %p37 = por %p35, %p36
    %p38 = scmp.ne.s32.totalorder %s27, %s30
    %p39 = scmp.eq.s32.totalorder %s22, 1
    %p40 = por %p38, %p39
    %p41 = scmp.ne.s32.totalorder %s30, %s31
    %p42 = scmp.eq.s32.totalorder %s22, 0
    %p43 = por %p41, %p42
    %p44 = scmp.ne.s32.totalorder %s30, %s31
    %p45 = scmp.eq.s32.totalorder %s23, 1
    %p46 = por %p44, %p45
    %p48 = scmp.ne.s32.totalorder %s31, %s47
    %p49 = scmp.eq.s32.totalorder %s23, 0
    %p50 = por %p48, %p49
    %s51 = ssub.s32 %s17, %s24
    %p52 = scmp.eq.s32.totalorder %s51, 0
    %s54 = sadd.s32 %s53, 1
    %s55 = scalar_select %p52, %s53, %s54
    %p58 = pneg %p52
    %p59 = scmp.eq.s32.totalorder %s17, 1
    %p60 = por %p58, %p59
    %p61 = scmp.ne.s32.totalorder %s53, %s56
    %p62 = scmp.eq.s32.totalorder %s17, 0
    %p63 = por %p61, %p62
    %p64 = scmp.ne.s32.totalorder %s53, %s56
    %p65 = scmp.eq.s32.totalorder %s22, 1
    %p66 = por %p64, %p65
    %p67 = scmp.ne.s32.totalorder %s56, %s57
    %p68 = scmp.eq.s32.totalorder %s22, 0
    %p69 = por %p67, %p68
    %p70 = scmp.ne.s32.totalorder %s56, %s57
    %p71 = scmp.eq.s32.totalorder %s23, 1
    %p72 = por %p70, %p71
    %p74 = scmp.ne.s32.totalorder %s57, %s73
    %p75 = scmp.eq.s32.totalorder %s23, 0
    %p76 = por %p74, %p75
    %s77 = ssub.s32 %s17, %s24
    %p78 = scmp.eq.s32.totalorder %s77, 0
    %s80 = sadd.s32 %s79, 1
    %s81 = scalar_select %p78, %s79, %s80
    %p84 = pneg %p78
    %p85 = scmp.eq.s32.totalorder %s17, 1
    %p86 = por %p84, %p85
    %p87 = scmp.ne.s32.totalorder %s79, %s82
    %p88 = scmp.eq.s32.totalorder %s17, 0
    %p89 = por %p87, %p88
    %p90 = scmp.ne.s32.totalorder %s79, %s82
    %p91 = scmp.eq.s32.totalorder %s22, 1
    %p92 = por %p90, %p91
    %p93 = scmp.ne.s32.totalorder %s82, %s83
    %p94 = scmp.eq.s32.totalorder %s22, 0
    %p95 = por %p93, %p94
    %p96 = scmp.ne.s32.totalorder %s82, %s83
    %p97 = scmp.eq.s32.totalorder %s23, 1
    %p98 = por %p96, %p97
    %p100 = scmp.ne.s32.totalorder %s83, %s99
    %p101 = scmp.eq.s32.totalorder %s23, 0
    %p102 = por %p100, %p101
    %s104 = sadd.s32 %s103, 1
    %p107 = scmp.eq.s32.totalorder %s17, 1
    %p108 = scmp.ne.s32.totalorder %s103, %s105
    %p109 = scmp.eq.s32.totalorder %s17, 0
    %p110 = por %p108, %p109
    %p111 = scmp.ne.s32.totalorder %s103, %s105
    %p112 = scmp.eq.s32.totalorder %s22, 1
    %p113 = por %p111, %p112
    %p114 = scmp.ne.s32.totalorder %s105, %s106
    %p115 = scmp.eq.s32.totalorder %s22, 0
    %p116 = por %p114, %p115
    %p117 = scmp.ne.s32.totalorder %s105, %s106
    %p118 = scmp.eq.s32.totalorder %s23, 1
    %p119 = por %p117, %p118
    %p121 = scmp.ne.s32.totalorder %s106, %s120
    %p122 = scmp.eq.s32.totalorder %s23, 0
    %p123 = por %p121, %p122
    %s125 = sadd.s32 %s124, 1
    %p128 = scmp.eq.s32.totalorder %s17, 1
    %p129 = scmp.ne.s32.totalorder %s124, %s126
    %p130 = scmp.eq.s32.totalorder %s17, 0
    %p131 = por %p129, %p130
    %p132 = scmp.ne.s32.totalorder %s124, %s126
    %p133 = scmp.eq.s32.totalorder %s22, 1
    %p134 = por %p132, %p133
    %p135 = scmp.ne.s32.totalorder %s126, %s127
    %p136 = scmp.eq.s32.totalorder %s22, 0
    %p137 = por %p135, %p136
    %p138 = scmp.ne.s32.totalorder %s126, %s127
    %p139 = scmp.eq.s32.totalorder %s23, 1
    %p140 = por %p138, %p139
    %p142 = scmp.ne.s32.totalorder %s127, %s141
    %p143 = scmp.eq.s32.totalorder %s23, 0
    %p144 = por %p142, %p143
    %s146 = sadd.s32 %s145, 1
    %p149 = scmp.eq.s32.totalorder %s17, 1
    %p150 = scmp.ne.s32.totalorder %s145, %s147
    %p151 = scmp.eq.s32.totalorder %s17, 0
    %p152 = por %p150, %p151
    %p153 = scmp.ne.s32.totalorder %s145, %s147
    %p154 = scmp.eq.s32.totalorder %s22, 1
    %p155 = por %p153, %p154
    %p156 = scmp.ne.s32.totalorder %s147, %s148
    %p157 = scmp.eq.s32.totalorder %s22, 0
    %p158 = por %p156, %p157
    %p159 = scmp.ne.s32.totalorder %s147, %s148
    %p160 = scmp.eq.s32.totalorder %s23, 1
    %p161 = por %p159, %p160
    %p163 = scmp.ne.s32.totalorder %s148, %s162
    %p164 = scmp.eq.s32.totalorder %s23, 0
    %p165 = por %p163, %p164
    %s167 = sadd.s32 %s166, 1
    %p170 = scmp.eq.s32.totalorder %s17, 1
    %p171 = scmp.ne.s32.totalorder %s166, %s168
    %p172 = scmp.eq.s32.totalorder %s17, 0
    %p173 = por %p171, %p172
    %p174 = scmp.ne.s32.totalorder %s166, %s168
    %p175 = scmp.eq.s32.totalorder %s22, 1
    %p176 = por %p174, %p175
    %p177 = scmp.ne.s32.totalorder %s168, %s169
    %p178 = scmp.eq.s32.totalorder %s22, 0
    %p179 = por %p177, %p178
    %p180 = scmp.ne.s32.totalorder %s168, %s169
    %p181 = scmp.eq.s32.totalorder %s23, 1
    %p182 = por %p180, %p181
    %p184 = scmp.ne.s32.totalorder %s169, %s183
    %p185 = scmp.eq.s32.totalorder %s23, 0
    %p186 = por %p184, %p185
    %s188 = sadd.s32 %s187, 1
    %p191 = scmp.eq.s32.totalorder %s17, 1
    %p192 = scmp.ne.s32.totalorder %s187, %s189
    %p193 = scmp.eq.s32.totalorder %s17, 0
    %p194 = por %p192, %p193
    %p195 = scmp.ne.s32.totalorder %s187, %s189
    %p196 = scmp.eq.s32.totalorder %s22, 1
    %p197 = por %p195, %p196
    %p198 = scmp.ne.s32.totalorder %s189, %s190
    %p199 = scmp.eq.s32.totalorder %s22, 0
    %p200 = por %p198, %p199
    %p201 = scmp.ne.s32.totalorder %s189, %s190
    %p202 = scmp.eq.s32.totalorder %s23, 1
    %p203 = por %p201, %p202
    %p205 = scmp.ne.s32.totalorder %s190, %s204
    %p206 = scmp.eq.s32.totalorder %s23, 0
    %p207 = por %p205, %p206
    %s209 = sadd.s32 %s208, 1
    %p212 = scmp.eq.s32.totalorder %s17, 1
    %p213 = scmp.ne.s32.totalorder %s208, %s210
    %p214 = scmp.eq.s32.totalorder %s17, 0
    %p215 = por %p213, %p214
    %p216 = scmp.ne.s32.totalorder %s208, %s210
    %p217 = scmp.eq.s32.totalorder %s22, 1
    %p218 = por %p216, %p217
    %p219 = scmp.ne.s32.totalorder %s210, %s211
    %p220 = scmp.eq.s32.totalorder %s22, 0
    %p221 = por %p219, %p220
    %p222 = scmp.ne.s32.totalorder %s210, %s211
    %p223 = scmp.eq.s32.totalorder %s23, 1
    %p224 = por %p222, %p223
    %p226 = scmp.ne.s32.totalorder %s211, %s225
    %p227 = scmp.eq.s32.totalorder %s23, 0
    %p228 = por %p226, %p227
    %s230 = sadd.s32 %s229, 1
    %p233 = scmp.eq.s32.totalorder %s17, 1
    %p234 = scmp.ne.s32.totalorder %s229, %s231
    %p235 = scmp.eq.s32.totalorder %s17, 0
    %p236 = por %p234, %p235
    %p237 = scmp.ne.s32.totalorder %s229, %s231
    %p238 = scmp.eq.s32.totalorder %s22, 1
    %p239 = por %p237, %p238
    %p240 = scmp.ne.s32.totalorder %s231, %s232
    %p241 = scmp.eq.s32.totalorder %s22, 0
    %p242 = por %p240, %p241
    %p243 = scmp.ne.s32.totalorder %s231, %s232
    %p244 = scmp.eq.s32.totalorder %s23, 1
    %p245 = por %p243, %p244
    %p247 = scmp.ne.s32.totalorder %s232, %s246
    %p248 = scmp.eq.s32.totalorder %s23, 0
    %p249 = por %p247, %p248
    %s251 = sadd.s32 %s250, 1
    %p254 = scmp.eq.s32.totalorder %s17, 1
    %p255 = scmp.ne.s32.totalorder %s250, %s252
    %p256 = scmp.eq.s32.totalorder %s17, 0
    %p257 = por %p255, %p256
    %p258 = scmp.ne.s32.totalorder %s250, %s252
    %p259 = scmp.eq.s32.totalorder %s22, 1
    %p260 = por %p258, %p259
    %p261 = scmp.ne.s32.totalorder %s252, %s253
    %p262 = scmp.eq.s32.totalorder %s22, 0
    %p263 = por %p261, %p262
    %p264 = scmp.ne.s32.totalorder %s252, %s253
    %p265 = scmp.eq.s32.totalorder %s23, 1
    %p266 = por %p264, %p265
    %p268 = scmp.ne.s32.totalorder %s253, %s267
    %p269 = scmp.eq.s32.totalorder %s23, 0
    %p270 = por %p268, %p269
    %s271 = ssub.s32 %s17, %s24
    %p272 = scmp.eq.s32.totalorder %s271, 0
    %s274 = sadd.s32 %s273, 1
    %s275 = scalar_select %p272, %s273, %s274
    %p278 = pneg %p272
    %p279 = scmp.eq.s32.totalorder %s17, 1
    %p280 = por %p278, %p279
    %p281 = scmp.ne.s32.totalorder %s273, %s276
    %p282 = scmp.eq.s32.totalorder %s17, 0
    %p283 = por %p281, %p282
    %p284 = scmp.ne.s32.totalorder %s273, %s276
    %p285 = scmp.eq.s32.totalorder %s22, 1
    %p286 = por %p284, %p285
    %p287 = scmp.ne.s32.totalorder %s276, %s277
    %p288 = scmp.eq.s32.totalorder %s22, 0
    %p289 = por %p287, %p288
    %p290 = scmp.ne.s32.totalorder %s276, %s277
    %p291 = scmp.eq.s32.totalorder %s23, 1
    %p292 = por %p290, %p291
    %p294 = scmp.ne.s32.totalorder %s277, %s293
    %p295 = scmp.eq.s32.totalorder %s23, 0
    %p296 = por %p294, %p295
    %p297 = scmp.le.s32.totalorder 1, %s17
    %p298 = scmp.lt.s32.totalorder %s17, 3
    %p299 = pnand %p297, %p298
    %p300 = pneg %p299
    // Predicated region
    $region9: #{res_biaffine_forward.8} parent=5 // pred_check
      _
    $region10: #{res_biaffine_forward.8} parent=5 // pred_check_branch
      %302 = sbr.rel (%p299) target = $region12
    $region11: #{res_biaffine_forward.8} parent=5 // pred_region
      %s303 = ssub.s32 %s17, 1
      // Predicated region
      $region13: #{res_biaffine_forward.8} parent=11 // pred_check
        %p304 = pneg %p116
      $region14: #{res_biaffine_forward.8} parent=11 // pred_check_branch
        %306 = sbr.rel (%p304) target = $region16
      $region15: #{res_biaffine_forward.8} parent=11 // pred_region
        _
      $region16: #{res_biaffine_forward.8} parent=11 // pred_fallthru
        _
      // Predicated region
      $region17: #{res_biaffine_forward.8} parent=11 // pred_check
        %p307 = pneg %p137
      $region18: #{res_biaffine_forward.8} parent=11 // pred_check_branch
        %309 = sbr.rel (%p307) target = $region20
      $region19: #{res_biaffine_forward.8} parent=11 // pred_region
        _
      $region20: #{res_biaffine_forward.8} parent=11 // pred_fallthru
        _
      // Predicated region
      $region21: #{res_biaffine_forward.8} parent=11 // pred_check
        %p310 = pneg %p158
      $region22: #{res_biaffine_forward.8} parent=11 // pred_check_branch
        %312 = sbr.rel (%p310) target = $region24
      $region23: #{res_biaffine_forward.8} parent=11 // pred_region
        _
      $region24: #{res_biaffine_forward.8} parent=11 // pred_fallthru
        _
      // Predicated region
      $region25: #{res_biaffine_forward.8} parent=11 // pred_check
        %p313 = pneg %p179
      $region26: #{res_biaffine_forward.8} parent=11 // pred_check_branch
        %315 = sbr.rel (%p313) target = $region28
      $region27: #{res_biaffine_forward.8} parent=11 // pred_region
        _
      $region28: #{res_biaffine_forward.8} parent=11 // pred_fallthru
        _
      // Predicated region
      $region29: #{res_biaffine_forward.8} parent=11 // pred_check
        %p316 = pneg %p200
      $region30: #{res_biaffine_forward.8} parent=11 // pred_check_branch
        %318 = sbr.rel (%p316) target = $region32
      $region31: #{res_biaffine_forward.8} parent=11 // pred_region
        _
      $region32: #{res_biaffine_forward.8} parent=11 // pred_fallthru
        _
      // Predicated region
      $region33: #{res_biaffine_forward.8} parent=11 // pred_check
        %p319 = pneg %p221
      $region34: #{res_biaffine_forward.8} parent=11 // pred_check_branch
        %321 = sbr.rel (%p319) target = $region36
      $region35: #{res_biaffine_forward.8} parent=11 // pred_region
        _
      $region36: #{res_biaffine_forward.8} parent=11 // pred_fallthru
        _
      // Predicated region
      $region37: #{res_biaffine_forward.8} parent=11 // pred_check
        %p322 = pneg %p242
      $region38: #{res_biaffine_forward.8} parent=11 // pred_check_branch
        %324 = sbr.rel (%p322) target = $region40
      $region39: #{res_biaffine_forward.8} parent=11 // pred_region
        _
      $region40: #{res_biaffine_forward.8} parent=11 // pred_fallthru
        _
      // Predicated region
      $region41: #{res_biaffine_forward.8} parent=11 // pred_check
        %p325 = pneg %p263
      $region42: #{res_biaffine_forward.8} parent=11 // pred_check_branch
        %327 = sbr.rel (%p325) target = $region44
      $region43: #{res_biaffine_forward.8} parent=11 // pred_region
        _
      $region44: #{res_biaffine_forward.8} parent=11 // pred_fallthru
        _
    $region12: #{res_biaffine_forward.8} parent=5 // pred_fallthru
      _
    %p328 = scmp.lt.s32.totalorder %s17, 2
    // Predicated region
    $region45: #{res_biaffine_forward.8} parent=5 // pred_check
      %p329 = pneg %p328
    $region46: #{res_biaffine_forward.8} parent=5 // pred_check_branch
      %331 = sbr.rel (%p329) target = $region48
    $region47: #{res_biaffine_forward.8} parent=5 // pred_region
      // Predicated region
      $region49: #{res_biaffine_forward.8} parent=47 // pred_check
        %p332 = pneg %p37
      $region50: #{res_biaffine_forward.8} parent=47 // pred_check_branch
        %334 = sbr.rel (%p332) target = $region52
      $region51: #{res_biaffine_forward.8} parent=47 // pred_region
        %p335 = scmp.lt.s32.totalorder %s17, 1
        %s336 = scalar_select %p335, %s17, 1
        %s337 = smul.addr %s336, 4
        %s338 = scalar_lea.vmem %s0, %s337
      $region52: #{res_biaffine_forward.8} parent=47 // pred_fallthru
        _
      // Predicated region
      $region53: #{res_biaffine_forward.8} parent=47 // pred_check
        %p339 = pneg %p63
      $region54: #{res_biaffine_forward.8} parent=47 // pred_check_branch
        %341 = sbr.rel (%p339) target = $region56
      $region55: #{res_biaffine_forward.8} parent=47 // pred_region
        %p342 = scmp.lt.s32.totalorder %s17, 1
        %s343 = scalar_select %p342, %s17, 1
        %s344 = smul.addr %s343, 2
        %s345 = smul.addr %s344, 4
        %s346 = scalar_lea.vmem %s1, %s345
      $region56: #{res_biaffine_forward.8} parent=47 // pred_fallthru
        _
      // Predicated region
      $region57: #{res_biaffine_forward.8} parent=47 // pred_check
        %p347 = pneg %p89
      $region58: #{res_biaffine_forward.8} parent=47 // pred_check_branch
        %349 = sbr.rel (%p347) target = $region60
      $region59: #{res_biaffine_forward.8} parent=47 // pred_region
        %p350 = scmp.lt.s32.totalorder %s17, 1
        %s351 = scalar_select %p350, %s17, 1
        %s352 = scalar_lea.vmem %s2, %s351
      $region60: #{res_biaffine_forward.8} parent=47 // pred_fallthru
        _
    $region48: #{res_biaffine_forward.8} parent=5 // pred_fallthru
      _
    %p353 = scmp.le.s32.totalorder 1, %s17
    %p354 = scmp.lt.s32.totalorder %s17, 3
    %p355 = pnand %p353, %p354
    %p356 = pneg %p355
    // Predicated region
    $region61: #{res_biaffine_forward.8} parent=5 // pred_check
      _
    $region62: #{res_biaffine_forward.8} parent=5 // pred_check_branch
      %358 = sbr.rel (%p355) target = $region64
    $region63: #{res_biaffine_forward.8} parent=5 // pred_region
      %s359 = ssub.s32 %s17, 1
      %p360 = scmp.lt.s32.totalorder %s22, 1
      %s361 = scalar_select %p360, %s22, 1
      %s362 = smul.addr %s361, 4
      %s363 = scalar_lea.vmem %s0, %s362
      %p364 = pneg %p43
      %p365 = pneg %p40
      %p366 = scmp.lt.s32.totalorder %s22, 1
      %s367 = scalar_select %p366, %s22, 1
      %s368 = smul.addr %s367, 2
      %s369 = smul.addr %s368, 4
      %s370 = scalar_lea.vmem %s1, %s369
      %p371 = pneg %p69
      %p372 = pneg %p66
      %p373 = scmp.lt.s32.totalorder %s22, 1
      %s374 = scalar_select %p373, %s22, 1
      %s375 = scalar_lea.vmem %s2, %s374
      %p376 = pneg %p95
      %p377 = pneg %p92
      %p378 = pneg %p116
      %p379 = pneg %p113
      %p380 = pneg %p137
      %p381 = pneg %p134
      %p382 = pneg %p158
      %p383 = pneg %p155
      %p384 = pneg %p179
      %p385 = pneg %p176
      %p386 = pneg %p200
      %p387 = pneg %p197
      %p388 = pneg %p221
      %p389 = pneg %p218
      %p390 = pneg %p242
      %p391 = pneg %p239
      %p392 = pneg %p263
      %p393 = pneg %p260
      %p394 = pneg %p289
      %p395 = pneg %p286
      %p396 = scmp.lt.s32.totalorder %s22, 1
      %s397 = scalar_select %p396, %s22, 1
      %s398 = smul.addr %s397, 4
      %s399 = scalar_lea.vmem %s11, %s398
      %p400 = scmp.lt.s32.totalorder %s22, 1
      %s401 = scalar_select %p400, %s22, 1
      %s402 = smul.addr %s401, 4
      %s403 = scalar_lea.vmem %s0, %s402
      %p404 = scmp.lt.s32.totalorder %s22, 1
      %s405 = scalar_select %p404, %s22, 1
      %s406 = smul.addr %s405, 2
      %s407 = smul.addr %s406, 4
      %s408 = scalar_lea.vmem %s1, %s407
      %p409 = scmp.lt.s32.totalorder %s22, 1
      %s410 = scalar_select %p409, %s22, 1
      %s411 = scalar_lea.vmem %s2, %s410
      %p412 = scmp.lt.s32.totalorder %s22, 1
      %s413 = scalar_select %p412, %s22, 1
      %s414 = smul.addr %s413, 4
      %s415 = scalar_lea.vmem %s11, %s414
      %v417 = vld [vmem:[%s403] sm:$0xf]
      %v418 = vld [vmem:[%s4] sm:$0xf]
      %v419 = vld [vmem:[%s4 + $0x4] sm:$0xf]
      %v420 = vld [vmem:[%s408] sm:$0xf]
      %v421 = vld [vmem:[%s408 + $0x4] sm:$0xf]
      %v422 = vld [vmem:[%s5] sm:$0xf]
      %v423 = vld [vmem:[%s5 + $0x4] sm:$0xf]
      %v424 = vpack.c.bf16 %v417, %v417
      %v427 = vunpack.c.l.b16 %v422
      %v428 = vunpack.c.l.b16 %v423
      %v429 = vpack.c.b16 %v428, %v427
      %vm430 = vcmask 31744
      %v432 = vsel %vm430, %v429, 0
      %vm434 = vcmask 1041408
      %v436 = vsel %vm434, %v424, 0
      %438 = vmatprep.subr.bf16.mxu0 0
      %439 = vmatpush1.bf16.msra.mxu0 %v436
      %440 = vmatprep.subr.bf16.mxu0 0
      %441 = vmatpush1.bf16.msra.mxu0 0
      %442 = vmatprep.subr.bf16.mxu0 0
      %443 = vmatpush1.bf16.msra.mxu0 0
      %444 = vmatprep.subr.bf16.mxu0 0
      %445 = vmatpush1.bf16.msra.mxu0 0
      %446 = vmatprep.subr.bf16.mxu0 0
      %447 = vmatpush1.bf16.msra.mxu0 0
      %448 = vmatprep.subr.bf16.mxu0 0
      %449 = vmatpush1.bf16.msra.mxu0 0
      %450 = vmatprep.subr.bf16.mxu0 0
      %451 = vmatpush1.bf16.msra.mxu0 0
      %452 = vmatprep.subr.bf16.mxu0 0
      %453 = vmatpush1.bf16.msra.mxu0 0
      %454 = vmatprep.subr.bf16.mxu0 0
      %455 = vmatpush1.bf16.msra.mxu0 0
      %456 = vmatprep.subr.bf16.mxu0 0
      %457 = vmatpush1.bf16.msra.mxu0 0
      %458 = vmatprep.subr.bf16.mxu0 0
      %459 = vmatpush1.bf16.msra.mxu0 0
      %460 = vmatprep.subr.bf16.mxu0 0
      %461 = vmatpush1.bf16.msra.mxu0 0
      %462 = vmatprep.subr.bf16.mxu0 0
      %463 = vmatpush1.bf16.msra.mxu0 0
      %464 = vmatprep.subr.bf16.mxu0 0
      %465 = vmatpush1.bf16.msra.mxu0 0
      %466 = vmatprep.subr.bf16.mxu0 0
      %467 = vmatpush1.bf16.msra.mxu0 0
      %468 = vmatprep.subr.bf16.mxu0 0
      %469 = vmatpush1.bf16.msra.mxu0 0
      %470 = vmatprep.mubr.bf16.mxu0 0
      %471 = vmatmul.mubr.bf16.gmra.mrb[0].mxu0 %v432
      %v472 = vpop.f32.mrb[0].mxu0
      %v473 = vadd.f32 0.0, %v472
      %v474 = vpop.f32.mrb[0].mxu0
      %v475 = vpop.f32.mrb[0].mxu0
      %v476 = vadd.f32 0.0, %v475
      %v477 = vpop.f32.mrb[0].mxu0
      %478 = vdwg.mxu0
      %v481 = vunpack.c.l.b16 %v418
      %v482 = vunpack.c.l.b16 %v419
      %v483 = vpack.c.b16 %v482, %v481
      %v486 = vunpack.c.l.b16 %v420
      %v487 = vunpack.c.l.b16 %v421
      %v488 = vpack.c.b16 %v487, %v486
      %vm490 = vcmask 130048
      %v492 = vsel %vm490, %v483, 0
      %494 = vmatprep.subr.bf16.mxu0 0
      %495 = vmatpush1.bf16.msra.mxu0 %v488
      %496 = vmatprep.subr.bf16.mxu0 0
      %497 = vmatpush1.bf16.msra.mxu0 0
      %498 = vmatprep.subr.bf16.mxu0 0
      %499 = vmatpush1.bf16.msra.mxu0 0
      %500 = vmatprep.subr.bf16.mxu0 0
      %501 = vmatpush1.bf16.msra.mxu0 0
      %502 = vmatprep.subr.bf16.mxu0 0
      %503 = vmatpush1.bf16.msra.mxu0 0
      %504 = vmatprep.subr.bf16.mxu0 0
      %505 = vmatpush1.bf16.msra.mxu0 0
      %506 = vmatprep.subr.bf16.mxu0 0
      %507 = vmatpush1.bf16.msra.mxu0 0
      %508 = vmatprep.subr.bf16.mxu0 0
      %509 = vmatpush1.bf16.msra.mxu0 0
      %510 = vmatprep.subr.bf16.mxu0 0
      %511 = vmatpush1.bf16.msra.mxu0 0
      %512 = vmatprep.subr.bf16.mxu0 0
      %513 = vmatpush1.bf16.msra.mxu0 0
      %514 = vmatprep.subr.bf16.mxu0 0
      %515 = vmatpush1.bf16.msra.mxu0 0
      %516 = vmatprep.subr.bf16.mxu0 0
      %517 = vmatpush1.bf16.msra.mxu0 0
      %518 = vmatprep.subr.bf16.mxu0 0
      %519 = vmatpush1.bf16.msra.mxu0 0
      %520 = vmatprep.subr.bf16.mxu0 0
      %521 = vmatpush1.bf16.msra.mxu0 0
      %522 = vmatprep.subr.bf16.mxu0 0
      %523 = vmatpush1.bf16.msra.mxu0 0
      %524 = vmatprep.subr.bf16.mxu0 0
      %525 = vmatpush1.bf16.msra.mxu0 0
      %526 = vmatprep.mubr.bf16.mxu0 0
      %527 = vmatmul.mubr.bf16.gmra.mrb[0].mxu0 %v492
      %v528 = vpop.f32.mrb[0].mxu0
      %v529 = vadd.f32 %v473, %v528
      %v530 = vpop.f32.mrb[0].mxu0
      %v531 = vpop.f32.mrb[0].mxu0
      %v532 = vadd.f32 %v476, %v531
      %v533 = vpop.f32.mrb[0].mxu0
      %534 = vdwg.mxu0
      %v535 = vld [vmem:[%s411] sm:$0x1]
      %v537 = vlaneseq
      %v538 = vshrl.u32 %v537, 7
      %v539 = vsub.s32 0, %v538
      %v540 = vrot.slane %v535, %v539
      %v542 = vmul.f32 %v529, %v540
      %v543 = vmul.f32 %v532, %v540
      %v544 = vld [vmem:[%s6] sm:$0xff]
      %v545 = vld [vmem:[%s6 + $0x8] sm:$0xff]
      %547 = vset.pattern.permute.xlu0 0
      %548 = vperm.xlu0 %547, %v544
      %v549 = vpop.permute.xlu0 %548
      %552 = vset.pattern.permute.xlu0 0
      %553 = vperm.xlu0 %552, %v545
      %v554 = vpop.permute.xlu0 %553
      %v556 = vadd.f32 %v542, %v549
      %v557 = vadd.f32 %v543, %v554
      %v558 = vmul.f32 %v556, 0.5
      %v559 = vmul.f32 %v557, 0.5
      %v560 = vmul.f32 %v556, 0.70710677
      %v561 = vmul.f32 %v557, 0.70710677
      %v562 = verf.f32.pop %v560
      %v563 = verf.f32.pop %v561
      %v564 = vadd.f32 %v562, 1.0
      %v565 = vadd.f32 %v563, 1.0
      %v566 = vmul.f32 %v558, %v564
      %v567 = vmul.f32 %v559, %v565
      %v568 = vld [vmem:[%s3] sm:$0xf]
      %571 = vrot.lane.b32.xlu0 %v566, 73
      %v572 = vpop.permute.xlu0 %571
      %573 = vrot.lane.b32.xlu0 %v567, 73
      %v574 = vpop.permute.xlu0 %573
      %577 = vrot.lane.b32.xlu0 %v566, 9
      %v578 = vpop.permute.xlu0 %577
      %579 = vrot.lane.b32.xlu0 %v567, 9
      %v580 = vpop.permute.xlu0 %579
      %vm583 = vcmask 72704
      %v584 = vsel %vm583, %v572, %v578
      %v585 = vsel %vm583, %v574, %v580
      %v587 = vrot.slane %v568, 2
      %v589 = vmul.f32 %v568, %v587
      %v590 = vlaneseq
      %v591 = vshrl.u32 %v590, 7
      %v592 = vsub.s32 0, %v591
      %v593 = vrot.slane %v589, %v592
      %v594 = vmul.f32 %v584, %v593
      %v595 = vmul.f32 %v585, %v593
      %v596 = vld [vmem:[%s7] sm:$0xf]
      %v597 = vld [vmem:[%s7 + $0x4] sm:$0xf]
      %v598 = vpack.c.bf16 %v595, %v594
      %599 = vrot.lane.b32.xlu0 %v566, 72
      %v600 = vpop.permute.xlu0 %599
      %601 = vrot.lane.b32.xlu0 %v567, 72
      %v602 = vpop.permute.xlu0 %601
      %605 = vrot.lane.b32.xlu0 %v566, 8
      %v606 = vpop.permute.xlu0 %605
      %607 = vrot.lane.b32.xlu0 %v567, 8
      %v608 = vpop.permute.xlu0 %607
      %vm611 = vcmask 64512
      %v612 = vsel %vm611, %v600, %v606
      %v613 = vsel %vm611, %v602, %v608
      %v614 = vlaneseq
      %v615 = vshrl.u32 %v614, 7
      %v616 = vsub.s32 0, %v615
      %v617 = vrot.slane %v568, %v616
      %v618 = vmul.f32 %v612, %v617
      %v619 = vmul.f32 %v613, %v617
      %s620 = scalar_lea.vmem %s7, 8
      %v621 = vld [vmem:[%s620] sm:$0xf]
      %v622 = vld [vmem:[%s620 + $0x4] sm:$0xf]
      %v623 = vpack.c.bf16 %v619, %v618
      %v626 = vunpack.c.l.b16 %v621
      %v627 = vunpack.c.l.b16 %v622
      %v628 = vpack.c.b16 %v627, %v626
      %v630 = vsel %vm490, %v628, 0
      %632 = vmatprep.subr.bf16.mxu0 0
      %633 = vmatpush1.bf16.msra.mxu0 %v623
      %634 = vmatprep.subr.bf16.mxu0 0
      %635 = vmatpush1.bf16.msra.mxu0 0
      %636 = vmatprep.subr.bf16.mxu0 0
      %637 = vmatpush1.bf16.msra.mxu0 0
      %638 = vmatprep.subr.bf16.mxu0 0
      %639 = vmatpush1.bf16.msra.mxu0 0
      %640 = vmatprep.subr.bf16.mxu0 0
      %641 = vmatpush1.bf16.msra.mxu0 0
      %642 = vmatprep.subr.bf16.mxu0 0
      %643 = vmatpush1.bf16.msra.mxu0 0
      %644 = vmatprep.subr.bf16.mxu0 0
      %645 = vmatpush1.bf16.msra.mxu0 0
      %646 = vmatprep.subr.bf16.mxu0 0
      %647 = vmatpush1.bf16.msra.mxu0 0
      %648 = vmatprep.subr.bf16.mxu0 0
      %649 = vmatpush1.bf16.msra.mxu0 0
      %650 = vmatprep.subr.bf16.mxu0 0
      %651 = vmatpush1.bf16.msra.mxu0 0
      %652 = vmatprep.subr.bf16.mxu0 0
      %653 = vmatpush1.bf16.msra.mxu0 0
      %654 = vmatprep.subr.bf16.mxu0 0
      %655 = vmatpush1.bf16.msra.mxu0 0
      %656 = vmatprep.subr.bf16.mxu0 0
      %657 = vmatpush1.bf16.msra.mxu0 0
      %658 = vmatprep.subr.bf16.mxu0 0
      %659 = vmatpush1.bf16.msra.mxu0 0
      %660 = vmatprep.subr.bf16.mxu0 0
      %661 = vmatpush1.bf16.msra.mxu0 0
      %662 = vmatprep.subr.bf16.mxu0 0
      %663 = vmatpush1.bf16.msra.mxu0 0
      %664 = vmatprep.mubr.bf16.mxu0 0
      %665 = vmatmul.mubr.bf16.gmra.mrb[0].mxu0 %v630
      %v666 = vpop.f32.mrb[0].mxu0
      %v667 = vadd.f32 0.0, %v666
      %v668 = vpop.f32.mrb[0].mxu0
      %v669 = vpop.f32.mrb[0].mxu0
      %v670 = vadd.f32 0.0, %v669
      %v671 = vpop.f32.mrb[0].mxu0
      %672 = vdwg.mxu0
      %v675 = vunpack.c.l.b16 %v596
      %v676 = vunpack.c.l.b16 %v597
      %v677 = vpack.c.b16 %v676, %v675
      %v679 = vsel %vm490, %v677, 0
      %681 = vmatprep.subr.bf16.mxu0 0
      %682 = vmatpush1.bf16.msra.mxu0 %v598
      %683 = vmatprep.subr.bf16.mxu0 0
      %684 = vmatpush1.bf16.msra.mxu0 0
      %685 = vmatprep.subr.bf16.mxu0 0
      %686 = vmatpush1.bf16.msra.mxu0 0
      %687 = vmatprep.subr.bf16.mxu0 0
      %688 = vmatpush1.bf16.msra.mxu0 0
      %689 = vmatprep.subr.bf16.mxu0 0
      %690 = vmatpush1.bf16.msra.mxu0 0
      %691 = vmatprep.subr.bf16.mxu0 0
      %692 = vmatpush1.bf16.msra.mxu0 0
      %693 = vmatprep.subr.bf16.mxu0 0
      %694 = vmatpush1.bf16.msra.mxu0 0
      %695 = vmatprep.subr.bf16.mxu0 0
      %696 = vmatpush1.bf16.msra.mxu0 0
      %697 = vmatprep.subr.bf16.mxu0 0
      %698 = vmatpush1.bf16.msra.mxu0 0
      %699 = vmatprep.subr.bf16.mxu0 0
      %700 = vmatpush1.bf16.msra.mxu0 0
      %701 = vmatprep.subr.bf16.mxu0 0
      %702 = vmatpush1.bf16.msra.mxu0 0
      %703 = vmatprep.subr.bf16.mxu0 0
      %704 = vmatpush1.bf16.msra.mxu0 0
      %705 = vmatprep.subr.bf16.mxu0 0
      %706 = vmatpush1.bf16.msra.mxu0 0
      %707 = vmatprep.subr.bf16.mxu0 0
      %708 = vmatpush1.bf16.msra.mxu0 0
      %709 = vmatprep.subr.bf16.mxu0 0
      %710 = vmatpush1.bf16.msra.mxu0 0
      %711 = vmatprep.subr.bf16.mxu0 0
      %712 = vmatpush1.bf16.msra.mxu0 0
      %713 = vmatprep.mubr.bf16.mxu0 0
      %714 = vmatmul.mubr.bf16.gmra.mrb[0].mxu0 %v679
      %v715 = vpop.f32.mrb[0].mxu0
      %v716 = vadd.f32 %v667, %v715
      %v717 = vpop.f32.mrb[0].mxu0
      %v718 = vpop.f32.mrb[0].mxu0
      %v719 = vadd.f32 %v670, %v718
      %v720 = vpop.f32.mrb[0].mxu0
      %721 = vdwg.mxu0
      %722 = vrot.lane.b32.xlu0 %v566, 71
      %v723 = vpop.permute.xlu0 %722
      %724 = vrot.lane.b32.xlu0 %v567, 71
      %v725 = vpop.permute.xlu0 %724
      %728 = vrot.lane.b32.xlu0 %v566, 7
      %v729 = vpop.permute.xlu0 %728
      %730 = vrot.lane.b32.xlu0 %v567, 7
      %v731 = vpop.permute.xlu0 %730
      %vm734 = vcmask 56320
      %v735 = vsel %vm734, %v723, %v729
      %v736 = vsel %vm734, %v725, %v731
      %v737 = vrot.slane %v568, 3
      %v739 = vmul.f32 %v568, %v737
      %v740 = vlaneseq
      %v741 = vshrl.u32 %v740, 7
      %v742 = vsub.s32 0, %v741
      %v743 = vrot.slane %v739, %v742
      %v744 = vmul.f32 %v735, %v743
      %v745 = vmul.f32 %v736, %v743
      %s746 = scalar_lea.vmem %s7, 16
      %v747 = vld [vmem:[%s746] sm:$0xf]
      %v748 = vld [vmem:[%s746 + $0x4] sm:$0xf]
      %v749 = vpack.c.bf16 %v745, %v744
      %v752 = vunpack.c.l.b16 %v747
      %v753 = vunpack.c.l.b16 %v748
      %v754 = vpack.c.b16 %v753, %v752
      %v756 = vsel %vm490, %v754, 0
      %758 = vmatprep.subr.bf16.mxu0 0
      %759 = vmatpush1.bf16.msra.mxu0 %v749
      %760 = vmatprep.subr.bf16.mxu0 0
      %761 = vmatpush1.bf16.msra.mxu0 0
      %762 = vmatprep.subr.bf16.mxu0 0
      %763 = vmatpush1.bf16.msra.mxu0 0
      %764 = vmatprep.subr.bf16.mxu0 0
      %765 = vmatpush1.bf16.msra.mxu0 0
      %766 = vmatprep.subr.bf16.mxu0 0
      %767 = vmatpush1.bf16.msra.mxu0 0
      %768 = vmatprep.subr.bf16.mxu0 0
      %769 = vmatpush1.bf16.msra.mxu0 0
      %770 = vmatprep.subr.bf16.mxu0 0
      %771 = vmatpush1.bf16.msra.mxu0 0
      %772 = vmatprep.subr.bf16.mxu0 0
      %773 = vmatpush1.bf16.msra.mxu0 0
      %774 = vmatprep.subr.bf16.mxu0 0
      %775 = vmatpush1.bf16.msra.mxu0 0
      %776 = vmatprep.subr.bf16.mxu0 0
      %777 = vmatpush1.bf16.msra.mxu0 0
      %778 = vmatprep.subr.bf16.mxu0 0
      %779 = vmatpush1.bf16.msra.mxu0 0
      %780 = vmatprep.subr.bf16.mxu0 0
      %781 = vmatpush1.bf16.msra.mxu0 0
      %782 = vmatprep.subr.bf16.mxu0 0
      %783 = vmatpush1.bf16.msra.mxu0 0
      %784 = vmatprep.subr.bf16.mxu0 0
      %785 = vmatpush1.bf16.msra.mxu0 0
      %786 = vmatprep.subr.bf16.mxu0 0
      %787 = vmatpush1.bf16.msra.mxu0 0
      %788 = vmatprep.subr.bf16.mxu0 0
      %789 = vmatpush1.bf16.msra.mxu0 0
      %790 = vmatprep.mubr.bf16.mxu0 0
      %791 = vmatmul.mubr.bf16.gmra.mrb[0].mxu0 %v756
      %v792 = vpop.f32.mrb[0].mxu0
      %v793 = vadd.f32 0.0, %v792
      %v794 = vpop.f32.mrb[0].mxu0
      %v795 = vpop.f32.mrb[0].mxu0
      %v796 = vadd.f32 0.0, %v795
      %v797 = vpop.f32.mrb[0].mxu0
      %798 = vdwg.mxu0
      %v799 = vadd.f32 %v716, %v793
      %v800 = vadd.f32 %v719, %v796
      %801 = vrot.lane.b32.xlu0 %v566, 65
      %v802 = vpop.permute.xlu0 %801
      %803 = vrot.lane.b32.xlu0 %v567, 65
      %v804 = vpop.permute.xlu0 %803
      %807 = vrot.lane.b32.xlu0 %v566, 1
      %v808 = vpop.permute.xlu0 %807
      %809 = vrot.lane.b32.xlu0 %v567, 1
      %v810 = vpop.permute.xlu0 %809
      %vm813 = vcmask 7168
      %v814 = vsel %vm813, %v802, %v808
      %v815 = vsel %vm813, %v804, %v810
      %v816 = vlaneseq
      %v817 = vshrl.u32 %v816, 7
      %v818 = vsub.s32 2, %v817
      %v819 = vrot.slane %v568, %v818
      %v820 = vmul.f32 %v814, %v819
      %v821 = vmul.f32 %v815, %v819
      %s822 = scalar_lea.vmem %s7, 24
      %v823 = vld [vmem:[%s822] sm:$0xf]
      %v824 = vld [vmem:[%s822 + $0x4] sm:$0xf]
      %v825 = vpack.c.bf16 %v821, %v820
      %v828 = vunpack.c.l.b16 %v823
      %v829 = vunpack.c.l.b16 %v824
      %v830 = vpack.c.b16 %v829, %v828
      %v832 = vsel %vm490, %v830, 0
      %834 = vmatprep.subr.bf16.mxu0 0
      %835 = vmatpush1.bf16.msra.mxu0 %v825
      %836 = vmatprep.subr.bf16.mxu0 0
      %837 = vmatpush1.bf16.msra.mxu0 0
      %838 = vmatprep.subr.bf16.mxu0 0
      %839 = vmatpush1.bf16.msra.mxu0 0
      %840 = vmatprep.subr.bf16.mxu0 0
      %841 = vmatpush1.bf16.msra.mxu0 0
      %842 = vmatprep.subr.bf16.mxu0 0
      %843 = vmatpush1.bf16.msra.mxu0 0
      %844 = vmatprep.subr.bf16.mxu0 0
      %845 = vmatpush1.bf16.msra.mxu0 0
      %846 = vmatprep.subr.bf16.mxu0 0
      %847 = vmatpush1.bf16.msra.mxu0 0
      %848 = vmatprep.subr.bf16.mxu0 0
      %849 = vmatpush1.bf16.msra.mxu0 0
      %850 = vmatprep.subr.bf16.mxu0 0
      %851 = vmatpush1.bf16.msra.mxu0 0
      %852 = vmatprep.subr.bf16.mxu0 0
      %853 = vmatpush1.bf16.msra.mxu0 0
      %854 = vmatprep.subr.bf16.mxu0 0
      %855 = vmatpush1.bf16.msra.mxu0 0
      %856 = vmatprep.subr.bf16.mxu0 0
      %857 = vmatpush1.bf16.msra.mxu0 0
      %858 = vmatprep.subr.bf16.mxu0 0
      %859 = vmatpush1.bf16.msra.mxu0 0
      %860 = vmatprep.subr.bf16.mxu0 0
      %861 = vmatpush1.bf16.msra.mxu0 0
      %862 = vmatprep.subr.bf16.mxu0 0
      %863 = vmatpush1.bf16.msra.mxu0 0
      %864 = vmatprep.subr.bf16.mxu0 0
      %865 = vmatpush1.bf16.msra.mxu0 0
      %866 = vmatprep.mubr.bf16.mxu0 0
      %867 = vmatmul.mubr.bf16.gmra.mrb[0].mxu0 %v832
      %v868 = vpop.f32.mrb[0].mxu0
      %v869 = vadd.f32 0.0, %v868
      %v870 = vpop.f32.mrb[0].mxu0
      %v871 = vpop.f32.mrb[0].mxu0
      %v872 = vadd.f32 0.0, %v871
      %v873 = vpop.f32.mrb[0].mxu0
      %874 = vdwg.mxu0
      %v875 = vadd.f32 %v799, %v869
      %v876 = vadd.f32 %v800, %v872
      %s877 = scalar_lea.vmem %s7, 32
      %v878 = vld [vmem:[%s877] sm:$0xf]
      %v879 = vld [vmem:[%s877 + $0x4] sm:$0xf]
      %v880 = vpack.c.bf16 %v567, %v566
      %v883 = vunpack.c.l.b16 %v878
      %v884 = vunpack.c.l.b16 %v879
      %v885 = vpack.c.b16 %v884, %v883
      %v887 = vsel %vm490, %v885, 0
      %889 = vmatprep.subr.bf16.mxu0 0
      %890 = vmatpush1.bf16.msra.mxu0 %v880
      %891 = vmatprep.subr.bf16.mxu0 0
      %892 = vmatpush1.bf16.msra.mxu0 0
      %893 = vmatprep.subr.bf16.mxu0 0
      %894 = vmatpush1.bf16.msra.mxu0 0
      %895 = vmatprep.subr.bf16.mxu0 0
      %896 = vmatpush1.bf16.msra.mxu0 0
      %897 = vmatprep.subr.bf16.mxu0 0
      %898 = vmatpush1.bf16.msra.mxu0 0
      %899 = vmatprep.subr.bf16.mxu0 0
      %900 = vmatpush1.bf16.msra.mxu0 0
      %901 = vmatprep.subr.bf16.mxu0 0
      %902 = vmatpush1.bf16.msra.mxu0 0
      %903 = vmatprep.subr.bf16.mxu0 0
      %904 = vmatpush1.bf16.msra.mxu0 0
      %905 = vmatprep.subr.bf16.mxu0 0
      %906 = vmatpush1.bf16.msra.mxu0 0
      %907 = vmatprep.subr.bf16.mxu0 0
      %908 = vmatpush1.bf16.msra.mxu0 0
      %909 = vmatprep.subr.bf16.mxu0 0
      %910 = vmatpush1.bf16.msra.mxu0 0
      %911 = vmatprep.subr.bf16.mxu0 0
      %912 = vmatpush1.bf16.msra.mxu0 0
      %913 = vmatprep.subr.bf16.mxu0 0
      %914 = vmatpush1.bf16.msra.mxu0 0
      %915 = vmatprep.subr.bf16.mxu0 0
      %916 = vmatpush1.bf16.msra.mxu0 0
      %917 = vmatprep.subr.bf16.mxu0 0
      %918 = vmatpush1.bf16.msra.mxu0 0
      %919 = vmatprep.subr.bf16.mxu0 0
      %920 = vmatpush1.bf16.msra.mxu0 0
      %921 = vmatprep.mubr.bf16.mxu0 0
      %922 = vmatmul.mubr.bf16.gmra.mrb[0].mxu0 %v887
      %v923 = vpop.f32.mrb[0].mxu0
      %v924 = vadd.f32 0.0, %v923
      %v925 = vpop.f32.mrb[0].mxu0
      %v926 = vpop.f32.mrb[0].mxu0
      %v927 = vadd.f32 0.0, %v926
      %v928 = vpop.f32.mrb[0].mxu0
      %929 = vdwg.mxu0
      %v930 = vadd.f32 %v875, %v924
      %v931 = vadd.f32 %v876, %v927
      %932 = vrot.lane.b32.xlu0 %v566, 127
      %v933 = vpop.permute.xlu0 %932
      %934 = vrot.lane.b32.xlu0 %v567, 127
      %v935 = vpop.permute.xlu0 %934
      %938 = vrot.lane.b32.xlu0 %v566, 63
      %v939 = vpop.permute.xlu0 %938
      %940 = vrot.lane.b32.xlu0 %v567, 63
      %v941 = vpop.permute.xlu0 %940
      %vm944 = vcmask 515072
      %v945 = vsel %vm944, %v933, %v939
      %v946 = vsel %vm944, %v935, %v941
      %v947 = vlaneseq
      %v948 = vshrl.u32 %v947, 7
      %v949 = vsub.s32 3, %v948
      %v950 = vrot.slane %v568, %v949
      %v951 = vmul.f32 %v945, %v950
      %v952 = vmul.f32 %v946, %v950
      %s953 = scalar_lea.vmem %s7, 40
      %v954 = vld [vmem:[%s953] sm:$0xf]
      %v955 = vld [vmem:[%s953 + $0x4] sm:$0xf]
      %v956 = vpack.c.bf16 %v952, %v951
      %v959 = vunpack.c.l.b16 %v954
      %v960 = vunpack.c.l.b16 %v955
      %v961 = vpack.c.b16 %v960, %v959
      %v963 = vsel %vm490, %v961, 0
      %965 = vmatprep.subr.bf16.mxu0 0
      %966 = vmatpush1.bf16.msra.mxu0 %v956
      %967 = vmatprep.subr.bf16.mxu0 0
      %968 = vmatpush1.bf16.msra.mxu0 0
      %969 = vmatprep.subr.bf16.mxu0 0
      %970 = vmatpush1.bf16.msra.mxu0 0
      %971 = vmatprep.subr.bf16.mxu0 0
      %972 = vmatpush1.bf16.msra.mxu0 0
      %973 = vmatprep.subr.bf16.mxu0 0
      %974 = vmatpush1.bf16.msra.mxu0 0
      %975 = vmatprep.subr.bf16.mxu0 0
      %976 = vmatpush1.bf16.msra.mxu0 0
      %977 = vmatprep.subr.bf16.mxu0 0
      %978 = vmatpush1.bf16.msra.mxu0 0
      %979 = vmatprep.subr.bf16.mxu0 0
      %980 = vmatpush1.bf16.msra.mxu0 0
      %981 = vmatprep.subr.bf16.mxu0 0
      %982 = vmatpush1.bf16.msra.mxu0 0
      %983 = vmatprep.subr.bf16.mxu0 0
      %984 = vmatpush1.bf16.msra.mxu0 0
      %985 = vmatprep.subr.bf16.mxu0 0
      %986 = vmatpush1.bf16.msra.mxu0 0
      %987 = vmatprep.subr.bf16.mxu0 0
      %988 = vmatpush1.bf16.msra.mxu0 0
      %989 = vmatprep.subr.bf16.mxu0 0
      %990 = vmatpush1.bf16.msra.mxu0 0
      %991 = vmatprep.subr.bf16.mxu0 0
      %992 = vmatpush1.bf16.msra.mxu0 0
      %993 = vmatprep.subr.bf16.mxu0 0
      %994 = vmatpush1.bf16.msra.mxu0 0
      %995 = vmatprep.subr.bf16.mxu0 0
      %996 = vmatpush1.bf16.msra.mxu0 0
      %997 = vmatprep.mubr.bf16.mxu0 0
      %998 = vmatmul.mubr.bf16.gmra.mrb[0].mxu0 %v963
      %v999 = vpop.f32.mrb[0].mxu0
      %v1000 = vadd.f32 0.0, %v999
      %v1001 = vpop.f32.mrb[0].mxu0
      %v1002 = vpop.f32.mrb[0].mxu0
      %v1003 = vadd.f32 0.0, %v1002
      %v1004 = vpop.f32.mrb[0].mxu0
      %1005 = vdwg.mxu0
      %v1006 = vadd.f32 %v930, %v1000
      %v1007 = vadd.f32 %v931, %v1003
      %1008 = vrot.lane.b32.xlu0 %v566, 121
      %v1009 = vpop.permute.xlu0 %1008
      %1010 = vrot.lane.b32.xlu0 %v567, 121
      %v1011 = vpop.permute.xlu0 %1010
      %1014 = vrot.lane.b32.xlu0 %v566, 57
      %v1015 = vpop.permute.xlu0 %1014
      %1016 = vrot.lane.b32.xlu0 %v567, 57
      %v1017 = vpop.permute.xlu0 %1016
      %vm1020 = vcmask 465920
      %v1021 = vsel %vm1020, %v1009, %v1015
      %v1022 = vsel %vm1020, %v1011, %v1017
      %v1023 = vrot.slane %v568, 1
      %v1025 = vmul.f32 %v568, %v1023
      %v1026 = vlaneseq
      %v1027 = vshrl.u32 %v1026, 7
      %v1028 = vsub.s32 1, %v1027
      %v1029 = vrot.slane %v1025, %v1028
      %v1030 = vmul.f32 %v1021, %v1029
      %v1031 = vmul.f32 %v1022, %v1029
      %s1032 = scalar_lea.vmem %s7, 48
      %v1033 = vld [vmem:[%s1032] sm:$0xf]
      %v1034 = vld [vmem:[%s1032 + $0x4] sm:$0xf]
      %v1035 = vpack.c.bf16 %v1031, %v1030
      %v1038 = vunpack.c.l.b16 %v1033
      %v1039 = vunpack.c.l.b16 %v1034
      %v1040 = vpack.c.b16 %v1039, %v1038
      %v1042 = vsel %vm490, %v1040, 0
      %1044 = vmatprep.subr.bf16.mxu0 0
      %1045 = vmatpush1.bf16.msra.mxu0 %v1035
      %1046 = vmatprep.subr.bf16.mxu0 0
      %1047 = vmatpush1.bf16.msra.mxu0 0
      %1048 = vmatprep.subr.bf16.mxu0 0
      %1049 = vmatpush1.bf16.msra.mxu0 0
      %1050 = vmatprep.subr.bf16.mxu0 0
      %1051 = vmatpush1.bf16.msra.mxu0 0
      %1052 = vmatprep.subr.bf16.mxu0 0
      %1053 = vmatpush1.bf16.msra.mxu0 0
      %1054 = vmatprep.subr.bf16.mxu0 0
      %1055 = vmatpush1.bf16.msra.mxu0 0
      %1056 = vmatprep.subr.bf16.mxu0 0
      %1057 = vmatpush1.bf16.msra.mxu0 0
      %1058 = vmatprep.subr.bf16.mxu0 0
      %1059 = vmatpush1.bf16.msra.mxu0 0
      %1060 = vmatprep.subr.bf16.mxu0 0
      %1061 = vmatpush1.bf16.msra.mxu0 0
      %1062 = vmatprep.subr.bf16.mxu0 0
      %1063 = vmatpush1.bf16.msra.mxu0 0
      %1064 = vmatprep.subr.bf16.mxu0 0
      %1065 = vmatpush1.bf16.msra.mxu0 0
      %1066 = vmatprep.subr.bf16.mxu0 0
      %1067 = vmatpush1.bf16.msra.mxu0 0
      %1068 = vmatprep.subr.bf16.mxu0 0
      %1069 = vmatpush1.bf16.msra.mxu0 0
      %1070 = vmatprep.subr.bf16.mxu0 0
      %1071 = vmatpush1.bf16.msra.mxu0 0
      %1072 = vmatprep.subr.bf16.mxu0 0
      %1073 = vmatpush1.bf16.msra.mxu0 0
      %1074 = vmatprep.subr.bf16.mxu0 0
      %1075 = vmatpush1.bf16.msra.mxu0 0
      %1076 = vmatprep.mubr.bf16.mxu0 0
      %1077 = vmatmul.mubr.bf16.gmra.mrb[0].mxu0 %v1042
      %v1078 = vpop.f32.mrb[0].mxu0
      %v1079 = vadd.f32 0.0, %v1078
      %v1080 = vpop.f32.mrb[0].mxu0
      %v1081 = vpop.f32.mrb[0].mxu0
      %v1082 = vadd.f32 0.0, %v1081
      %v1083 = vpop.f32.mrb[0].mxu0
      %1084 = vdwg.mxu0
      %v1085 = vadd.f32 %v1006, %v1079
      %v1086 = vadd.f32 %v1007, %v1082
      %1087 = vrot.lane.b32.xlu0 %v566, 120
      %v1088 = vpop.permute.xlu0 %1087
      %1089 = vrot.lane.b32.xlu0 %v567, 120
      %v1090 = vpop.permute.xlu0 %1089
      %1093 = vrot.lane.b32.xlu0 %v566, 56
      %v1094 = vpop.permute.xlu0 %1093
      %1095 = vrot.lane.b32.xlu0 %v567, 56
      %v1096 = vpop.permute.xlu0 %1095
      %vm1099 = vcmask 457728
      %v1100 = vsel %vm1099, %v1088, %v1094
      %v1101 = vsel %vm1099, %v1090, %v1096
      %v1102 = vlaneseq
      %v1103 = vshrl.u32 %v1102, 7
      %v1104 = vsub.s32 1, %v1103
      %v1105 = vrot.slane %v568, %v1104
      %v1106 = vmul.f32 %v1100, %v1105
      %v1107 = vmul.f32 %v1101, %v1105
      %s1108 = scalar_lea.vmem %s7, 56
      %v1109 = vld [vmem:[%s1108] sm:$0xf]
      %v1110 = vld [vmem:[%s1108 + $0x4] sm:$0xf]
      %v1111 = vpack.c.bf16 %v1107, %v1106
      %v1114 = vunpack.c.l.b16 %v1109
      %v1115 = vunpack.c.l.b16 %v1110
      %v1116 = vpack.c.b16 %v1115, %v1114
      %v1118 = vsel %vm490, %v1116, 0
      %1120 = vmatprep.subr.bf16.mxu0 0
      %1121 = vmatpush1.bf16.msra.mxu0 %v1111
      %1122 = vmatprep.subr.bf16.mxu0 0
      %1123 = vmatpush1.bf16.msra.mxu0 0
      %1124 = vmatprep.subr.bf16.mxu0 0
      %1125 = vmatpush1.bf16.msra.mxu0 0
      %1126 = vmatprep.subr.bf16.mxu0 0
      %1127 = vmatpush1.bf16.msra.mxu0 0
      %1128 = vmatprep.subr.bf16.mxu0 0
      %1129 = vmatpush1.bf16.msra.mxu0 0
      %1130 = vmatprep.subr.bf16.mxu0 0
      %1131 = vmatpush1.bf16.msra.mxu0 0
      %1132 = vmatprep.subr.bf16.mxu0 0
      %1133 = vmatpush1.bf16.msra.mxu0 0
      %1134 = vmatprep.subr.bf16.mxu0 0
      %1135 = vmatpush1.bf16.msra.mxu0 0
      %1136 = vmatprep.subr.bf16.mxu0 0
      %1137 = vmatpush1.bf16.msra.mxu0 0
      %1138 = vmatprep.subr.bf16.mxu0 0
      %1139 = vmatpush1.bf16.msra.mxu0 0
      %1140 = vmatprep.subr.bf16.mxu0 0
      %1141 = vmatpush1.bf16.msra.mxu0 0
      %1142 = vmatprep.subr.bf16.mxu0 0
      %1143 = vmatpush1.bf16.msra.mxu0 0
      %1144 = vmatprep.subr.bf16.mxu0 0
      %1145 = vmatpush1.bf16.msra.mxu0 0
      %1146 = vmatprep.subr.bf16.mxu0 0
      %1147 = vmatpush1.bf16.msra.mxu0 0
      %1148 = vmatprep.subr.bf16.mxu0 0
      %1149 = vmatpush1.bf16.msra.mxu0 0
      %1150 = vmatprep.subr.bf16.mxu0 0
      %1151 = vmatpush1.bf16.msra.mxu0 0
      %1152 = vmatprep.mubr.bf16.mxu0 0
      %1153 = vmatmul.mubr.bf16.gmra.mrb[0].mxu0 %v1118
      %v1154 = vpop.f32.mrb[0].mxu0
      %v1155 = vadd.f32 0.0, %v1154
      %v1156 = vpop.f32.mrb[0].mxu0
      %v1157 = vpop.f32.mrb[0].mxu0
      %v1158 = vadd.f32 0.0, %v1157
      %v1159 = vpop.f32.mrb[0].mxu0
      %1160 = vdwg.mxu0
      %v1161 = vadd.f32 %v1085, %v1155
      %v1162 = vadd.f32 %v1086, %v1158
      %1163 = vrot.lane.b32.xlu0 %v566, 119
      %v1164 = vpop.permute.xlu0 %1163
      %1165 = vrot.lane.b32.xlu0 %v567, 119
      %v1166 = vpop.permute.xlu0 %1165
      %1169 = vrot.lane.b32.xlu0 %v566, 55
      %v1170 = vpop.permute.xlu0 %1169
      %1171 = vrot.lane.b32.xlu0 %v567, 55
      %v1172 = vpop.permute.xlu0 %1171
      %vm1175 = vcmask 449536
      %v1176 = vsel %vm1175, %v1164, %v1170
      %v1177 = vsel %vm1175, %v1166, %v1172
      %v1178 = vlaneseq
      %v1179 = vshrl.u32 %v1178, 7
      %v1180 = vsub.s32 1, %v1179
      %v1181 = vrot.slane %v589, %v1180
      %v1182 = vmul.f32 %v1176, %v1181
      %v1183 = vmul.f32 %v1177, %v1181
      %s1184 = scalar_lea.vmem %s7, 64
      %v1185 = vld [vmem:[%s1184] sm:$0xf]
      %v1186 = vld [vmem:[%s1184 + $0x4] sm:$0xf]
      %v1187 = vpack.c.bf16 %v1183, %v1182
      %v1190 = vunpack.c.l.b16 %v1185
      %v1191 = vunpack.c.l.b16 %v1186
      %v1192 = vpack.c.b16 %v1191, %v1190
      %v1194 = vsel %vm490, %v1192, 0
      %1196 = vmatprep.subr.bf16.mxu0 0
      %1197 = vmatpush1.bf16.msra.mxu0 %v1187
      %1198 = vmatprep.subr.bf16.mxu0 0
      %1199 = vmatpush1.bf16.msra.mxu0 0
      %1200 = vmatprep.subr.bf16.mxu0 0
      %1201 = vmatpush1.bf16.msra.mxu0 0
      %1202 = vmatprep.subr.bf16.mxu0 0
      %1203 = vmatpush1.bf16.msra.mxu0 0
      %1204 = vmatprep.subr.bf16.mxu0 0
      %1205 = vmatpush1.bf16.msra.mxu0 0
      %1206 = vmatprep.subr.bf16.mxu0 0
      %1207 = vmatpush1.bf16.msra.mxu0 0
      %1208 = vmatprep.subr.bf16.mxu0 0
      %1209 = vmatpush1.bf16.msra.mxu0 0
      %1210 = vmatprep.subr.bf16.mxu0 0
      %1211 = vmatpush1.bf16.msra.mxu0 0
      %1212 = vmatprep.subr.bf16.mxu0 0
      %1213 = vmatpush1.bf16.msra.mxu0 0
      %1214 = vmatprep.subr.bf16.mxu0 0
      %1215 = vmatpush1.bf16.msra.mxu0 0
      %1216 = vmatprep.subr.bf16.mxu0 0
      %1217 = vmatpush1.bf16.msra.mxu0 0
      %1218 = vmatprep.subr.bf16.mxu0 0
      %1219 = vmatpush1.bf16.msra.mxu0 0
      %1220 = vmatprep.subr.bf16.mxu0 0
      %1221 = vmatpush1.bf16.msra.mxu0 0
      %1222 = vmatprep.subr.bf16.mxu0 0
      %1223 = vmatpush1.bf16.msra.mxu0 0
      %1224 = vmatprep.subr.bf16.mxu0 0
      %1225 = vmatpush1.bf16.msra.mxu0 0
      %1226 = vmatprep.subr.bf16.mxu0 0
      %1227 = vmatpush1.bf16.msra.mxu0 0
      %1228 = vmatprep.mubr.bf16.mxu0 0
      %1229 = vmatmul.mubr.bf16.gmra.mrb[0].mxu0 %v1194
      %v1230 = vpop.f32.mrb[0].mxu0
      %v1231 = vadd.f32 0.0, %v1230
      %v1232 = vpop.f32.mrb[0].mxu0
      %v1233 = vpop.f32.mrb[0].mxu0
      %v1234 = vadd.f32 0.0, %v1233
      %v1235 = vpop.f32.mrb[0].mxu0
      %1236 = vdwg.mxu0
      %v1237 = vadd.f32 %v1161, %v1231
      %v1238 = vadd.f32 %v1162, %v1234
      %v1239 = vld [vmem:[%s8] sm:$0xff]
      %v1240 = vld [vmem:[%s8 + $0x8] sm:$0xff]
      %1242 = vset.pattern.permute.xlu0 0
      %1243 = vperm.xlu0 %1242, %v1239
      %v1244 = vpop.permute.xlu0 %1243
      %1247 = vset.pattern.permute.xlu0 0
      %1248 = vperm.xlu0 %1247, %v1240
      %v1249 = vpop.permute.xlu0 %1248
      %v1251 = vadd.f32 %v1237, %v1244
      %v1252 = vadd.f32 %v1238, %v1249
      %v1253 = vmul.f32 %v1251, 0.5
      %v1254 = vmul.f32 %v1252, 0.5
      %v1255 = vmul.f32 %v1251, 0.70710677
      %v1256 = vmul.f32 %v1252, 0.70710677
      %v1257 = verf.f32.pop %v1255
      %v1258 = verf.f32.pop %v1256
      %v1259 = vadd.f32 %v1257, 1.0
      %v1260 = vadd.f32 %v1258, 1.0
      %v1261 = vmul.f32 %v1253, %v1259
      %v1262 = vmul.f32 %v1254, %v1260
      %v1263 = vld [vmem:[%s9] sm:$0x3]
      %v1264 = vpack.c.bf16 %v1262, %v1261
      %v1265 = vld [vmem:[%s10] sm:$0xf]
      %1267 = vset.pattern.permute.xlu0 0
      %1268 = vperm.xlu0 %1267, %v1265
      %v1269 = vpop.permute.xlu0 %1268
      %v1272 = vsel %vm490, %v1263, 0
      %1274 = vmatprep.subr.bf16.mxu0 0
      %1275 = vmatpush1.bf16.msra.mxu0 %v1264
      %1276 = vmatprep.subr.bf16.mxu0 0
      %1277 = vmatpush1.bf16.msra.mxu0 0
      %1278 = vmatprep.subr.bf16.mxu0 0
      %1279 = vmatpush1.bf16.msra.mxu0 0
      %1280 = vmatprep.subr.bf16.mxu0 0
      %1281 = vmatpush1.bf16.msra.mxu0 0
      %1282 = vmatprep.subr.bf16.mxu0 0
      %1283 = vmatpush1.bf16.msra.mxu0 0
      %1284 = vmatprep.subr.bf16.mxu0 0
      %1285 = vmatpush1.bf16.msra.mxu0 0
      %1286 = vmatprep.subr.bf16.mxu0 0
      %1287 = vmatpush1.bf16.msra.mxu0 0
      %1288 = vmatprep.subr.bf16.mxu0 0
      %1289 = vmatpush1.bf16.msra.mxu0 0
      %1290 = vmatprep.subr.bf16.mxu0 0
      %1291 = vmatpush1.bf16.msra.mxu0 0
      %1292 = vmatprep.subr.bf16.mxu0 0
      %1293 = vmatpush1.bf16.msra.mxu0 0
      %1294 = vmatprep.subr.bf16.mxu0 0
      %1295 = vmatpush1.bf16.msra.mxu0 0
      %1296 = vmatprep.subr.bf16.mxu0 0
      %1297 = vmatpush1.bf16.msra.mxu0 0
      %1298 = vmatprep.subr.bf16.mxu0 0
      %1299 = vmatpush1.bf16.msra.mxu0 0
      %1300 = vmatprep.subr.bf16.mxu0 0
      %1301 = vmatpush1.bf16.msra.mxu0 0
      %1302 = vmatprep.subr.bf16.mxu0 0
      %1303 = vmatpush1.bf16.msra.mxu0 0
      %1304 = vmatprep.subr.bf16.mxu0 0
      %1305 = vmatpush1.bf16.msra.mxu0 0
      %1306 = vmatprep.mubr.bf16.mxu0 0
      %1307 = vmatmul.mubr.bf16.gmra.mrb[0].mxu0 %v1272
      %v1308 = vpop.f32.mrb[0].mxu0
      %v1309 = vadd.f32 %v1269, %v1308
      %v1310 = vpop.f32.mrb[0].mxu0
      %v1311 = vpop.f32.mrb[0].mxu0
      %v1312 = vpop.f32.mrb[0].mxu0
      %1313 = vdwg.mxu0
      %v1314 = vmul.f32 %v1309, 0.5
      %v1315 = vmul.f32 %v1309, 0.70710677
      %v1316 = verf.f32.pop %v1315
      %v1317 = vadd.f32 %v1316, 1.0
      %v1318 = vmul.f32 %v1314, %v1317
      %v1319 = vadd.f32 %v417, %v1318
      %vm1320 = vcmask 519168
      %1321 = vst.msk [vmem:[%s415] sm:$0xf] %vm1320, %v1319
      %p1322 = scmp.lt.s32.totalorder %s22, 1
      %s1323 = scalar_select %p1322, %s22, 1
      %s1324 = smul.addr %s1323, 4
      %s1325 = scalar_lea.vmem %s11, %s1324
      // Predicated region
      $region65: #{res_biaffine_forward.8} parent=63 // pred_check
        %p1326 = pneg %p286
      $region66: #{res_biaffine_forward.8} parent=63 // pred_check_branch
        %1328 = sbr.rel (%p1326) target = $region68
      $region67: #{res_biaffine_forward.8} parent=63 // pred_region
        _
      $region68: #{res_biaffine_forward.8} parent=63 // pred_fallthru
        _
    $region64: #{res_biaffine_forward.8} parent=5 // pred_fallthru
      _
    %p1329 = scmp.le.s32.totalorder 2, %s17
    // Predicated region
    $region69: #{res_biaffine_forward.8} parent=5 // pred_check
      %p1330 = pneg %p1329
    $region70: #{res_biaffine_forward.8} parent=5 // pred_check_branch
      %1332 = sbr.rel (%p1330) target = $region72
    $region71: #{res_biaffine_forward.8} parent=5 // pred_region
      %s1333 = ssub.s32 %s17, 2
      // Predicated region
      $region73: #{res_biaffine_forward.8} parent=71 // pred_check
        %p1334 = pneg %p292
      $region74: #{res_biaffine_forward.8} parent=71 // pred_check_branch
        %1336 = sbr.rel (%p1334) target = $region76
      $region75: #{res_biaffine_forward.8} parent=71 // pred_region
        %p1337 = scmp.lt.s32.totalorder %s23, 1
        %s1338 = scalar_select %p1337, %s23, 1
        %s1339 = smul.addr %s1338, 4
        %s1340 = scalar_lea.vmem %s11, %s1339
      $region76: #{res_biaffine_forward.8} parent=71 // pred_fallthru
        _
    $region72: #{res_biaffine_forward.8} parent=5 // pred_fallthru
      _
  $region6: #{res_biaffine_forward.8} parent=0 // loop_footer
    %s21 = sadd.s32 1, %s17
  $region7: #{res_biaffine_forward.8} parent=0 // loop_footer_branch
    %16 = sbr.rel target = $region3
  $region8: #{res_biaffine_forward.8} parent=0 // loop_exit
    _

</llo_original>
